<compile_context>
chip_gen: v7x
topology: tpu7x:2x2x1
jax: 0.10.0
libtpu: 0.0.40
codegen_flags: <defaults>
</compile_context>

<pallas_src>
import functools

import numpy as np
import jax
import jax.numpy as jnp
from jax import lax
from jax.experimental import pallas as pl
from jax.experimental.pallas import tpu as pltpu

SMALL_PRIMES = [3, 5, 7, 11, 13, 17]


def _make_diffloss_kernel(n_attributes: int, pack: int, lanes: int):
    """Kernel over packed rows: each row holds `pack` samples x (A*V) logits."""
    A, k, L = n_attributes, pack, lanes

    hi = functools.partial(jnp.dot, precision=lax.Precision.HIGHEST,
                           preferred_element_type=jnp.float32)
    lo = functools.partial(jnp.dot, preferred_element_type=jnp.float32)
    # 0/1 gathers of exact small integers stay bit-exact in one bf16 pass as
    # long as every integer value (< L) is exactly representable in bf16.
    gather = lo if L <= 256 else hi

    inv_A = 1.0 / float(A)
    tiny = float(jnp.finfo(jnp.float32).tiny)

    def kernel(glabel_ref, logits_ref, seg_ref, segt_ref, seg2_ref, out_ref):
        # All ops below are row-local, so the garbage rows a remainder (partial)
        # batch tile reads can never contaminate valid rows; their output rows
        # are simply never written back.
        x = logits_ref[...].astype(jnp.float32)      # (TB, L) in-kernel f32 cast
                                                     # (mandatory on v5e's VPU/EUP)
        glabel = glabel_ref[...]                     # (TB, kA) f32 exact label lane idx
        seg = seg_ref[...]                           # (L, kA) 0/1: lane -> attr column
        seg_t = segt_ref[...]                        # (kA, L) transpose of seg
        seg2 = seg2_ref[...] if k > 1 else None      # (kA, k) 0/1: attr col -> sample

        def per_sample(v, precise):                  # (TB, kA) -> (TB, k)
            if k == 1:
                return jnp.sum(v, axis=-1, keepdims=True)
            return (hi if precise else lo)(v, seg2)

        lane = lax.broadcasted_iota(jnp.int32, (1, L), 1).astype(jnp.float32)

        # One-hot of the label lane (boolean, no materialized float one-hot).
        glabel_x = gather(glabel, seg_t)             # (TB, L) label lane per group
        onehot = jnp.abs(lane - glabel_x) < 0.5      # (TB, L) bool

        # ---- cross entropy: per-attribute logsumexp via MXU segmented sums ----
        m = jnp.max(x, axis=-1, keepdims=True)       # (TB, 1) shared row max
        z = hi(jnp.exp(x - m), seg)                  # (TB, kA) sum_exp per attribute
        masked_x = jnp.where(onehot, x, 0.0)         # (TB, L)  reused below
        lal = hi(masked_x, seg)                      # (TB, kA) logit-at-label (bit exact)
        sum_lal = per_sample(lal, precise=True)      # (TB, k)
        # TODO(synk): exact parity with per-attribute log_softmax when one
        # attribute's logits sit > ~88 below the row max would need a segmented
        # (per-group) max; the clamp below only prevents -inf/NaN in that case.
        logz = jnp.log(jnp.maximum(z, tiny))
        sum_logz = per_sample(logz, precise=True)    # (TB, k)
        loss = (sum_logz + float(A) * m - sum_lal) * inv_A     # (TB, k)

        # ---- accuracy with exact torch argmax (first-max) tie-breaking ----
        # lal / lal_x must stay HIGHEST so `x == lal_x` is bit-exact at the
        # label lane (this is what lets us drop the `& ~onehot` term).
        lal_x = hi(lal, seg_t)                       # (TB, L) label logit per group
        bad = (x > lal_x) | ((x == lal_x) & (lane < glabel_x - 0.5))
        nbad = lo(bad.astype(jnp.float32), seg)      # (TB, kA) exact small counts
        correct = (nbad < 0.5).astype(jnp.float32)   # (TB, kA)
        ncorr = per_sample(correct, precise=False)   # (TB, k) #correct attrs / sample
        allc = (ncorr > float(A) - 0.5).astype(jnp.float32)

        # Fused narrow output [loss | all-correct | n-correct]: one DMA per tile.
        out_ref[:, 0:k] = loss
        out_ref[:, k:2 * k] = allc
        out_ref[:, 2 * k:3 * k] = ncorr

    return kernel


def _pick_batch_tile(rows, lanes_logits, lanes_labels, lanes_out, logit_itemsize,
                     vmem_budget_bytes):
    """Largest batch tile whose honest VMEM footprint fits the budget."""
    def pad128(n):
        return ((n + 127) // 128) * 128
    per_row = (2 * pad128(lanes_logits) * logit_itemsize   # logits block, 2 buffers
               + 2 * pad128(lanes_labels) * 4               # glabel block (lane-padded)
               + 2 * pad128(lanes_out) * 4                  # fused output block
               + 10 * pad128(lanes_logits) * 4)             # full-width f32 temporaries
    tb = max(8, min((vmem_budget_bytes // per_row) // 8 * 8, 8192))
    if rows <= 8:
        return rows                      # single (full-extent) tile
    # Prefer >= 2 grid steps so the "parallel" axis can span both v7x TensorCores.
    half = (((rows + 1) // 2) + 7) // 8 * 8
    return max(8, min(tb, half))


def diff_loss(sender_input, receiver_output, n_attributes, n_values, loss_type):
    """Pallas implementation of DiffLoss.forward.

    sender_input:    (B, A) integer attribute values in [0, n_values)
    receiver_output: (B, A * V) float logits (any float dtype; cast in-kernel)
    returns (loss[B], {'acc': scalar, 'acc_or': scalar})
    """
    A, V = int(n_attributes), int(n_values)
    AV = A * V
    B = int(sender_input.shape[0])

    # ---- label transform (torch mutates sender_input in place; done functionally) ----
    labels = sender_input.astype(jnp.int32)
    if loss_type == "mixed":
        left = (labels[:, 0] + labels[:, 1]) % V
        right = (labels[:, 0] - labels[:, 1] + V) % V
        labels = labels.at[:, 0].set(left).at[:, 1].set(right)
    elif loss_type == "linear":
        ca, cb, cc, cd, ce, cf = SMALL_PRIMES
        left = (ca * labels[:, 0] + cb * labels[:, 1] + cc) % V
        right = (cd * labels[:, 0] + ce * labels[:, 1] + cf) % V
        labels = labels.at[:, 0].set(left).at[:, 1].set(right)
    elif loss_type == "autoenc":
        pass
    else:
        raise AssertionError(loss_type)

    # ---- lane packing: k samples per row so vregs/VMEM use all 128 lanes ----
    k = max(1, 128 // AV)
    Bp = ((B + k - 1) // k) * k
    rows = Bp // k
    L = k * AV                      # logit lanes per packed row
    kA = k * A                      # attribute columns per packed row
    outw = 3 * k                    # fused [loss | allc | ncorr] output lanes

    logits = receiver_output.reshape(B, AV)
    if Bp != B:                     # zero padding is benign: all ops are sample-local
        logits = jnp.pad(logits, ((0, Bp - B), (0, 0)))
        labels = jnp.pad(labels, ((0, Bp - B), (0, 0)))
    logits = logits.reshape(rows, L)                     # native dtype, lane-dense
    col = jnp.arange(kA, dtype=jnp.int32)
    glabel = (labels.reshape(rows, kA) + col * V).astype(jnp.float32)

    # ---- constant 0/1 segment matrices (built once, streamed as resident inputs) ----
    lane_np = np.arange(L)
    col_np = np.arange(kA)
    seg = jnp.asarray((lane_np[:, None] // V == col_np[None, :]).astype(np.float32))
    seg_t = jnp.asarray((col_np[:, None] == lane_np[None, :] // V).astype(np.float32))
    seg2 = jnp.asarray((col_np[:, None] // A == np.arange(k)[None, :]).astype(np.float32))

    # ---- batch tile from an explicit VMEM footprint model vs. real capacity ----
    itemsize = jnp.dtype(logits.dtype).itemsize
    try:
        vmem_cap = int(pltpu.get_tpu_info().vmem_capacity_bytes)
    except Exception:
        vmem_cap = 64 * 1024 * 1024          # conservative (v7x-sized) fallback
    tb = _pick_batch_tile(rows, L, kA, outw, itemsize, vmem_cap // 2)
    nb = pl.cdiv(rows, tb)

    cost = pl.CostEstimate(
        flops=int(2 * rows * L * kA * 20 + 2 * rows * kA * k * 13 + 16 * rows * L),
        transcendentals=int(rows * (L + kA)),
        bytes_accessed=int(rows * (L * itemsize + kA * 4 + outw * 4)
                           + 4 * (2 * L * kA + kA * k)),
    )

    out = pl.pallas_call(
        _make_diffloss_kernel(A, k, L),
        grid=(nb,),
        out_shape=jax.ShapeDtypeStruct((rows, outw), jnp.float32),
        in_specs=[
            pl.BlockSpec((tb, kA), lambda i: (i, 0)),        # glabel (f32 exact ints)
            pl.BlockSpec((tb, L), lambda i: (i, 0)),         # logits (native dtype)
            pl.BlockSpec((L, kA), lambda i: (0, 0)),         # seg    (resident const)
            pl.BlockSpec((kA, L), lambda i: (0, 0)),         # seg_t  (resident const)
            pl.BlockSpec((kA, k), lambda i: (0, 0)),         # seg2   (resident const)
        ],
        out_specs=pl.BlockSpec((tb, outw), lambda i: (i, 0)),
        compiler_params=pltpu.CompilerParams(
            dimension_semantics=("parallel",),
            vmem_limit_bytes=int(vmem_cap * 3 // 4),
        ),
        cost_estimate=cost,
    )(glabel, logits, seg, seg_t, seg2)

    # Tiny O(B) epilogue in JAX; divisions use the global B / B*A (pad-safe).
    loss = out[:, 0:k].reshape(-1)[:B]
    allc = out[:, k:2 * k].reshape(-1)[:B]
    ncorr = out[:, 2 * k:3 * k].reshape(-1)[:B]
    acc = jnp.mean(allc)
    acc_or = jnp.sum(ncorr) / float(B * A)
    return loss, {"acc": acc, "acc_or": acc_or}


def _ref_diff_loss(sender_input, receiver_output, n_attributes, n_values, loss_type):
    """Pure-JAX reference mirroring the PyTorch semantics."""
    B = sender_input.shape[0]
    A, V = n_attributes, n_values
    labels = sender_input.astype(jnp.int32)
    if loss_type == "mixed":
        left = (labels[:, 0] + labels[:, 1]) % V
        right = (labels[:, 0] - labels[:, 1] + V) % V
        labels = labels.at[:, 0].set(left).at[:, 1].set(right)
    elif loss_type == "linear":
        a, b, c, d, e, f = SMALL_PRIMES
        left = (a * labels[:, 0] + b * labels[:, 1] + c) % V
        right = (d * labels[:, 0] + e * labels[:, 1] + f) % V
        labels = labels.at[:, 0].set(left).at[:, 1].set(right)
    logits = receiver_output.reshape(B, A, V).astype(jnp.float32)
    logp = jax.nn.log_softmax(logits, axis=-1)
    ce = -jnp.take_along_axis(logp, labels[:, :, None], axis=-1)[..., 0]
    loss = ce.mean(axis=-1)
    correct = jnp.argmax(logits, axis=-1) == labels
    acc = (correct.sum(axis=1) == A).astype(jnp.float32).mean()
    acc_or = correct.astype(jnp.float32).mean()
    return loss, acc, acc_or


if __name__ == "__main__":
    key = jax.random.PRNGKey(0)
    configs = [
        # packed k=2, wrapper pads one sample, two uneven batch tiles (nb=2)
        dict(B=333, A=4, V=16, loss_type="mixed", dtype=jnp.float32),
        # tiny batch, padded (B % k != 0), single full tile
        dict(B=13, A=4, V=16, loss_type="linear", dtype=jnp.float32),
        # odd A*V (=30) -> k=4, 120-lane rows, autoenc branch
        dict(B=8, A=3, V=10, loss_type="autoenc", dtype=jnp.float32),
        # native bf16 logits streamed without a wrapper-side f32 copy
        dict(B=16, A=4, V=16, loss_type="mixed", dtype=jnp.bfloat16),
        # A*V >= 128: packing factor k=1 path, multi-tile grid
        dict(B=24, A=4, V=64, loss_type="autoenc", dtype=jnp.float32),
    ]
    for cfg in configs:
        key, k1, k2 = jax.random.split(key, 3)
        B, A, V = cfg["B"], cfg["A"], cfg["V"]
        sender_input = jax.random.randint(k1, (B, A), 0, V, dtype=jnp.int32)
        receiver_output = jax.random.normal(
            k2, (B, A * V), dtype=jnp.float32).astype(cfg["dtype"])

        loss, aux = diff_loss(sender_input, receiver_output, A, V, cfg["loss_type"])
        loss, aux = jax.block_until_ready((loss, aux))

        ref_loss, ref_acc, ref_acc_or = _ref_diff_loss(
            sender_input, receiver_output, A, V, cfg["loss_type"])
        assert loss.shape == (B,), cfg
        assert jnp.allclose(loss, ref_loss, atol=1e-5, rtol=1e-5), cfg
        assert jnp.allclose(aux["acc"], ref_acc, atol=1e-6), cfg
        assert jnp.allclose(aux["acc_or"], ref_acc_or, atol=1e-6), cfg

    print("KERNEL_OK")
</pallas_src>

<mosaic_0001>
module attributes {stable_mosaic.version = 11 : i64} {
  func.func @kernel(%arg0: i32, %arg1: memref<88x8xf32, #tpu.memory_space<vmem>>, %arg2: memref<88x128xf32, #tpu.memory_space<vmem>>, %arg3: memref<128x8xf32, #tpu.memory_space<vmem>>, %arg4: memref<8x128xf32, #tpu.memory_space<vmem>>, %arg5: memref<8x2xf32, #tpu.memory_space<vmem>>, %arg6: memref<88x6xf32, #tpu.memory_space<vmem>>) attributes {dimension_semantics = [#tpu.dimension_semantics<parallel>], iteration_bounds = array<i64: 2>, scalar_prefetch = 0 : i64, scratch_operands = 0 : i64, tpu.core_type = #tpu.core_type<tc>, window_params = [{transform_indices = @transform_0, window_bounds = array<i64: 88, 8>}, {transform_indices = @transform_1, window_bounds = array<i64: 88, 128>}, {pipeline_mode = #tpu.pipeline_mode<synchronous>, transform_indices = @transform_2, window_bounds = array<i64: 128, 8>}, {pipeline_mode = #tpu.pipeline_mode<synchronous>, transform_indices = @transform_3, window_bounds = array<i64: 8, 128>}, {pipeline_mode = #tpu.pipeline_mode<synchronous>, transform_indices = @transform_4, window_bounds = array<i64: 8, 2>}, {transform_indices = @transform_5, window_bounds = array<i64: 88, 6>}]} {
    %c0 = arith.constant 0 : index
    %c0_0 = arith.constant 0 : index
    %0 = vector.load %arg2[%c0, %c0_0] : memref<88x128xf32, #tpu.memory_space<vmem>>, vector<88x128xf32>
    %c0_1 = arith.constant 0 : index
    %c0_2 = arith.constant 0 : index
    %1 = vector.load %arg1[%c0_1, %c0_2] : memref<88x8xf32, #tpu.memory_space<vmem>>, vector<88x8xf32>
    %c0_3 = arith.constant 0 : index
    %c0_4 = arith.constant 0 : index
    %2 = vector.load %arg3[%c0_3, %c0_4] : memref<128x8xf32, #tpu.memory_space<vmem>>, vector<128x8xf32>
    %c0_5 = arith.constant 0 : index
    %c0_6 = arith.constant 0 : index
    %3 = vector.load %arg4[%c0_5, %c0_6] : memref<8x128xf32, #tpu.memory_space<vmem>>, vector<8x128xf32>
    %c0_7 = arith.constant 0 : index
    %c0_8 = arith.constant 0 : index
    %4 = vector.load %arg5[%c0_7, %c0_8] : memref<8x2xf32, #tpu.memory_space<vmem>>, vector<8x2xf32>
    %5 = tpu.iota {dimensions = array<i32: 1>} : vector<1x128xi32>
    %6 = arith.sitofp %5 : vector<1x128xi32> to vector<1x128xf32>
    %cst = arith.constant dense<0.000000e+00> : vector<88x128xf32>
    %7 = tpu.matmul %1, %3, %cst {dimension_numbers = #tpu.dot_dimension_numbers<[1], [0], [0], [1], [0, 0, 1, 1], [], []>} : vector<88x8xf32>, vector<8x128xf32>, vector<88x128xf32> -> vector<88x128xf32>
    %8 = vector.broadcast %6 : vector<1x128xf32> to vector<88x128xf32>
    %9 = arith.subf %8, %7 : vector<88x128xf32>
    %10 = math.absf %9 : vector<88x128xf32>
    %cst_9 = arith.constant 5.000000e-01 : f32
    %11 = vector.broadcast %cst_9 : f32 to vector<88x128xf32>
    %12 = arith.cmpf olt, %10, %11 : vector<88x128xf32>
    %cst_10 = arith.constant dense<0xFF800000> : vector<88xf32>
    %13 = vector.multi_reduction <maximumf>, %0, %cst_10 [1] : vector<88x128xf32> to vector<88xf32>
    %14 = vector.shape_cast %13 : vector<88xf32> to vector<88x1xf32>
    %15 = vector.broadcast %14 : vector<88x1xf32> to vector<88x128xf32>
    %16 = arith.subf %0, %15 : vector<88x128xf32>
    %17 = math.exp %16 : vector<88x128xf32>
    %cst_11 = arith.constant dense<0.000000e+00> : vector<88x8xf32>
    %18 = tpu.matmul %17, %2, %cst_11 {dimension_numbers = #tpu.dot_dimension_numbers<[1], [0], [0], [1], [0, 0, 1, 1], [], []>, precision = #tpu.contract_precision<fp32>} : vector<88x128xf32>, vector<128x8xf32>, vector<88x8xf32> -> vector<88x8xf32>
    %cst_12 = arith.constant 0.000000e+00 : f32
    %19 = vector.broadcast %cst_12 : f32 to vector<88x128xf32>
    %20 = arith.select %12, %0, %19 : vector<88x128xi1>, vector<88x128xf32>
    %cst_13 = arith.constant dense<0.000000e+00> : vector<88x8xf32>
    %21 = tpu.matmul %20, %2, %cst_13 {dimension_numbers = #tpu.dot_dimension_numbers<[1], [0], [0], [1], [0, 0, 1, 1], [], []>, precision = #tpu.contract_precision<fp32>} : vector<88x128xf32>, vector<128x8xf32>, vector<88x8xf32> -> vector<88x8xf32>
    %cst_14 = arith.constant dense<0.000000e+00> : vector<88x2xf32>
    %22 = tpu.matmul %21, %4, %cst_14 {dimension_numbers = #tpu.dot_dimension_numbers<[1], [0], [0], [1], [0, 0, 1, 1], [], []>, precision = #tpu.contract_precision<fp32>} : vector<88x8xf32>, vector<8x2xf32>, vector<88x2xf32> -> vector<88x2xf32>
    %cst_15 = arith.constant 1.17549435E-38 : f32
    %23 = vector.broadcast %cst_15 : f32 to vector<88x8xf32>
    %24 = arith.maximumf %18, %23 : vector<88x8xf32>
    %25 = math.log %24 : vector<88x8xf32>
    %cst_16 = arith.constant dense<0.000000e+00> : vector<88x2xf32>
    %26 = tpu.matmul %25, %4, %cst_16 {dimension_numbers = #tpu.dot_dimension_numbers<[1], [0], [0], [1], [0, 0, 1, 1], [], []>, precision = #tpu.contract_precision<fp32>} : vector<88x8xf32>, vector<8x2xf32>, vector<88x2xf32> -> vector<88x2xf32>
    %cst_17 = arith.constant 4.000000e+00 : f32
    %27 = vector.broadcast %cst_17 : f32 to vector<88x1xf32>
    %28 = arith.mulf %27, %14 : vector<88x1xf32>
    %29 = vector.broadcast %28 : vector<88x1xf32> to vector<88x2xf32>
    %30 = arith.addf %26, %29 : vector<88x2xf32>
    %31 = arith.subf %30, %22 : vector<88x2xf32>
    %cst_18 = arith.constant 2.500000e-01 : f32
    %32 = vector.broadcast %cst_18 : f32 to vector<88x2xf32>
    %33 = arith.mulf %31, %32 : vector<88x2xf32>
    %cst_19 = arith.constant dense<0.000000e+00> : vector<88x128xf32>
    %34 = tpu.matmul %21, %3, %cst_19 {dimension_numbers = #tpu.dot_dimension_numbers<[1], [0], [0], [1], [0, 0, 1, 1], [], []>, precision = #tpu.contract_precision<fp32>} : vector<88x8xf32>, vector<8x128xf32>, vector<88x128xf32> -> vector<88x128xf32>
    %35 = arith.cmpf ogt, %0, %34 : vector<88x128xf32>
    %36 = arith.cmpf oeq, %0, %34 : vector<88x128xf32>
    %cst_20 = arith.constant 5.000000e-01 : f32
    %37 = vector.broadcast %cst_20 : f32 to vector<88x128xf32>
    %38 = arith.subf %7, %37 : vector<88x128xf32>
    %39 = vector.broadcast %6 : vector<1x128xf32> to vector<88x128xf32>
    %40 = arith.cmpf olt, %39, %38 : vector<88x128xf32>
    %41 = arith.andi %36, %40 : vector<88x128xi1>
    %42 = arith.ori %35, %41 : vector<88x128xi1>
    %43 = arith.extui %42 : vector<88x128xi1> to vector<88x128xi32>
    %44 = arith.sitofp %43 : vector<88x128xi32> to vector<88x128xf32>
    %cst_21 = arith.constant dense<0.000000e+00> : vector<88x8xf32>
    %45 = tpu.matmul %44, %2, %cst_21 {dimension_numbers = #tpu.dot_dimension_numbers<[1], [0], [0], [1], [0, 0, 1, 1], [], []>} : vector<88x128xf32>, vector<128x8xf32>, vector<88x8xf32> -> vector<88x8xf32>
    %cst_22 = arith.constant 5.000000e-01 : f32
    %46 = vector.broadcast %cst_22 : f32 to vector<88x8xf32>
    %47 = arith.cmpf olt, %45, %46 : vector<88x8xf32>
    %48 = arith.extui %47 : vector<88x8xi1> to vector<88x8xi32>
    %49 = arith.sitofp %48 : vector<88x8xi32> to vector<88x8xf32>
    %cst_23 = arith.constant dense<0.000000e+00> : vector<88x2xf32>
    %50 = tpu.matmul %49, %4, %cst_23 {dimension_numbers = #tpu.dot_dimension_numbers<[1], [0], [0], [1], [0, 0, 1, 1], [], []>} : vector<88x8xf32>, vector<8x2xf32>, vector<88x2xf32> -> vector<88x2xf32>
    %cst_24 = arith.constant 3.500000e+00 : f32
    %51 = vector.broadcast %cst_24 : f32 to vector<88x2xf32>
    %52 = arith.cmpf ogt, %50, %51 : vector<88x2xf32>
    %53 = arith.extui %52 : vector<88x2xi1> to vector<88x2xi32>
    %54 = arith.sitofp %53 : vector<88x2xi32> to vector<88x2xf32>
    %c0_25 = arith.constant 0 : index
    %c0_26 = arith.constant 0 : index
    %55 = vector.load %arg6[%c0_25, %c0_26] : memref<88x6xf32, #tpu.memory_space<vmem>>, vector<88x2xf32>
    tpu.vector_store %arg6[%c0_25, %c0_26], %33 {strides = array<i32>} : memref<88x6xf32, #tpu.memory_space<vmem>>, vector<88x2xf32>,
    %c0_27 = arith.constant 0 : index
    %c2 = arith.constant 2 : index
    %56 = vector.load %arg6[%c0_27, %c2] : memref<88x6xf32, #tpu.memory_space<vmem>>, vector<88x2xf32>
    tpu.vector_store %arg6[%c0_27, %c2], %54 {strides = array<i32>} : memref<88x6xf32, #tpu.memory_space<vmem>>, vector<88x2xf32>,
    %c0_28 = arith.constant 0 : index
    %c4 = arith.constant 4 : index
    %57 = vector.load %arg6[%c0_28, %c4] : memref<88x6xf32, #tpu.memory_space<vmem>>, vector<88x2xf32>
    tpu.vector_store %arg6[%c0_28, %c4], %50 {strides = array<i32>} : memref<88x6xf32, #tpu.memory_space<vmem>>, vector<88x2xf32>,
    return
  }
  func.func @transform_0(%arg0: i32) -> (i32, i32) {
    %c0_i32 = arith.constant 0 : i32
    %c0_i32_0 = arith.constant 0 : i32
    return %arg0, %c0_i32 : i32, i32
  }
  func.func @transform_1(%arg0: i32) -> (i32, i32) {
    %c0_i32 = arith.constant 0 : i32
    %c0_i32_0 = arith.constant 0 : i32
    return %arg0, %c0_i32 : i32, i32
  }
  func.func @transform_2(%arg0: i32) -> (i32, i32) {
    %c0_i32 = arith.constant 0 : i32
    %c0_i32_0 = arith.constant 0 : i32
    %c0_i32_1 = arith.constant 0 : i32
    return %c0_i32, %c0_i32_0 : i32, i32
  }
  func.func @transform_3(%arg0: i32) -> (i32, i32) {
    %c0_i32 = arith.constant 0 : i32
    %c0_i32_0 = arith.constant 0 : i32
    %c0_i32_1 = arith.constant 0 : i32
    return %c0_i32, %c0_i32_0 : i32, i32
  }
  func.func @transform_4(%arg0: i32) -> (i32, i32) {
    %c0_i32 = arith.constant 0 : i32
    %c0_i32_0 = arith.constant 0 : i32
    %c0_i32_1 = arith.constant 0 : i32
    return %c0_i32, %c0_i32_0 : i32, i32
  }
  func.func @transform_5(%arg0: i32) -> (i32, i32) {
    %c0_i32 = arith.constant 0 : i32
    %c0_i32_0 = arith.constant 0 : i32
    return %arg0, %c0_i32 : i32, i32
  }
}

</mosaic_0001>

<llo_original>
// kernel: tpu_custom_call.1
$region0: #{tpu_custom_call.1}
  #allocation0 [shape = 'u32[]', space=smem, size = 0x4, offset = 0x4, fixed_abs, tag = 'smem constant byte address 0x4 - core index']
  #allocation1 [shape = 'u32[144,128]{1,0:T(1,128)}', space=vmem, size = 0x12000, scoped, tag = 'internal scratch']
  %s0 = inlined_call_operand.vmem [shape: f32[167,8], index: 0, kind: input, shape index: {}]
  %s1 = inlined_call_operand.vmem [shape: f32[167,128], index: 1, kind: input, shape index: {}]
  %s2 = inlined_call_operand.vmem [shape: f32[128,8], index: 2, kind: input, shape index: {}]
  %s3 = inlined_call_operand.vmem [shape: f32[8,128], index: 3, kind: input, shape index: {}]
  %s4 = inlined_call_operand.vmem [shape: f32[8,2], index: 4, kind: input, shape index: {}]
  %s5 = inlined_call_operand.vmem [shape: f32[167,6], index: 5, kind: output, shape index: {}]
  %s6 = sld [smem:[#allocation0]]
  $region101: #{tpu_custom_call.1} parent=0
    _
  %s8 = ssub.s32 1, %s6
  %s9 = scalar_select 0, %s8, %s6
  $region1: #{tpu_custom_call.1} parent=0
    #allocation2 [shape = 'u8[90112]{0}', space=vmem, size = 0x16000, scoped, tag = 'output window, operand 0']
    loop: start=0, step=1, limit=4
    $region2: #{tpu_custom_call.1} parent=1 // loop_pre_header
      _
    $region3: #{tpu_custom_call.1} parent=1 // loop_header
      %s11 = sphi 0, %s15
      %p12 = scmp.ge.s32.totalorder %s11, 4
      %s21 = sphi 0, %s23
      %s24 = sphi 0, %s21
      %s25 = sphi 0, %s24
      %s41 = sphi 0, %s25
      %s47 = sphi 0, %s49
      %s50 = sphi 0, %s47
      %s51 = sphi 0, %s50
      %s67 = sphi 0, %s51
      %s71 = sphi 0, %s71
      %s73 = sphi 0, %s71
      %s74 = sphi 0, %s73
      %s88 = sphi 0, %s74
      %s92 = sphi 0, %s92
      %s94 = sphi 0, %s92
      %s95 = sphi 0, %s94
      %s109 = sphi 0, %s95
      %s113 = sphi 0, %s113
      %s115 = sphi 0, %s113
      %s116 = sphi 0, %s115
      %s130 = sphi 0, %s116
      %s136 = sphi 0, %s138
      %s139 = sphi 0, %s136
      %s140 = sphi 0, %s139
      %s156 = sphi 0, %s140
    $region4: #{tpu_custom_call.1} parent=1 // loop_header_branch
      %14 = sbr.rel (%p12) target = $region8
    $region5: #{tpu_custom_call.1} parent=1 // loop_body
      %s16 = ssub.s32 %s11, 1
      %s17 = ssub.s32 %s11, 2
      %s18 = sadd.s32 %s11, 1
      %s19 = ssub.s32 %s11, %s18
      %p20 = scmp.eq.s32.totalorder %s19, 0
      %s22 = sadd.s32 %s21, 1
      %s23 = scalar_select %p20, %s21, %s22
      %p26 = pneg %p20
      %p27 = scmp.eq.s32.totalorder %s11, 1
      %p28 = por %p26, %p27
      %p29 = scmp.ne.s32.totalorder %s21, %s24
      %p30 = scmp.eq.s32.totalorder %s11, 0
      %p31 = por %p29, %p30
      %p32 = scmp.ne.s32.totalorder %s21, %s24
      %p33 = scmp.eq.s32.totalorder %s16, 1
      %p34 = por %p32, %p33
      %p35 = scmp.ne.s32.totalorder %s24, %s25
      %p36 = scmp.eq.s32.totalorder %s16, 0
      %p37 = por %p35, %p36
      %p38 = scmp.ne.s32.totalorder %s24, %s25
      %p39 = scmp.eq.s32.totalorder %s17, 1
      %p40 = por %p38, %p39
      %p42 = scmp.ne.s32.totalorder %s25, %s41
      %p43 = scmp.eq.s32.totalorder %s17, 0
      %p44 = por %p42, %p43
      %s45 = ssub.s32 %s11, %s18
      %p46 = scmp.eq.s32.totalorder %s45, 0
      %s48 = sadd.s32 %s47, 1
      %s49 = scalar_select %p46, %s47, %s48
      %p52 = pneg %p46
      %p53 = scmp.eq.s32.totalorder %s11, 1
      %p54 = por %p52, %p53
      %p55 = scmp.ne.s32.totalorder %s47, %s50
      %p56 = scmp.eq.s32.totalorder %s11, 0
      %p57 = por %p55, %p56
      %p58 = scmp.ne.s32.totalorder %s47, %s50
      %p59 = scmp.eq.s32.totalorder %s16, 1
      %p60 = por %p58, %p59
      %p61 = scmp.ne.s32.totalorder %s50, %s51
      %p62 = scmp.eq.s32.totalorder %s16, 0
      %p63 = por %p61, %p62
      %p64 = scmp.ne.s32.totalorder %s50, %s51
      %p65 = scmp.eq.s32.totalorder %s17, 1
      %p66 = por %p64, %p65
      %p68 = scmp.ne.s32.totalorder %s51, %s67
      %p69 = scmp.eq.s32.totalorder %s17, 0
      %p70 = por %p68, %p69
      %s72 = sadd.s32 %s71, 1
      %p75 = scmp.eq.s32.totalorder %s11, 1
      %p76 = scmp.ne.s32.totalorder %s71, %s73
      %p77 = scmp.eq.s32.totalorder %s11, 0
      %p78 = por %p76, %p77
      %p79 = scmp.ne.s32.totalorder %s71, %s73
      %p80 = scmp.eq.s32.totalorder %s16, 1
      %p81 = por %p79, %p80
      %p82 = scmp.ne.s32.totalorder %s73, %s74
      %p83 = scmp.eq.s32.totalorder %s16, 0
      %p84 = por %p82, %p83
      %p85 = scmp.ne.s32.totalorder %s73, %s74
      %p86 = scmp.eq.s32.totalorder %s17, 1
      %p87 = por %p85, %p86
      %p89 = scmp.ne.s32.totalorder %s74, %s88
      %p90 = scmp.eq.s32.totalorder %s17, 0
      %p91 = por %p89, %p90
      %s93 = sadd.s32 %s92, 1
      %p96 = scmp.eq.s32.totalorder %s11, 1
      %p97 = scmp.ne.s32.totalorder %s92, %s94
      %p98 = scmp.eq.s32.totalorder %s11, 0
      %p99 = por %p97, %p98
      %p100 = scmp.ne.s32.totalorder %s92, %s94
      %p101 = scmp.eq.s32.totalorder %s16, 1
      %p102 = por %p100, %p101
      %p103 = scmp.ne.s32.totalorder %s94, %s95
      %p104 = scmp.eq.s32.totalorder %s16, 0
      %p105 = por %p103, %p104
      %p106 = scmp.ne.s32.totalorder %s94, %s95
      %p107 = scmp.eq.s32.totalorder %s17, 1
      %p108 = por %p106, %p107
      %p110 = scmp.ne.s32.totalorder %s95, %s109
      %p111 = scmp.eq.s32.totalorder %s17, 0
      %p112 = por %p110, %p111
      %s114 = sadd.s32 %s113, 1
      %p117 = scmp.eq.s32.totalorder %s11, 1
      %p118 = scmp.ne.s32.totalorder %s113, %s115
      %p119 = scmp.eq.s32.totalorder %s11, 0
      %p120 = por %p118, %p119
      %p121 = scmp.ne.s32.totalorder %s113, %s115
      %p122 = scmp.eq.s32.totalorder %s16, 1
      %p123 = por %p121, %p122
      %p124 = scmp.ne.s32.totalorder %s115, %s116
      %p125 = scmp.eq.s32.totalorder %s16, 0
      %p126 = por %p124, %p125
      %p127 = scmp.ne.s32.totalorder %s115, %s116
      %p128 = scmp.eq.s32.totalorder %s17, 1
      %p129 = por %p127, %p128
      %p131 = scmp.ne.s32.totalorder %s116, %s130
      %p132 = scmp.eq.s32.totalorder %s17, 0
      %p133 = por %p131, %p132
      %s134 = ssub.s32 %s11, %s18
      %p135 = scmp.eq.s32.totalorder %s134, 0
      %s137 = sadd.s32 %s136, 1
      %s138 = scalar_select %p135, %s136, %s137
      %p141 = pneg %p135
      %p142 = scmp.eq.s32.totalorder %s11, 1
      %p143 = por %p141, %p142
      %p144 = scmp.ne.s32.totalorder %s136, %s139
      %p145 = scmp.eq.s32.totalorder %s11, 0
      %p146 = por %p144, %p145
      %p147 = scmp.ne.s32.totalorder %s136, %s139
      %p148 = scmp.eq.s32.totalorder %s16, 1
      %p149 = por %p147, %p148
      %p150 = scmp.ne.s32.totalorder %s139, %s140
      %p151 = scmp.eq.s32.totalorder %s16, 0
      %p152 = por %p150, %p151
      %p153 = scmp.ne.s32.totalorder %s139, %s140
      %p154 = scmp.eq.s32.totalorder %s17, 1
      %p155 = por %p153, %p154
      %p157 = scmp.ne.s32.totalorder %s140, %s156
      %p158 = scmp.eq.s32.totalorder %s17, 0
      %p159 = por %p157, %p158
      %p160 = scmp.le.s32.totalorder 1, %s11
      %p161 = scmp.lt.s32.totalorder %s11, 3
      %p162 = pnand %p160, %p161
      %p163 = pneg %p162
      // Predicated region
      $region9: #{tpu_custom_call.1} parent=5 // pred_check
        _
      $region10: #{tpu_custom_call.1} parent=5 // pred_check_branch
        %165 = sbr.rel (%p162) target = $region12
      $region11: #{tpu_custom_call.1} parent=5 // pred_region
        %s166 = ssub.s32 %s11, 1
        // Predicated region
        $region13: #{tpu_custom_call.1} parent=11 // pred_check
          %p167 = pneg %p84
        $region14: #{tpu_custom_call.1} parent=11 // pred_check_branch
          %169 = sbr.rel (%p167) target = $region16
        $region15: #{tpu_custom_call.1} parent=11 // pred_region
          _
        $region16: #{tpu_custom_call.1} parent=11 // pred_fallthru
          _
        // Predicated region
        $region17: #{tpu_custom_call.1} parent=11 // pred_check
          %p170 = pneg %p105
        $region18: #{tpu_custom_call.1} parent=11 // pred_check_branch
          %172 = sbr.rel (%p170) target = $region20
        $region19: #{tpu_custom_call.1} parent=11 // pred_region
          _
        $region20: #{tpu_custom_call.1} parent=11 // pred_fallthru
          _
        // Predicated region
        $region21: #{tpu_custom_call.1} parent=11 // pred_check
          %p173 = pneg %p126
        $region22: #{tpu_custom_call.1} parent=11 // pred_check_branch
          %175 = sbr.rel (%p173) target = $region24
        $region23: #{tpu_custom_call.1} parent=11 // pred_region
          _
        $region24: #{tpu_custom_call.1} parent=11 // pred_fallthru
          _
      $region12: #{tpu_custom_call.1} parent=5 // pred_fallthru
        _
      %p176 = scmp.lt.s32.totalorder %s11, 2
      // Predicated region
      $region25: #{tpu_custom_call.1} parent=5 // pred_check
        %p177 = pneg %p176
      $region26: #{tpu_custom_call.1} parent=5 // pred_check_branch
        %179 = sbr.rel (%p177) target = $region28
      $region27: #{tpu_custom_call.1} parent=5 // pred_region
        // Predicated region
        $region29: #{tpu_custom_call.1} parent=27 // pred_check
          %p180 = pneg %p31
        $region30: #{tpu_custom_call.1} parent=27 // pred_check_branch
          %182 = sbr.rel (%p180) target = $region32
        $region31: #{tpu_custom_call.1} parent=27 // pred_region
          %s183 = smul.u32 11, %s11
          %s184 = ssub.s32 21, %s183
          %p185 = scmp.lt.s32.totalorder %s184, 11
          %s186 = scalar_select %p185, %s184, 11
          %s187 = smul.u32 128, %s186
          %p188 = scmp.lt.s32.totalorder %s183, 20
          %s189 = scalar_select %p188, %s183, 20
          %s190 = smul.addr %s189, 8
          %s191 = scalar_lea.vmem %s0, %s190
          %s192 = smul.u32 11, %s11
          %s193 = ssub.s32 21, %s192
          %p194 = scmp.lt.s32.totalorder %s193, 11
          %s195 = scalar_select %p194, %s193, 11
          %s196 = smul.u32 128, %s195
        $region32: #{tpu_custom_call.1} parent=27 // pred_fallthru
          _
        // Predicated region
        $region33: #{tpu_custom_call.1} parent=27 // pred_check
          %p197 = pneg %p57
        $region34: #{tpu_custom_call.1} parent=27 // pred_check_branch
          %199 = sbr.rel (%p197) target = $region36
        $region35: #{tpu_custom_call.1} parent=27 // pred_region
          %s200 = smul.u32 11, %s11
          %s201 = ssub.s32 21, %s200
          %p202 = scmp.lt.s32.totalorder %s201, 11
          %s203 = scalar_select %p202, %s201, 11
          %s204 = smul.u32 128, %s203
          %p205 = scmp.lt.s32.totalorder %s200, 20
          %s206 = scalar_select %p205, %s200, 20
          %s207 = smul.addr %s206, 8
          %s208 = scalar_lea.vmem %s1, %s207
          %s209 = smul.u32 11, %s11
          %s210 = ssub.s32 21, %s209
          %p211 = scmp.lt.s32.totalorder %s210, 11
          %s212 = scalar_select %p211, %s210, 11
          %s213 = smul.u32 128, %s212
        $region36: #{tpu_custom_call.1} parent=27 // pred_fallthru
          _
      $region28: #{tpu_custom_call.1} parent=5 // pred_fallthru
        _
      %p214 = scmp.le.s32.totalorder 1, %s11
      %p215 = scmp.lt.s32.totalorder %s11, 3
      %p216 = pnand %p214, %p215
      %p217 = pneg %p216
      // Predicated region
      $region37: #{tpu_custom_call.1} parent=5 // pred_check
        _
      $region38: #{tpu_custom_call.1} parent=5 // pred_check_branch
        %219 = sbr.rel (%p216) target = $region40
      $region39: #{tpu_custom_call.1} parent=5 // pred_region
        %s220 = ssub.s32 %s11, 1
        %s221 = smul.u32 11, %s16
        %s222 = ssub.s32 21, %s221
        %p223 = scmp.lt.s32.totalorder %s222, 11
        %s224 = scalar_select %p223, %s222, 11
        %s225 = smul.u32 128, %s224
        %p226 = scmp.lt.s32.totalorder %s221, 20
        %s227 = scalar_select %p226, %s221, 20
        %s228 = smul.addr %s227, 8
        %s229 = scalar_lea.vmem %s0, %s228
        %p230 = pneg %p37
        %p231 = pneg %p34
        %s232 = smul.u32 11, %s16
        %s233 = ssub.s32 21, %s232
        %p234 = scmp.lt.s32.totalorder %s233, 11
        %s235 = scalar_select %p234, %s233, 11
        %s236 = smul.u32 128, %s235
        %p237 = scmp.lt.s32.totalorder %s232, 20
        %s238 = scalar_select %p237, %s232, 20
        %s239 = smul.addr %s238, 8
        %s240 = scalar_lea.vmem %s1, %s239
        %p241 = pneg %p63
        %p242 = pneg %p60
        %p243 = pneg %p84
        %p244 = pneg %p81
        %p245 = pneg %p105
        %p246 = pneg %p102
        %p247 = pneg %p126
        %p248 = pneg %p123
        %p249 = pneg %p152
        %p250 = pneg %p149
        %s251 = sand.u32 %s139, 1
        %s252 = sand.u32 %s139, 1
        %s253 = smul.addr %s252, 88
        %s254 = scalar_lea.vmem [#allocation2], %s253
        %s255 = smul.u32 11, %s16
        %s256 = ssub.s32 21, %s255
        %p257 = scmp.lt.s32.totalorder %s256, 11
        %s258 = scalar_select %p257, %s256, 11
        %s259 = smul.u32 128, %s258
        %p260 = scmp.lt.s32.totalorder %s255, 20
        %s261 = scalar_select %p260, %s255, 20
        %s262 = smul.addr %s261, 8
        %s263 = scalar_lea.vmem %s0, %s262
        %s264 = smul.u32 11, %s16
        %s265 = ssub.s32 21, %s264
        %p266 = scmp.lt.s32.totalorder %s265, 11
        %s267 = scalar_select %p266, %s265, 11
        %s268 = smul.u32 128, %s267
        %s269 = smul.u32 11, %s16
        %s270 = ssub.s32 21, %s269
        %p271 = scmp.lt.s32.totalorder %s270, 11
        %s272 = scalar_select %p271, %s270, 11
        %s273 = smul.u32 128, %s272
        %p274 = scmp.lt.s32.totalorder %s269, 20
        %s275 = scalar_select %p274, %s269, 20
        %s276 = smul.addr %s275, 8
        %s277 = scalar_lea.vmem %s1, %s276
        %s278 = smul.u32 11, %s16
        %s279 = ssub.s32 21, %s278
        %p280 = scmp.lt.s32.totalorder %s279, 11
        %s281 = scalar_select %p280, %s279, 11
        %s282 = smul.u32 128, %s281
        %s283 = smul.u32 11, %s16
        %s284 = ssub.s32 21, %s283
        %p285 = scmp.lt.s32.totalorder %s284, 11
        %s286 = scalar_select %p285, %s284, 11
        %s287 = smul.u32 128, %s286
        %v288 = vld [vmem:[%s277] sm:$0xff]
        %v289 = vld [vmem:[%s277 + $0x8] sm:$0xff]
        %v290 = vld [vmem:[%s277 + $0x10] sm:$0xff]
        %v291 = vld [vmem:[%s277 + $0x18] sm:$0xff]
        %v292 = vld [vmem:[%s277 + $0x20] sm:$0xff]
        %v293 = vld [vmem:[%s277 + $0x28] sm:$0xff]
        %v294 = vld [vmem:[%s277 + $0x30] sm:$0xff]
        %v295 = vld [vmem:[%s277 + $0x38] sm:$0xff]
        %v296 = vld [vmem:[%s277 + $0x40] sm:$0xff]
        %v297 = vld [vmem:[%s277 + $0x48] sm:$0xff]
        %v298 = vld [vmem:[%s277 + $0x50] sm:$0xff]
        %v299 = vld [vmem:[%s263] sm:$0xff]
        %v300 = vld [vmem:[%s263 + $0x8] sm:$0xff]
        %v301 = vld [vmem:[%s263 + $0x10] sm:$0xff]
        %v302 = vld [vmem:[%s263 + $0x18] sm:$0xff]
        %v303 = vld [vmem:[%s263 + $0x20] sm:$0xff]
        %v304 = vld [vmem:[%s263 + $0x28] sm:$0xff]
        %v305 = vld [vmem:[%s263 + $0x30] sm:$0xff]
        %v306 = vld [vmem:[%s263 + $0x38] sm:$0xff]
        %v307 = vld [vmem:[%s263 + $0x40] sm:$0xff]
        %v308 = vld [vmem:[%s263 + $0x48] sm:$0xff]
        %v309 = vld [vmem:[%s263 + $0x50] sm:$0xff]
        %v310 = vld [vmem:[%s2] sm:$0xff]
        %v311 = vld [vmem:[%s2 + $0x8] sm:$0xff]
        %v312 = vld [vmem:[%s2 + $0x10] sm:$0xff]
        %v313 = vld [vmem:[%s2 + $0x18] sm:$0xff]
        %v314 = vld [vmem:[%s2 + $0x20] sm:$0xff]
        %v315 = vld [vmem:[%s2 + $0x28] sm:$0xff]
        %v316 = vld [vmem:[%s2 + $0x30] sm:$0xff]
        %v317 = vld [vmem:[%s2 + $0x38] sm:$0xff]
        %v318 = vld [vmem:[%s2 + $0x40] sm:$0xff]
        %v319 = vld [vmem:[%s2 + $0x48] sm:$0xff]
        %v320 = vld [vmem:[%s2 + $0x50] sm:$0xff]
        %v321 = vld [vmem:[%s2 + $0x58] sm:$0xff]
        %v322 = vld [vmem:[%s2 + $0x60] sm:$0xff]
        %v323 = vld [vmem:[%s2 + $0x68] sm:$0xff]
        %v324 = vld [vmem:[%s2 + $0x70] sm:$0xff]
        %v325 = vld [vmem:[%s2 + $0x78] sm:$0xff]
        %v326 = vld [vmem:[%s3] sm:$0xff]
        %v327 = vld [vmem:[%s4] sm:$0xff]
        %v328 = vlaneseq
        %v329 = vand.u32 %v328, 127
        %v330 = vcvt.s32.f32 %v329
        %vm331 = vcmask 64512
        %v333 = vsel %vm331, %v299, 0
        %v336 = vsel %vm331, %v300, 0
        %v339 = vsel %vm331, %v301, 0
        %v342 = vsel %vm331, %v302, 0
        %v345 = vsel %vm331, %v303, 0
        %v348 = vsel %vm331, %v304, 0
        %v351 = vsel %vm331, %v305, 0
        %v354 = vsel %vm331, %v306, 0
        %v357 = vsel %vm331, %v307, 0
        %v360 = vsel %vm331, %v308, 0
        %v363 = vsel %vm331, %v309, 0
        %365 = vmatprep.subr.mxu0 0.0
        %366 = vmatpush1.msra.mxu0 %v326
        %367 = vmatprep.subr.mxu0 0.0
        %368 = vmatpush1.msra.mxu0 0.0
        %369 = vmatprep.subr.mxu0 0.0
        %370 = vmatpush1.msra.mxu0 0.0
        %371 = vmatprep.subr.mxu0 0.0
        %372 = vmatpush1.msra.mxu0 0.0
        %373 = vmatprep.subr.mxu0 0.0
        %374 = vmatpush1.msra.mxu0 0.0
        %375 = vmatprep.subr.mxu0 0.0
        %376 = vmatpush1.msra.mxu0 0.0
        %377 = vmatprep.subr.mxu0 0.0
        %378 = vmatpush1.msra.mxu0 0.0
        %379 = vmatprep.subr.mxu0 0.0
        %380 = vmatpush1.msra.mxu0 0.0
        %381 = vmatprep.subr.mxu0 0.0
        %382 = vmatpush1.msra.mxu0 0.0
        %383 = vmatprep.subr.mxu0 0.0
        %384 = vmatpush1.msra.mxu0 0.0
        %385 = vmatprep.subr.mxu0 0.0
        %386 = vmatpush1.msra.mxu0 0.0
        %387 = vmatprep.subr.mxu0 0.0
        %388 = vmatpush1.msra.mxu0 0.0
        %389 = vmatprep.subr.mxu0 0.0
        %390 = vmatpush1.msra.mxu0 0.0
        %391 = vmatprep.subr.mxu0 0.0
        %392 = vmatpush1.msra.mxu0 0.0
        %393 = vmatprep.subr.mxu0 0.0
        %394 = vmatpush1.msra.mxu0 0.0
        %395 = vmatprep.subr.mxu0 0.0
        %396 = vmatpush1.msra.mxu0 0.0
        %397 = vmatprep.subr.mxu0 0.0
        %398 = vmatpush1.msra.mxu0 0.0
        %399 = vmatprep.subr.mxu0 0.0
        %400 = vmatpush1.msra.mxu0 0.0
        %401 = vmatprep.subr.mxu0 0.0
        %402 = vmatpush1.msra.mxu0 0.0
        %403 = vmatprep.subr.mxu0 0.0
        %404 = vmatpush1.msra.mxu0 0.0
        %405 = vmatprep.subr.mxu0 0.0
        %406 = vmatpush1.msra.mxu0 0.0
        %407 = vmatprep.subr.mxu0 0.0
        %408 = vmatpush1.msra.mxu0 0.0
        %409 = vmatprep.subr.mxu0 0.0
        %410 = vmatpush1.msra.mxu0 0.0
        %411 = vmatprep.subr.mxu0 0.0
        %412 = vmatpush1.msra.mxu0 0.0
        %413 = vmatprep.subr.mxu0 0.0
        %414 = vmatpush1.msra.mxu0 0.0
        %415 = vmatprep.subr.mxu0 0.0
        %416 = vmatpush1.msra.mxu0 0.0
        %417 = vmatprep.subr.mxu0 0.0
        %418 = vmatpush1.msra.mxu0 0.0
        %419 = vmatprep.subr.mxu0 0.0
        %420 = vmatpush1.msra.mxu0 0.0
        %421 = vmatprep.subr.mxu0 0.0
        %422 = vmatpush1.msra.mxu0 0.0
        %423 = vmatprep.subr.mxu0 0.0
        %424 = vmatpush1.msra.mxu0 0.0
        %425 = vmatprep.subr.mxu0 0.0
        %426 = vmatpush1.msra.mxu0 0.0
        %427 = vmatprep.subr.mxu0 0.0
        %428 = vmatpush1.msra.mxu0 0.0
        %429 = vmatprep.mubr.f32.mxu0 0.0
        %430 = vmatmul.mubr.f32.gmra.mrb[0].mxu0 %v333
        %v431 = vpop.f32.mrb[0].mxu0
        %v432 = vadd.f32 0.0, %v431
        %v433 = vpop.f32.mrb[0].mxu0
        %434 = vmatprep.mubr.f32.mxu0 0.0
        %435 = vmatmul.mubr.f32.gmra.mrb[0].mxu0 %v336
        %v436 = vpop.f32.mrb[0].mxu0
        %v437 = vadd.f32 0.0, %v436
        %v438 = vpop.f32.mrb[0].mxu0
        %439 = vmatprep.mubr.f32.mxu0 0.0
        %440 = vmatmul.mubr.f32.gmra.mrb[0].mxu0 %v339
        %v441 = vpop.f32.mrb[0].mxu0
        %v442 = vadd.f32 0.0, %v441
        %v443 = vpop.f32.mrb[0].mxu0
        %444 = vmatprep.mubr.f32.mxu0 0.0
        %445 = vmatmul.mubr.f32.gmra.mrb[0].mxu0 %v342
        %v446 = vpop.f32.mrb[0].mxu0
        %v447 = vadd.f32 0.0, %v446
        %v448 = vpop.f32.mrb[0].mxu0
        %449 = vmatprep.mubr.f32.mxu0 0.0
        %450 = vmatmul.mubr.f32.gmra.mrb[0].mxu0 %v345
        %v451 = vpop.f32.mrb[0].mxu0
        %v452 = vadd.f32 0.0, %v451
        %v453 = vpop.f32.mrb[0].mxu0
        %454 = vmatprep.mubr.f32.mxu0 0.0
        %455 = vmatmul.mubr.f32.gmra.mrb[0].mxu0 %v348
        %v456 = vpop.f32.mrb[0].mxu0
        %v457 = vadd.f32 0.0, %v456
        %v458 = vpop.f32.mrb[0].mxu0
        %459 = vmatprep.mubr.f32.mxu0 0.0
        %460 = vmatmul.mubr.f32.gmra.mrb[0].mxu0 %v351
        %v461 = vpop.f32.mrb[0].mxu0
        %v462 = vadd.f32 0.0, %v461
        %v463 = vpop.f32.mrb[0].mxu0
        %464 = vmatprep.mubr.f32.mxu0 0.0
        %465 = vmatmul.mubr.f32.gmra.mrb[0].mxu0 %v354
        %v466 = vpop.f32.mrb[0].mxu0
        %v467 = vadd.f32 0.0, %v466
        %v468 = vpop.f32.mrb[0].mxu0
        %469 = vmatprep.mubr.f32.mxu0 0.0
        %470 = vmatmul.mubr.f32.gmra.mrb[0].mxu0 %v357
        %v471 = vpop.f32.mrb[0].mxu0
        %v472 = vadd.f32 0.0, %v471
        %v473 = vpop.f32.mrb[0].mxu0
        %474 = vmatprep.mubr.f32.mxu0 0.0
        %475 = vmatmul.mubr.f32.gmra.mrb[0].mxu0 %v360
        %v476 = vpop.f32.mrb[0].mxu0
        %v477 = vadd.f32 0.0, %v476
        %v478 = vpop.f32.mrb[0].mxu0
        %479 = vmatprep.mubr.f32.mxu0 0.0
        %480 = vmatmul.mubr.f32.gmra.mrb[0].mxu0 %v363
        %v481 = vpop.f32.mrb[0].mxu0
        %v482 = vadd.f32 0.0, %v481
        %v483 = vpop.f32.mrb[0].mxu0
        %484 = vdwg.mxu0
        %v485 = vsub.f32 %v330, %v432
        %v486 = vsub.f32 %v330, %v437
        %v487 = vsub.f32 %v330, %v442
        %v488 = vsub.f32 %v330, %v447
        %v489 = vsub.f32 %v330, %v452
        %v490 = vsub.f32 %v330, %v457
        %v491 = vsub.f32 %v330, %v462
        %v492 = vsub.f32 %v330, %v467
        %v493 = vsub.f32 %v330, %v472
        %v494 = vsub.f32 %v330, %v477
        %v495 = vsub.f32 %v330, %v482
        %v496 = vand.u32 2147483647, %v485
        %v497 = vand.u32 2147483647, %v486
        %v498 = vand.u32 2147483647, %v487
        %v499 = vand.u32 2147483647, %v488
        %v500 = vand.u32 2147483647, %v489
        %v501 = vand.u32 2147483647, %v490
        %v502 = vand.u32 2147483647, %v491
        %v503 = vand.u32 2147483647, %v492
        %v504 = vand.u32 2147483647, %v493
        %v505 = vand.u32 2147483647, %v494
        %v506 = vand.u32 2147483647, %v495
        %vm507 = vcmp.lt.f32.partialorder %v496, 0.5
        %vm508 = vcmp.lt.f32.partialorder %v497, 0.5
        %vm509 = vcmp.lt.f32.partialorder %v498, 0.5
        %vm510 = vcmp.lt.f32.partialorder %v499, 0.5
        %vm511 = vcmp.lt.f32.partialorder %v500, 0.5
        %vm512 = vcmp.lt.f32.partialorder %v501, 0.5
        %vm513 = vcmp.lt.f32.partialorder %v502, 0.5
        %vm514 = vcmp.lt.f32.partialorder %v503, 0.5
        %vm515 = vcmp.lt.f32.partialorder %v504, 0.5
        %vm516 = vcmp.lt.f32.partialorder %v505, 0.5
        %vm517 = vcmp.lt.f32.partialorder %v506, 0.5
        %518 = vmax.xlane.f32.xlu0 %v288
        %v519 = vpop.xlane.xlu0 %518
        %520 = vmax.xlane.f32.xlu0 %v289
        %v521 = vpop.xlane.xlu0 %520
        %522 = vmax.xlane.f32.xlu0 %v290
        %v523 = vpop.xlane.xlu0 %522
        %524 = vmax.xlane.f32.xlu0 %v291
        %v525 = vpop.xlane.xlu0 %524
        %526 = vmax.xlane.f32.xlu0 %v292
        %v527 = vpop.xlane.xlu0 %526
        %528 = vmax.xlane.f32.xlu0 %v293
        %v529 = vpop.xlane.xlu0 %528
        %530 = vmax.xlane.f32.xlu0 %v294
        %v531 = vpop.xlane.xlu0 %530
        %532 = vmax.xlane.f32.xlu0 %v295
        %v533 = vpop.xlane.xlu0 %532
        %534 = vmax.xlane.f32.xlu0 %v296
        %v535 = vpop.xlane.xlu0 %534
        %536 = vmax.xlane.f32.xlu0 %v297
        %v537 = vpop.xlane.xlu0 %536
        %538 = vmax.xlane.f32.xlu0 %v298
        %v539 = vpop.xlane.xlu0 %538
        %v540 = vsub.f32 %v288, %v519
        %v541 = vsub.f32 %v289, %v521
        %v542 = vsub.f32 %v290, %v523
        %v543 = vsub.f32 %v291, %v525
        %v544 = vsub.f32 %v292, %v527
        %v545 = vsub.f32 %v293, %v529
        %v546 = vsub.f32 %v294, %v531
        %v547 = vsub.f32 %v295, %v533
        %v548 = vsub.f32 %v296, %v535
        %v549 = vsub.f32 %v297, %v537
        %v550 = vsub.f32 %v298, %v539
        %v551 = vmul.f32 %v540, 1.442695
        %v552 = vpow.pop %v551
        %v553 = vmul.f32 %v541, 1.442695
        %v554 = vpow.pop %v553
        %v555 = vmul.f32 %v542, 1.442695
        %v556 = vpow.pop %v555
        %v557 = vmul.f32 %v543, 1.442695
        %v558 = vpow.pop %v557
        %v559 = vmul.f32 %v544, 1.442695
        %v560 = vpow.pop %v559
        %v561 = vmul.f32 %v545, 1.442695
        %v562 = vpow.pop %v561
        %v563 = vmul.f32 %v546, 1.442695
        %v564 = vpow.pop %v563
        %v565 = vmul.f32 %v547, 1.442695
        %v566 = vpow.pop %v565
        %v567 = vmul.f32 %v548, 1.442695
        %v568 = vpow.pop %v567
        %v569 = vmul.f32 %v549, 1.442695
        %v570 = vpow.pop %v569
        %v571 = vmul.f32 %v550, 1.442695
        %v572 = vpow.pop %v571
        %573 = vmatprep.subr.mxu0 0.0
        %v574 = vand.u32 %v310, 4294901760
        %575 = vmatpush1.msra.mxu0 %v574
        %576 = vmatprep.subr.mxu0 0.0
        %v577 = vand.u32 %v311, 4294901760
        %578 = vmatpush1.msra.mxu0 %v577
        %579 = vmatprep.subr.mxu0 0.0
        %v580 = vand.u32 %v312, 4294901760
        %581 = vmatpush1.msra.mxu0 %v580
        %582 = vmatprep.subr.mxu0 0.0
        %v583 = vand.u32 %v313, 4294901760
        %584 = vmatpush1.msra.mxu0 %v583
        %585 = vmatprep.subr.mxu0 0.0
        %v586 = vand.u32 %v314, 4294901760
        %587 = vmatpush1.msra.mxu0 %v586
        %588 = vmatprep.subr.mxu0 0.0
        %v589 = vand.u32 %v315, 4294901760
        %590 = vmatpush1.msra.mxu0 %v589
        %591 = vmatprep.subr.mxu0 0.0
        %v592 = vand.u32 %v316, 4294901760
        %593 = vmatpush1.msra.mxu0 %v592
        %594 = vmatprep.subr.mxu0 0.0
        %v595 = vand.u32 %v317, 4294901760
        %596 = vmatpush1.msra.mxu0 %v595
        %597 = vmatprep.subr.mxu0 0.0
        %v598 = vand.u32 %v318, 4294901760
        %599 = vmatpush1.msra.mxu0 %v598
        %600 = vmatprep.subr.mxu0 0.0
        %v601 = vand.u32 %v319, 4294901760
        %602 = vmatpush1.msra.mxu0 %v601
        %603 = vmatprep.subr.mxu0 0.0
        %v604 = vand.u32 %v320, 4294901760
        %605 = vmatpush1.msra.mxu0 %v604
        %606 = vmatprep.subr.mxu0 0.0
        %v607 = vand.u32 %v321, 4294901760
        %608 = vmatpush1.msra.mxu0 %v607
        %609 = vmatprep.subr.mxu0 0.0
        %v610 = vand.u32 %v322, 4294901760
        %611 = vmatpush1.msra.mxu0 %v610
        %612 = vmatprep.subr.mxu0 0.0
        %v613 = vand.u32 %v323, 4294901760
        %614 = vmatpush1.msra.mxu0 %v613
        %615 = vmatprep.subr.mxu0 0.0
        %v616 = vand.u32 %v324, 4294901760
        %617 = vmatpush1.msra.mxu0 %v616
        %618 = vmatprep.subr.mxu0 0.0
        %v619 = vand.u32 %v325, 4294901760
        %620 = vmatpush1.msra.mxu0 %v619
        %621 = vmatprep.subr.mxu0 0.0
        %622 = vmatpush1.msra.mxu0 0.0
        %623 = vmatprep.subr.mxu0 0.0
        %624 = vmatpush1.msra.mxu0 0.0
        %625 = vmatprep.subr.mxu0 0.0
        %626 = vmatpush1.msra.mxu0 0.0
        %627 = vmatprep.subr.mxu0 0.0
        %628 = vmatpush1.msra.mxu0 0.0
        %629 = vmatprep.subr.mxu0 0.0
        %630 = vmatpush1.msra.mxu0 0.0
        %631 = vmatprep.subr.mxu0 0.0
        %632 = vmatpush1.msra.mxu0 0.0
        %633 = vmatprep.subr.mxu0 0.0
        %634 = vmatpush1.msra.mxu0 0.0
        %635 = vmatprep.subr.mxu0 0.0
        %636 = vmatpush1.msra.mxu0 0.0
        %637 = vmatprep.subr.mxu0 0.0
        %638 = vmatpush1.msra.mxu0 0.0
        %639 = vmatprep.subr.mxu0 0.0
        %640 = vmatpush1.msra.mxu0 0.0
        %641 = vmatprep.subr.mxu0 0.0
        %642 = vmatpush1.msra.mxu0 0.0
        %643 = vmatprep.subr.mxu0 0.0
        %644 = vmatpush1.msra.mxu0 0.0
        %645 = vmatprep.subr.mxu0 0.0
        %646 = vmatpush1.msra.mxu0 0.0
        %647 = vmatprep.subr.mxu0 0.0
        %648 = vmatpush1.msra.mxu0 0.0
        %649 = vmatprep.subr.mxu0 0.0
        %650 = vmatpush1.msra.mxu0 0.0
        %651 = vmatprep.subr.mxu0 0.0
        %652 = vmatpush1.msra.mxu0 0.0
        %653 = vmatprep.mubr.f32.mxu0 0.0
        %v654 = vand.u32 %v552, 4294901760
        %v655 = vsub.f32 %v552, %v654
        %v656 = vand.u32 %v655, 4294901760
        %v657 = vsub.f32 %v655, %v656
        %v658 = vand.u32 %v657, 4294901760
        %659 = vmatmul.mubr.f32.gmra.mrb[0].mxu0 %v658
        %v660 = vpop.f32.mrb[0].mxu0
        %v661 = vadd.f32 0.0, %v660
        %v662 = vpop.f32.mrb[0].mxu0
        %663 = vmatprep.mubr.f32.mxu0 0.0
        %v664 = vand.u32 %v554, 4294901760
        %v665 = vsub.f32 %v554, %v664
        %v666 = vand.u32 %v665, 4294901760
        %v667 = vsub.f32 %v665, %v666
        %v668 = vand.u32 %v667, 4294901760
        %669 = vmatmul.mubr.f32.gmra.mrb[0].mxu0 %v668
        %v670 = vpop.f32.mrb[0].mxu0
        %v671 = vadd.f32 0.0, %v670
        %v672 = vpop.f32.mrb[0].mxu0
        %673 = vmatprep.mubr.f32.mxu0 0.0
        %v674 = vand.u32 %v556, 4294901760
        %v675 = vsub.f32 %v556, %v674
        %v676 = vand.u32 %v675, 4294901760
        %v677 = vsub.f32 %v675, %v676
        %v678 = vand.u32 %v677, 4294901760
        %679 = vmatmul.mubr.f32.gmra.mrb[0].mxu0 %v678
        %v680 = vpop.f32.mrb[0].mxu0
        %v681 = vadd.f32 0.0, %v680
        %v682 = vpop.f32.mrb[0].mxu0
        %683 = vmatprep.mubr.f32.mxu0 0.0
        %v684 = vand.u32 %v558, 4294901760
        %v685 = vsub.f32 %v558, %v684
        %v686 = vand.u32 %v685, 4294901760
        %v687 = vsub.f32 %v685, %v686
        %v688 = vand.u32 %v687, 4294901760
        %689 = vmatmul.mubr.f32.gmra.mrb[0].mxu0 %v688
        %v690 = vpop.f32.mrb[0].mxu0
        %v691 = vadd.f32 0.0, %v690
        %v692 = vpop.f32.mrb[0].mxu0
        %693 = vmatprep.mubr.f32.mxu0 0.0
        %v694 = vand.u32 %v560, 4294901760
        %v695 = vsub.f32 %v560, %v694
        %v696 = vand.u32 %v695, 4294901760
        %v697 = vsub.f32 %v695, %v696
        %v698 = vand.u32 %v697, 4294901760
        %699 = vmatmul.mubr.f32.gmra.mrb[0].mxu0 %v698
        %v700 = vpop.f32.mrb[0].mxu0
        %v701 = vadd.f32 0.0, %v700
        %v702 = vpop.f32.mrb[0].mxu0
        %703 = vmatprep.mubr.f32.mxu0 0.0
        %v704 = vand.u32 %v562, 4294901760
        %v705 = vsub.f32 %v562, %v704
        %v706 = vand.u32 %v705, 4294901760
        %v707 = vsub.f32 %v705, %v706
        %v708 = vand.u32 %v707, 4294901760
        %709 = vmatmul.mubr.f32.gmra.mrb[0].mxu0 %v708
        %v710 = vpop.f32.mrb[0].mxu0
        %v711 = vadd.f32 0.0, %v710
        %v712 = vpop.f32.mrb[0].mxu0
        %713 = vmatprep.mubr.f32.mxu0 0.0
        %v714 = vand.u32 %v564, 4294901760
        %v715 = vsub.f32 %v564, %v714
        %v716 = vand.u32 %v715, 4294901760
        %v717 = vsub.f32 %v715, %v716
        %v718 = vand.u32 %v717, 4294901760
        %719 = vmatmul.mubr.f32.gmra.mrb[0].mxu0 %v718
        %v720 = vpop.f32.mrb[0].mxu0
        %v721 = vadd.f32 0.0, %v720
        %v722 = vpop.f32.mrb[0].mxu0
        %723 = vmatprep.mubr.f32.mxu0 0.0
        %v724 = vand.u32 %v566, 4294901760
        %v725 = vsub.f32 %v566, %v724
        %v726 = vand.u32 %v725, 4294901760
        %v727 = vsub.f32 %v725, %v726
        %v728 = vand.u32 %v727, 4294901760
        %729 = vmatmul.mubr.f32.gmra.mrb[0].mxu0 %v728
        %v730 = vpop.f32.mrb[0].mxu0
        %v731 = vadd.f32 0.0, %v730
        %v732 = vpop.f32.mrb[0].mxu0
        %733 = vmatprep.mubr.f32.mxu0 0.0
        %v734 = vand.u32 %v568, 4294901760
        %v735 = vsub.f32 %v568, %v734
        %v736 = vand.u32 %v735, 4294901760
        %v737 = vsub.f32 %v735, %v736
        %v738 = vand.u32 %v737, 4294901760
        %739 = vmatmul.mubr.f32.gmra.mrb[0].mxu0 %v738
        %v740 = vpop.f32.mrb[0].mxu0
        %v741 = vadd.f32 0.0, %v740
        %v742 = vpop.f32.mrb[0].mxu0
        %743 = vmatprep.mubr.f32.mxu0 0.0
        %v744 = vand.u32 %v570, 4294901760
        %v745 = vsub.f32 %v570, %v744
        %v746 = vand.u32 %v745, 4294901760
        %v747 = vsub.f32 %v745, %v746
        %v748 = vand.u32 %v747, 4294901760
        %749 = vmatmul.mubr.f32.gmra.mrb[0].mxu0 %v748
        %v750 = vpop.f32.mrb[0].mxu0
        %v751 = vadd.f32 0.0, %v750
        %v752 = vpop.f32.mrb[0].mxu0
        %753 = vmatprep.mubr.f32.mxu0 0.0
        %v754 = vand.u32 %v572, 4294901760
        %v755 = vsub.f32 %v572, %v754
        %v756 = vand.u32 %v755, 4294901760
        %v757 = vsub.f32 %v755, %v756
        %v758 = vand.u32 %v757, 4294901760
        %759 = vmatmul.mubr.f32.gmra.mrb[0].mxu0 %v758
        %v760 = vpop.f32.mrb[0].mxu0
        %v761 = vadd.f32 0.0, %v760
        %v762 = vpop.f32.mrb[0].mxu0
        %763 = vdwg.mxu0
        %764 = vmatprep.subr.mxu0 0.0
        %v765 = vand.u32 %v310, 4294901760
        %v766 = vsub.f32 %v310, %v765
        %v767 = vand.u32 %v766, 4294901760
        %v768 = vsub.f32 %v766, %v767
        %v769 = vand.u32 %v768, 4294901760
        %770 = vmatpush1.msra.mxu0 %v769
        %771 = vmatprep.subr.mxu0 0.0
        %v772 = vand.u32 %v311, 4294901760
        %v773 = vsub.f32 %v311, %v772
        %v774 = vand.u32 %v773, 4294901760
        %v775 = vsub.f32 %v773, %v774
        %v776 = vand.u32 %v775, 4294901760
        %777 = vmatpush1.msra.mxu0 %v776
        %778 = vmatprep.subr.mxu0 0.0
        %v779 = vand.u32 %v312, 4294901760
        %v780 = vsub.f32 %v312, %v779
        %v781 = vand.u32 %v780, 4294901760
        %v782 = vsub.f32 %v780, %v781
        %v783 = vand.u32 %v782, 4294901760
        %784 = vmatpush1.msra.mxu0 %v783
        %785 = vmatprep.subr.mxu0 0.0
        %v786 = vand.u32 %v313, 4294901760
        %v787 = vsub.f32 %v313, %v786
        %v788 = vand.u32 %v787, 4294901760
        %v789 = vsub.f32 %v787, %v788
        %v790 = vand.u32 %v789, 4294901760
        %791 = vmatpush1.msra.mxu0 %v790
        %792 = vmatprep.subr.mxu0 0.0
        %v793 = vand.u32 %v314, 4294901760
        %v794 = vsub.f32 %v314, %v793
        %v795 = vand.u32 %v794, 4294901760
        %v796 = vsub.f32 %v794, %v795
        %v797 = vand.u32 %v796, 4294901760
        %798 = vmatpush1.msra.mxu0 %v797
        %799 = vmatprep.subr.mxu0 0.0
        %v800 = vand.u32 %v315, 4294901760
        %v801 = vsub.f32 %v315, %v800
        %v802 = vand.u32 %v801, 4294901760
        %v803 = vsub.f32 %v801, %v802
        %v804 = vand.u32 %v803, 4294901760
        %805 = vmatpush1.msra.mxu0 %v804
        %806 = vmatprep.subr.mxu0 0.0
        %v807 = vand.u32 %v316, 4294901760
        %v808 = vsub.f32 %v316, %v807
        %v809 = vand.u32 %v808, 4294901760
        %v810 = vsub.f32 %v808, %v809
        %v811 = vand.u32 %v810, 4294901760
        %812 = vmatpush1.msra.mxu0 %v811
        %813 = vmatprep.subr.mxu0 0.0
        %v814 = vand.u32 %v317, 4294901760
        %v815 = vsub.f32 %v317, %v814
        %v816 = vand.u32 %v815, 4294901760
        %v817 = vsub.f32 %v815, %v816
        %v818 = vand.u32 %v817, 4294901760
        %819 = vmatpush1.msra.mxu0 %v818
        %820 = vmatprep.subr.mxu0 0.0
        %v821 = vand.u32 %v318, 4294901760
        %v822 = vsub.f32 %v318, %v821
        %v823 = vand.u32 %v822, 4294901760
        %v824 = vsub.f32 %v822, %v823
        %v825 = vand.u32 %v824, 4294901760
        %826 = vmatpush1.msra.mxu0 %v825
        %827 = vmatprep.subr.mxu0 0.0
        %v828 = vand.u32 %v319, 4294901760
        %v829 = vsub.f32 %v319, %v828
        %v830 = vand.u32 %v829, 4294901760
        %v831 = vsub.f32 %v829, %v830
        %v832 = vand.u32 %v831, 4294901760
        %833 = vmatpush1.msra.mxu0 %v832
        %834 = vmatprep.subr.mxu0 0.0
        %v835 = vand.u32 %v320, 4294901760
        %v836 = vsub.f32 %v320, %v835
        %v837 = vand.u32 %v836, 4294901760
        %v838 = vsub.f32 %v836, %v837
        %v839 = vand.u32 %v838, 4294901760
        %840 = vmatpush1.msra.mxu0 %v839
        %841 = vmatprep.subr.mxu0 0.0
        %v842 = vand.u32 %v321, 4294901760
        %v843 = vsub.f32 %v321, %v842
        %v844 = vand.u32 %v843, 4294901760
        %v845 = vsub.f32 %v843, %v844
        %v846 = vand.u32 %v845, 4294901760
        %847 = vmatpush1.msra.mxu0 %v846
        %848 = vmatprep.subr.mxu0 0.0
        %v849 = vand.u32 %v322, 4294901760
        %v850 = vsub.f32 %v322, %v849
        %v851 = vand.u32 %v850, 4294901760
        %v852 = vsub.f32 %v850, %v851
        %v853 = vand.u32 %v852, 4294901760
        %854 = vmatpush1.msra.mxu0 %v853
        %855 = vmatprep.subr.mxu0 0.0
        %v856 = vand.u32 %v323, 4294901760
        %v857 = vsub.f32 %v323, %v856
        %v858 = vand.u32 %v857, 4294901760
        %v859 = vsub.f32 %v857, %v858
        %v860 = vand.u32 %v859, 4294901760
        %861 = vmatpush1.msra.mxu0 %v860
        %862 = vmatprep.subr.mxu0 0.0
        %v863 = vand.u32 %v324, 4294901760
        %v864 = vsub.f32 %v324, %v863
        %v865 = vand.u32 %v864, 4294901760
        %v866 = vsub.f32 %v864, %v865
        %v867 = vand.u32 %v866, 4294901760
        %868 = vmatpush1.msra.mxu0 %v867
        %869 = vmatprep.subr.mxu0 0.0
        %v870 = vand.u32 %v325, 4294901760
        %v871 = vsub.f32 %v325, %v870
        %v872 = vand.u32 %v871, 4294901760
        %v873 = vsub.f32 %v871, %v872
        %v874 = vand.u32 %v873, 4294901760
        %875 = vmatpush1.msra.mxu0 %v874
        %876 = vmatprep.subr.mxu0 0.0
        %877 = vmatpush1.msra.mxu0 0.0
        %878 = vmatprep.subr.mxu0 0.0
        %879 = vmatpush1.msra.mxu0 0.0
        %880 = vmatprep.subr.mxu0 0.0
        %881 = vmatpush1.msra.mxu0 0.0
        %882 = vmatprep.subr.mxu0 0.0
        %883 = vmatpush1.msra.mxu0 0.0
        %884 = vmatprep.subr.mxu0 0.0
        %885 = vmatpush1.msra.mxu0 0.0
        %886 = vmatprep.subr.mxu0 0.0
        %887 = vmatpush1.msra.mxu0 0.0
        %888 = vmatprep.subr.mxu0 0.0
        %889 = vmatpush1.msra.mxu0 0.0
        %890 = vmatprep.subr.mxu0 0.0
        %891 = vmatpush1.msra.mxu0 0.0
        %892 = vmatprep.subr.mxu0 0.0
        %893 = vmatpush1.msra.mxu0 0.0
        %894 = vmatprep.subr.mxu0 0.0
        %895 = vmatpush1.msra.mxu0 0.0
        %896 = vmatprep.subr.mxu0 0.0
        %897 = vmatpush1.msra.mxu0 0.0
        %898 = vmatprep.subr.mxu0 0.0
        %899 = vmatpush1.msra.mxu0 0.0
        %900 = vmatprep.subr.mxu0 0.0
        %901 = vmatpush1.msra.mxu0 0.0
        %902 = vmatprep.subr.mxu0 0.0
        %903 = vmatpush1.msra.mxu0 0.0
        %904 = vmatprep.subr.mxu0 0.0
        %905 = vmatpush1.msra.mxu0 0.0
        %906 = vmatprep.subr.mxu0 0.0
        %907 = vmatpush1.msra.mxu0 0.0
        %908 = vmatprep.mubr.f32.mxu0 0.0
        %v909 = vand.u32 %v552, 4294901760
        %910 = vmatmul.mubr.f32.gmra.mrb[0].mxu0 %v909
        %v911 = vpop.f32.mrb[0].mxu0
        %v912 = vadd.f32 %v661, %v911
        %v913 = vpop.f32.mrb[0].mxu0
        %914 = vmatprep.mubr.f32.mxu0 0.0
        %v915 = vand.u32 %v554, 4294901760
        %916 = vmatmul.mubr.f32.gmra.mrb[0].mxu0 %v915
        %v917 = vpop.f32.mrb[0].mxu0
        %v918 = vadd.f32 %v671, %v917
        %v919 = vpop.f32.mrb[0].mxu0
        %920 = vmatprep.mubr.f32.mxu0 0.0
        %v921 = vand.u32 %v556, 4294901760
        %922 = vmatmul.mubr.f32.gmra.mrb[0].mxu0 %v921
        %v923 = vpop.f32.mrb[0].mxu0
        %v924 = vadd.f32 %v681, %v923
        %v925 = vpop.f32.mrb[0].mxu0
        %926 = vmatprep.mubr.f32.mxu0 0.0
        %v927 = vand.u32 %v558, 4294901760
        %928 = vmatmul.mubr.f32.gmra.mrb[0].mxu0 %v927
        %v929 = vpop.f32.mrb[0].mxu0
        %v930 = vadd.f32 %v691, %v929
        %v931 = vpop.f32.mrb[0].mxu0
        %932 = vmatprep.mubr.f32.mxu0 0.0
        %v933 = vand.u32 %v560, 4294901760
        %934 = vmatmul.mubr.f32.gmra.mrb[0].mxu0 %v933
        %v935 = vpop.f32.mrb[0].mxu0
        %v936 = vadd.f32 %v701, %v935
        %v937 = vpop.f32.mrb[0].mxu0
        %938 = vmatprep.mubr.f32.mxu0 0.0
        %v939 = vand.u32 %v562, 4294901760
        %940 = vmatmul.mubr.f32.gmra.mrb[0].mxu0 %v939
        %v941 = vpop.f32.mrb[0].mxu0
        %v942 = vadd.f32 %v711, %v941
        %v943 = vpop.f32.mrb[0].mxu0
        %944 = vmatprep.mubr.f32.mxu0 0.0
        %v945 = vand.u32 %v564, 4294901760
        %946 = vmatmul.mubr.f32.gmra.mrb[0].mxu0 %v945
        %v947 = vpop.f32.mrb[0].mxu0
        %v948 = vadd.f32 %v721, %v947
        %v949 = vpop.f32.mrb[0].mxu0
        %950 = vmatprep.mubr.f32.mxu0 0.0
        %v951 = vand.u32 %v566, 4294901760
        %952 = vmatmul.mubr.f32.gmra.mrb[0].mxu0 %v951
        %v953 = vpop.f32.mrb[0].mxu0
        %v954 = vadd.f32 %v731, %v953
        %v955 = vpop.f32.mrb[0].mxu0
        %956 = vmatprep.mubr.f32.mxu0 0.0
        %v957 = vand.u32 %v568, 4294901760
        %958 = vmatmul.mubr.f32.gmra.mrb[0].mxu0 %v957
        %v959 = vpop.f32.mrb[0].mxu0
        %v960 = vadd.f32 %v741, %v959
        %v961 = vpop.f32.mrb[0].mxu0
        %962 = vmatprep.mubr.f32.mxu0 0.0
        %v963 = vand.u32 %v570, 4294901760
        %964 = vmatmul.mubr.f32.gmra.mrb[0].mxu0 %v963
        %v965 = vpop.f32.mrb[0].mxu0
        %v966 = vadd.f32 %v751, %v965
        %v967 = vpop.f32.mrb[0].mxu0
        %968 = vmatprep.mubr.f32.mxu0 0.0
        %v969 = vand.u32 %v572, 4294901760
        %970 = vmatmul.mubr.f32.gmra.mrb[0].mxu0 %v969
        %v971 = vpop.f32.mrb[0].mxu0
        %v972 = vadd.f32 %v761, %v971
        %v973 = vpop.f32.mrb[0].mxu0
        %974 = vdwg.mxu0
        %975 = vmatprep.subr.mxu0 0.0
        %v976 = vand.u32 %v310, 4294901760
        %v977 = vsub.f32 %v310, %v976
        %978 = vmatpush1.msra.mxu0 %v977
        %979 = vmatprep.subr.mxu0 0.0
        %v980 = vand.u32 %v311, 4294901760
        %v981 = vsub.f32 %v311, %v980
        %982 = vmatpush1.msra.mxu0 %v981
        %983 = vmatprep.subr.mxu0 0.0
        %v984 = vand.u32 %v312, 4294901760
        %v985 = vsub.f32 %v312, %v984
        %986 = vmatpush1.msra.mxu0 %v985
        %987 = vmatprep.subr.mxu0 0.0
        %v988 = vand.u32 %v313, 4294901760
        %v989 = vsub.f32 %v313, %v988
        %990 = vmatpush1.msra.mxu0 %v989
        %991 = vmatprep.subr.mxu0 0.0
        %v992 = vand.u32 %v314, 4294901760
        %v993 = vsub.f32 %v314, %v992
        %994 = vmatpush1.msra.mxu0 %v993
        %995 = vmatprep.subr.mxu0 0.0
        %v996 = vand.u32 %v315, 4294901760
        %v997 = vsub.f32 %v315, %v996
        %998 = vmatpush1.msra.mxu0 %v997
        %999 = vmatprep.subr.mxu0 0.0
        %v1000 = vand.u32 %v316, 4294901760
        %v1001 = vsub.f32 %v316, %v1000
        %1002 = vmatpush1.msra.mxu0 %v1001
        %1003 = vmatprep.subr.mxu0 0.0
        %v1004 = vand.u32 %v317, 4294901760
        %v1005 = vsub.f32 %v317, %v1004
        %1006 = vmatpush1.msra.mxu0 %v1005
        %1007 = vmatprep.subr.mxu0 0.0
        %v1008 = vand.u32 %v318, 4294901760
        %v1009 = vsub.f32 %v318, %v1008
        %1010 = vmatpush1.msra.mxu0 %v1009
        %1011 = vmatprep.subr.mxu0 0.0
        %v1012 = vand.u32 %v319, 4294901760
        %v1013 = vsub.f32 %v319, %v1012
        %1014 = vmatpush1.msra.mxu0 %v1013
        %1015 = vmatprep.subr.mxu0 0.0
        %v1016 = vand.u32 %v320, 4294901760
        %v1017 = vsub.f32 %v320, %v1016
        %1018 = vmatpush1.msra.mxu0 %v1017
        %1019 = vmatprep.subr.mxu0 0.0
        %v1020 = vand.u32 %v321, 4294901760
        %v1021 = vsub.f32 %v321, %v1020
        %1022 = vmatpush1.msra.mxu0 %v1021
        %1023 = vmatprep.subr.mxu0 0.0
        %v1024 = vand.u32 %v322, 4294901760
        %v1025 = vsub.f32 %v322, %v1024
        %1026 = vmatpush1.msra.mxu0 %v1025
        %1027 = vmatprep.subr.mxu0 0.0
        %v1028 = vand.u32 %v323, 4294901760
        %v1029 = vsub.f32 %v323, %v1028
        %1030 = vmatpush1.msra.mxu0 %v1029
        %1031 = vmatprep.subr.mxu0 0.0
        %v1032 = vand.u32 %v324, 4294901760
        %v1033 = vsub.f32 %v324, %v1032
        %1034 = vmatpush1.msra.mxu0 %v1033
        %1035 = vmatprep.subr.mxu0 0.0
        %v1036 = vand.u32 %v325, 4294901760
        %v1037 = vsub.f32 %v325, %v1036
        %1038 = vmatpush1.msra.mxu0 %v1037
        %1039 = vmatprep.subr.mxu0 0.0
        %1040 = vmatpush1.msra.mxu0 0.0
        %1041 = vmatprep.subr.mxu0 0.0
        %1042 = vmatpush1.msra.mxu0 0.0
        %1043 = vmatprep.subr.mxu0 0.0
        %1044 = vmatpush1.msra.mxu0 0.0
        %1045 = vmatprep.subr.mxu0 0.0
        %1046 = vmatpush1.msra.mxu0 0.0
        %1047 = vmatprep.subr.mxu0 0.0
        %1048 = vmatpush1.msra.mxu0 0.0
        %1049 = vmatprep.subr.mxu0 0.0
        %1050 = vmatpush1.msra.mxu0 0.0
        %1051 = vmatprep.subr.mxu0 0.0
        %1052 = vmatpush1.msra.mxu0 0.0
        %1053 = vmatprep.subr.mxu0 0.0
        %1054 = vmatpush1.msra.mxu0 0.0
        %1055 = vmatprep.subr.mxu0 0.0
        %1056 = vmatpush1.msra.mxu0 0.0
        %1057 = vmatprep.subr.mxu0 0.0
        %1058 = vmatpush1.msra.mxu0 0.0
        %1059 = vmatprep.subr.mxu0 0.0
        %1060 = vmatpush1.msra.mxu0 0.0
        %1061 = vmatprep.subr.mxu0 0.0
        %1062 = vmatpush1.msra.mxu0 0.0
        %1063 = vmatprep.subr.mxu0 0.0
        %1064 = vmatpush1.msra.mxu0 0.0
        %1065 = vmatprep.subr.mxu0 0.0
        %1066 = vmatpush1.msra.mxu0 0.0
        %1067 = vmatprep.subr.mxu0 0.0
        %1068 = vmatpush1.msra.mxu0 0.0
        %1069 = vmatprep.subr.mxu0 0.0
        %1070 = vmatpush1.msra.mxu0 0.0
        %1071 = vmatprep.mubr.f32.mxu0 0.0
        %v1072 = vand.u32 %v552, 4294901760
        %v1073 = vsub.f32 %v552, %v1072
        %1074 = vmatmul.mubr.f32.gmra.mrb[0].mxu0 %v1073
        %v1075 = vpop.f32.mrb[0].mxu0
        %v1076 = vadd.f32 %v912, %v1075
        %v1077 = vpop.f32.mrb[0].mxu0
        %1078 = vmatprep.mubr.f32.mxu0 0.0
        %v1079 = vand.u32 %v554, 4294901760
        %v1080 = vsub.f32 %v554, %v1079
        %1081 = vmatmul.mubr.f32.gmra.mrb[0].mxu0 %v1080
        %v1082 = vpop.f32.mrb[0].mxu0
        %v1083 = vadd.f32 %v918, %v1082
        %v1084 = vpop.f32.mrb[0].mxu0
        %1085 = vmatprep.mubr.f32.mxu0 0.0
        %v1086 = vand.u32 %v556, 4294901760
        %v1087 = vsub.f32 %v556, %v1086
        %1088 = vmatmul.mubr.f32.gmra.mrb[0].mxu0 %v1087
        %v1089 = vpop.f32.mrb[0].mxu0
        %v1090 = vadd.f32 %v924, %v1089
        %v1091 = vpop.f32.mrb[0].mxu0
        %1092 = vmatprep.mubr.f32.mxu0 0.0
        %v1093 = vand.u32 %v558, 4294901760
        %v1094 = vsub.f32 %v558, %v1093
        %1095 = vmatmul.mubr.f32.gmra.mrb[0].mxu0 %v1094
        %v1096 = vpop.f32.mrb[0].mxu0
        %v1097 = vadd.f32 %v930, %v1096
        %v1098 = vpop.f32.mrb[0].mxu0
        %1099 = vmatprep.mubr.f32.mxu0 0.0
        %v1100 = vand.u32 %v560, 4294901760
        %v1101 = vsub.f32 %v560, %v1100
        %1102 = vmatmul.mubr.f32.gmra.mrb[0].mxu0 %v1101
        %v1103 = vpop.f32.mrb[0].mxu0
        %v1104 = vadd.f32 %v936, %v1103
        %v1105 = vpop.f32.mrb[0].mxu0
        %1106 = vmatprep.mubr.f32.mxu0 0.0
        %v1107 = vand.u32 %v562, 4294901760
        %v1108 = vsub.f32 %v562, %v1107
        %1109 = vmatmul.mubr.f32.gmra.mrb[0].mxu0 %v1108
        %v1110 = vpop.f32.mrb[0].mxu0
        %v1111 = vadd.f32 %v942, %v1110
        %v1112 = vpop.f32.mrb[0].mxu0
        %1113 = vmatprep.mubr.f32.mxu0 0.0
        %v1114 = vand.u32 %v564, 4294901760
        %v1115 = vsub.f32 %v564, %v1114
        %1116 = vmatmul.mubr.f32.gmra.mrb[0].mxu0 %v1115
        %v1117 = vpop.f32.mrb[0].mxu0
        %v1118 = vadd.f32 %v948, %v1117
        %v1119 = vpop.f32.mrb[0].mxu0
        %1120 = vmatprep.mubr.f32.mxu0 0.0
        %v1121 = vand.u32 %v566, 4294901760
        %v1122 = vsub.f32 %v566, %v1121
        %1123 = vmatmul.mubr.f32.gmra.mrb[0].mxu0 %v1122
        %v1124 = vpop.f32.mrb[0].mxu0
        %v1125 = vadd.f32 %v954, %v1124
        %v1126 = vpop.f32.mrb[0].mxu0
        %1127 = vmatprep.mubr.f32.mxu0 0.0
        %v1128 = vand.u32 %v568, 4294901760
        %v1129 = vsub.f32 %v568, %v1128
        %1130 = vmatmul.mubr.f32.gmra.mrb[0].mxu0 %v1129
        %v1131 = vpop.f32.mrb[0].mxu0
        %v1132 = vadd.f32 %v960, %v1131
        %v1133 = vpop.f32.mrb[0].mxu0
        %1134 = vmatprep.mubr.f32.mxu0 0.0
        %v1135 = vand.u32 %v570, 4294901760
        %v1136 = vsub.f32 %v570, %v1135
        %1137 = vmatmul.mubr.f32.gmra.mrb[0].mxu0 %v1136
        %v1138 = vpop.f32.mrb[0].mxu0
        %v1139 = vadd.f32 %v966, %v1138
        %v1140 = vpop.f32.mrb[0].mxu0
        %1141 = vmatprep.mubr.f32.mxu0 0.0
        %v1142 = vand.u32 %v572, 4294901760
        %v1143 = vsub.f32 %v572, %v1142
        %1144 = vmatmul.mubr.f32.gmra.mrb[0].mxu0 %v1143
        %v1145 = vpop.f32.mrb[0].mxu0
        %v1146 = vadd.f32 %v972, %v1145
        %v1147 = vpop.f32.mrb[0].mxu0
        %1148 = vdwg.mxu0
        %1149 = vmatprep.subr.mxu0 0.0
        %v1150 = vand.u32 %v310, 4294901760
        %1151 = vmatpush1.msra.mxu0 %v1150
        %1152 = vmatprep.subr.mxu0 0.0
        %v1153 = vand.u32 %v311, 4294901760
        %1154 = vmatpush1.msra.mxu0 %v1153
        %1155 = vmatprep.subr.mxu0 0.0
        %v1156 = vand.u32 %v312, 4294901760
        %1157 = vmatpush1.msra.mxu0 %v1156
        %1158 = vmatprep.subr.mxu0 0.0
        %v1159 = vand.u32 %v313, 4294901760
        %1160 = vmatpush1.msra.mxu0 %v1159
        %1161 = vmatprep.subr.mxu0 0.0
        %v1162 = vand.u32 %v314, 4294901760
        %1163 = vmatpush1.msra.mxu0 %v1162
        %1164 = vmatprep.subr.mxu0 0.0
        %v1165 = vand.u32 %v315, 4294901760
        %1166 = vmatpush1.msra.mxu0 %v1165
        %1167 = vmatprep.subr.mxu0 0.0
        %v1168 = vand.u32 %v316, 4294901760
        %1169 = vmatpush1.msra.mxu0 %v1168
        %1170 = vmatprep.subr.mxu0 0.0
        %v1171 = vand.u32 %v317, 4294901760
        %1172 = vmatpush1.msra.mxu0 %v1171
        %1173 = vmatprep.subr.mxu0 0.0
        %v1174 = vand.u32 %v318, 4294901760
        %1175 = vmatpush1.msra.mxu0 %v1174
        %1176 = vmatprep.subr.mxu0 0.0
        %v1177 = vand.u32 %v319, 4294901760
        %1178 = vmatpush1.msra.mxu0 %v1177
        %1179 = vmatprep.subr.mxu0 0.0
        %v1180 = vand.u32 %v320, 4294901760
        %1181 = vmatpush1.msra.mxu0 %v1180
        %1182 = vmatprep.subr.mxu0 0.0
        %v1183 = vand.u32 %v321, 4294901760
        %1184 = vmatpush1.msra.mxu0 %v1183
        %1185 = vmatprep.subr.mxu0 0.0
        %v1186 = vand.u32 %v322, 4294901760
        %1187 = vmatpush1.msra.mxu0 %v1186
        %1188 = vmatprep.subr.mxu0 0.0
        %v1189 = vand.u32 %v323, 4294901760
        %1190 = vmatpush1.msra.mxu0 %v1189
        %1191 = vmatprep.subr.mxu0 0.0
        %v1192 = vand.u32 %v324, 4294901760
        %1193 = vmatpush1.msra.mxu0 %v1192
        %1194 = vmatprep.subr.mxu0 0.0
        %v1195 = vand.u32 %v325, 4294901760
        %1196 = vmatpush1.msra.mxu0 %v1195
        %1197 = vmatprep.subr.mxu0 0.0
        %1198 = vmatpush1.msra.mxu0 0.0
        %1199 = vmatprep.subr.mxu0 0.0
        %1200 = vmatpush1.msra.mxu0 0.0
        %1201 = vmatprep.subr.mxu0 0.0
        %1202 = vmatpush1.msra.mxu0 0.0
        %1203 = vmatprep.subr.mxu0 0.0
        %1204 = vmatpush1.msra.mxu0 0.0
        %1205 = vmatprep.subr.mxu0 0.0
        %1206 = vmatpush1.msra.mxu0 0.0
        %1207 = vmatprep.subr.mxu0 0.0
        %1208 = vmatpush1.msra.mxu0 0.0
        %1209 = vmatprep.subr.mxu0 0.0
        %1210 = vmatpush1.msra.mxu0 0.0
        %1211 = vmatprep.subr.mxu0 0.0
        %1212 = vmatpush1.msra.mxu0 0.0
        %1213 = vmatprep.subr.mxu0 0.0
        %1214 = vmatpush1.msra.mxu0 0.0
        %1215 = vmatprep.subr.mxu0 0.0
        %1216 = vmatpush1.msra.mxu0 0.0
        %1217 = vmatprep.subr.mxu0 0.0
        %1218 = vmatpush1.msra.mxu0 0.0
        %1219 = vmatprep.subr.mxu0 0.0
        %1220 = vmatpush1.msra.mxu0 0.0
        %1221 = vmatprep.subr.mxu0 0.0
        %1222 = vmatpush1.msra.mxu0 0.0
        %1223 = vmatprep.subr.mxu0 0.0
        %1224 = vmatpush1.msra.mxu0 0.0
        %1225 = vmatprep.subr.mxu0 0.0
        %1226 = vmatpush1.msra.mxu0 0.0
        %1227 = vmatprep.subr.mxu0 0.0
        %1228 = vmatpush1.msra.mxu0 0.0
        %1229 = vmatprep.mubr.f32.mxu0 0.0
        %v1230 = vand.u32 %v552, 4294901760
        %v1231 = vsub.f32 %v552, %v1230
        %v1232 = vand.u32 %v1231, 4294901760
        %1233 = vmatmul.mubr.f32.gmra.mrb[0].mxu0 %v1232
        %v1234 = vpop.f32.mrb[0].mxu0
        %v1235 = vadd.f32 %v1076, %v1234
        %v1236 = vpop.f32.mrb[0].mxu0
        %1237 = vmatprep.mubr.f32.mxu0 0.0
        %v1238 = vand.u32 %v554, 4294901760
        %v1239 = vsub.f32 %v554, %v1238
        %v1240 = vand.u32 %v1239, 4294901760
        %1241 = vmatmul.mubr.f32.gmra.mrb[0].mxu0 %v1240
        %v1242 = vpop.f32.mrb[0].mxu0
        %v1243 = vadd.f32 %v1083, %v1242
        %v1244 = vpop.f32.mrb[0].mxu0
        %1245 = vmatprep.mubr.f32.mxu0 0.0
        %v1246 = vand.u32 %v556, 4294901760
        %v1247 = vsub.f32 %v556, %v1246
        %v1248 = vand.u32 %v1247, 4294901760
        %1249 = vmatmul.mubr.f32.gmra.mrb[0].mxu0 %v1248
        %v1250 = vpop.f32.mrb[0].mxu0
        %v1251 = vadd.f32 %v1090, %v1250
        %v1252 = vpop.f32.mrb[0].mxu0
        %1253 = vmatprep.mubr.f32.mxu0 0.0
        %v1254 = vand.u32 %v558, 4294901760
        %v1255 = vsub.f32 %v558, %v1254
        %v1256 = vand.u32 %v1255, 4294901760
        %1257 = vmatmul.mubr.f32.gmra.mrb[0].mxu0 %v1256
        %v1258 = vpop.f32.mrb[0].mxu0
        %v1259 = vadd.f32 %v1097, %v1258
        %v1260 = vpop.f32.mrb[0].mxu0
        %1261 = vmatprep.mubr.f32.mxu0 0.0
        %v1262 = vand.u32 %v560, 4294901760
        %v1263 = vsub.f32 %v560, %v1262
        %v1264 = vand.u32 %v1263, 4294901760
        %1265 = vmatmul.mubr.f32.gmra.mrb[0].mxu0 %v1264
        %v1266 = vpop.f32.mrb[0].mxu0
        %v1267 = vadd.f32 %v1104, %v1266
        %v1268 = vpop.f32.mrb[0].mxu0
        %1269 = vmatprep.mubr.f32.mxu0 0.0
        %v1270 = vand.u32 %v562, 4294901760
        %v1271 = vsub.f32 %v562, %v1270
        %v1272 = vand.u32 %v1271, 4294901760
        %1273 = vmatmul.mubr.f32.gmra.mrb[0].mxu0 %v1272
        %v1274 = vpop.f32.mrb[0].mxu0
        %v1275 = vadd.f32 %v1111, %v1274
        %v1276 = vpop.f32.mrb[0].mxu0
        %1277 = vmatprep.mubr.f32.mxu0 0.0
        %v1278 = vand.u32 %v564, 4294901760
        %v1279 = vsub.f32 %v564, %v1278
        %v1280 = vand.u32 %v1279, 4294901760
        %1281 = vmatmul.mubr.f32.gmra.mrb[0].mxu0 %v1280
        %v1282 = vpop.f32.mrb[0].mxu0
        %v1283 = vadd.f32 %v1118, %v1282
        %v1284 = vpop.f32.mrb[0].mxu0
        %1285 = vmatprep.mubr.f32.mxu0 0.0
        %v1286 = vand.u32 %v566, 4294901760
        %v1287 = vsub.f32 %v566, %v1286
        %v1288 = vand.u32 %v1287, 4294901760
        %1289 = vmatmul.mubr.f32.gmra.mrb[0].mxu0 %v1288
        %v1290 = vpop.f32.mrb[0].mxu0
        %v1291 = vadd.f32 %v1125, %v1290
        %v1292 = vpop.f32.mrb[0].mxu0
        %1293 = vmatprep.mubr.f32.mxu0 0.0
        %v1294 = vand.u32 %v568, 4294901760
        %v1295 = vsub.f32 %v568, %v1294
        %v1296 = vand.u32 %v1295, 4294901760
        %1297 = vmatmul.mubr.f32.gmra.mrb[0].mxu0 %v1296
        %v1298 = vpop.f32.mrb[0].mxu0
        %v1299 = vadd.f32 %v1132, %v1298
        %v1300 = vpop.f32.mrb[0].mxu0
        %1301 = vmatprep.mubr.f32.mxu0 0.0
        %v1302 = vand.u32 %v570, 4294901760
        %v1303 = vsub.f32 %v570, %v1302
        %v1304 = vand.u32 %v1303, 4294901760
        %1305 = vmatmul.mubr.f32.gmra.mrb[0].mxu0 %v1304
        %v1306 = vpop.f32.mrb[0].mxu0
        %v1307 = vadd.f32 %v1139, %v1306
        %v1308 = vpop.f32.mrb[0].mxu0
        %1309 = vmatprep.mubr.f32.mxu0 0.0
        %v1310 = vand.u32 %v572, 4294901760
        %v1311 = vsub.f32 %v572, %v1310
        %v1312 = vand.u32 %v1311, 4294901760
        %1313 = vmatmul.mubr.f32.gmra.mrb[0].mxu0 %v1312
        %v1314 = vpop.f32.mrb[0].mxu0
        %v1315 = vadd.f32 %v1146, %v1314
        %v1316 = vpop.f32.mrb[0].mxu0
        %1317 = vdwg.mxu0
        %1318 = vmatprep.subr.mxu0 0.0
        %v1319 = vand.u32 %v310, 4294901760
        %v1320 = vsub.f32 %v310, %v1319
        %v1321 = vand.u32 %v1320, 4294901760
        %1322 = vmatpush1.msra.mxu0 %v1321
        %1323 = vmatprep.subr.mxu0 0.0
        %v1324 = vand.u32 %v311, 4294901760
        %v1325 = vsub.f32 %v311, %v1324
        %v1326 = vand.u32 %v1325, 4294901760
        %1327 = vmatpush1.msra.mxu0 %v1326
        %1328 = vmatprep.subr.mxu0 0.0
        %v1329 = vand.u32 %v312, 4294901760
        %v1330 = vsub.f32 %v312, %v1329
        %v1331 = vand.u32 %v1330, 4294901760
        %1332 = vmatpush1.msra.mxu0 %v1331
        %1333 = vmatprep.subr.mxu0 0.0
        %v1334 = vand.u32 %v313, 4294901760
        %v1335 = vsub.f32 %v313, %v1334
        %v1336 = vand.u32 %v1335, 4294901760
        %1337 = vmatpush1.msra.mxu0 %v1336
        %1338 = vmatprep.subr.mxu0 0.0
        %v1339 = vand.u32 %v314, 4294901760
        %v1340 = vsub.f32 %v314, %v1339
        %v1341 = vand.u32 %v1340, 4294901760
        %1342 = vmatpush1.msra.mxu0 %v1341
        %1343 = vmatprep.subr.mxu0 0.0
        %v1344 = vand.u32 %v315, 4294901760
        %v1345 = vsub.f32 %v315, %v1344
        %v1346 = vand.u32 %v1345, 4294901760
        %1347 = vmatpush1.msra.mxu0 %v1346
        %1348 = vmatprep.subr.mxu0 0.0
        %v1349 = vand.u32 %v316, 4294901760
        %v1350 = vsub.f32 %v316, %v1349
        %v1351 = vand.u32 %v1350, 4294901760
        %1352 = vmatpush1.msra.mxu0 %v1351
        %1353 = vmatprep.subr.mxu0 0.0
        %v1354 = vand.u32 %v317, 4294901760
        %v1355 = vsub.f32 %v317, %v1354
        %v1356 = vand.u32 %v1355, 4294901760
        %1357 = vmatpush1.msra.mxu0 %v1356
        %1358 = vmatprep.subr.mxu0 0.0
        %v1359 = vand.u32 %v318, 4294901760
        %v1360 = vsub.f32 %v318, %v1359
        %v1361 = vand.u32 %v1360, 4294901760
        %1362 = vmatpush1.msra.mxu0 %v1361
        %1363 = vmatprep.subr.mxu0 0.0
        %v1364 = vand.u32 %v319, 4294901760
        %v1365 = vsub.f32 %v319, %v1364
        %v1366 = vand.u32 %v1365, 4294901760
        %1367 = vmatpush1.msra.mxu0 %v1366
        %1368 = vmatprep.subr.mxu0 0.0
        %v1369 = vand.u32 %v320, 4294901760
        %v1370 = vsub.f32 %v320, %v1369
        %v1371 = vand.u32 %v1370, 4294901760
        %1372 = vmatpush1.msra.mxu0 %v1371
        %1373 = vmatprep.subr.mxu0 0.0
        %v1374 = vand.u32 %v321, 4294901760
        %v1375 = vsub.f32 %v321, %v1374
        %v1376 = vand.u32 %v1375, 4294901760
        %1377 = vmatpush1.msra.mxu0 %v1376
        %1378 = vmatprep.subr.mxu0 0.0
        %v1379 = vand.u32 %v322, 4294901760
        %v1380 = vsub.f32 %v322, %v1379
        %v1381 = vand.u32 %v1380, 4294901760
        %1382 = vmatpush1.msra.mxu0 %v1381
        %1383 = vmatprep.subr.mxu0 0.0
        %v1384 = vand.u32 %v323, 4294901760
        %v1385 = vsub.f32 %v323, %v1384
        %v1386 = vand.u32 %v1385, 4294901760
        %1387 = vmatpush1.msra.mxu0 %v1386
        %1388 = vmatprep.subr.mxu0 0.0
        %v1389 = vand.u32 %v324, 4294901760
        %v1390 = vsub.f32 %v324, %v1389
        %v1391 = vand.u32 %v1390, 4294901760
        %1392 = vmatpush1.msra.mxu0 %v1391
        %1393 = vmatprep.subr.mxu0 0.0
        %v1394 = vand.u32 %v325, 4294901760
        %v1395 = vsub.f32 %v325, %v1394
        %v1396 = vand.u32 %v1395, 4294901760
        %1397 = vmatpush1.msra.mxu0 %v1396
        %1398 = vmatprep.subr.mxu0 0.0
        %1399 = vmatpush1.msra.mxu0 0.0
        %1400 = vmatprep.subr.mxu0 0.0
        %1401 = vmatpush1.msra.mxu0 0.0
        %1402 = vmatprep.subr.mxu0 0.0
        %1403 = vmatpush1.msra.mxu0 0.0
        %1404 = vmatprep.subr.mxu0 0.0
        %1405 = vmatpush1.msra.mxu0 0.0
        %1406 = vmatprep.subr.mxu0 0.0
        %1407 = vmatpush1.msra.mxu0 0.0
        %1408 = vmatprep.subr.mxu0 0.0
        %1409 = vmatpush1.msra.mxu0 0.0
        %1410 = vmatprep.subr.mxu0 0.0
        %1411 = vmatpush1.msra.mxu0 0.0
        %1412 = vmatprep.subr.mxu0 0.0
        %1413 = vmatpush1.msra.mxu0 0.0
        %1414 = vmatprep.subr.mxu0 0.0
        %1415 = vmatpush1.msra.mxu0 0.0
        %1416 = vmatprep.subr.mxu0 0.0
        %1417 = vmatpush1.msra.mxu0 0.0
        %1418 = vmatprep.subr.mxu0 0.0
        %1419 = vmatpush1.msra.mxu0 0.0
        %1420 = vmatprep.subr.mxu0 0.0
        %1421 = vmatpush1.msra.mxu0 0.0
        %1422 = vmatprep.subr.mxu0 0.0
        %1423 = vmatpush1.msra.mxu0 0.0
        %1424 = vmatprep.subr.mxu0 0.0
        %1425 = vmatpush1.msra.mxu0 0.0
        %1426 = vmatprep.subr.mxu0 0.0
        %1427 = vmatpush1.msra.mxu0 0.0
        %1428 = vmatprep.subr.mxu0 0.0
        %1429 = vmatpush1.msra.mxu0 0.0
        %1430 = vmatprep.mubr.f32.mxu0 0.0
        %v1431 = vand.u32 %v552, 4294901760
        %1432 = vmatmul.mubr.f32.gmra.mrb[0].mxu0 %v1431
        %v1433 = vpop.f32.mrb[0].mxu0
        %v1434 = vadd.f32 %v1235, %v1433
        %v1435 = vpop.f32.mrb[0].mxu0
        %1436 = vmatprep.mubr.f32.mxu0 0.0
        %v1437 = vand.u32 %v554, 4294901760
        %1438 = vmatmul.mubr.f32.gmra.mrb[0].mxu0 %v1437
        %v1439 = vpop.f32.mrb[0].mxu0
        %v1440 = vadd.f32 %v1243, %v1439
        %v1441 = vpop.f32.mrb[0].mxu0
        %1442 = vmatprep.mubr.f32.mxu0 0.0
        %v1443 = vand.u32 %v556, 4294901760
        %1444 = vmatmul.mubr.f32.gmra.mrb[0].mxu0 %v1443
        %v1445 = vpop.f32.mrb[0].mxu0
        %v1446 = vadd.f32 %v1251, %v1445
        %v1447 = vpop.f32.mrb[0].mxu0
        %1448 = vmatprep.mubr.f32.mxu0 0.0
        %v1449 = vand.u32 %v558, 4294901760
        %1450 = vmatmul.mubr.f32.gmra.mrb[0].mxu0 %v1449
        %v1451 = vpop.f32.mrb[0].mxu0
        %v1452 = vadd.f32 %v1259, %v1451
        %v1453 = vpop.f32.mrb[0].mxu0
        %1454 = vmatprep.mubr.f32.mxu0 0.0
        %v1455 = vand.u32 %v560, 4294901760
        %1456 = vmatmul.mubr.f32.gmra.mrb[0].mxu0 %v1455
        %v1457 = vpop.f32.mrb[0].mxu0
        %v1458 = vadd.f32 %v1267, %v1457
        %v1459 = vpop.f32.mrb[0].mxu0
        %1460 = vmatprep.mubr.f32.mxu0 0.0
        %v1461 = vand.u32 %v562, 4294901760
        %1462 = vmatmul.mubr.f32.gmra.mrb[0].mxu0 %v1461
        %v1463 = vpop.f32.mrb[0].mxu0
        %v1464 = vadd.f32 %v1275, %v1463
        %v1465 = vpop.f32.mrb[0].mxu0
        %1466 = vmatprep.mubr.f32.mxu0 0.0
        %v1467 = vand.u32 %v564, 4294901760
        %1468 = vmatmul.mubr.f32.gmra.mrb[0].mxu0 %v1467
        %v1469 = vpop.f32.mrb[0].mxu0
        %v1470 = vadd.f32 %v1283, %v1469
        %v1471 = vpop.f32.mrb[0].mxu0
        %1472 = vmatprep.mubr.f32.mxu0 0.0
        %v1473 = vand.u32 %v566, 4294901760
        %1474 = vmatmul.mubr.f32.gmra.mrb[0].mxu0 %v1473
        %v1475 = vpop.f32.mrb[0].mxu0
        %v1476 = vadd.f32 %v1291, %v1475
        %v1477 = vpop.f32.mrb[0].mxu0
        %1478 = vmatprep.mubr.f32.mxu0 0.0
        %v1479 = vand.u32 %v568, 4294901760
        %1480 = vmatmul.mubr.f32.gmra.mrb[0].mxu0 %v1479
        %v1481 = vpop.f32.mrb[0].mxu0
        %v1482 = vadd.f32 %v1299, %v1481
        %v1483 = vpop.f32.mrb[0].mxu0
        %1484 = vmatprep.mubr.f32.mxu0 0.0
        %v1485 = vand.u32 %v570, 4294901760
        %1486 = vmatmul.mubr.f32.gmra.mrb[0].mxu0 %v1485
        %v1487 = vpop.f32.mrb[0].mxu0
        %v1488 = vadd.f32 %v1307, %v1487
        %v1489 = vpop.f32.mrb[0].mxu0
        %1490 = vmatprep.mubr.f32.mxu0 0.0
        %v1491 = vand.u32 %v572, 4294901760
        %1492 = vmatmul.mubr.f32.gmra.mrb[0].mxu0 %v1491
        %v1493 = vpop.f32.mrb[0].mxu0
        %v1494 = vadd.f32 %v1315, %v1493
        %v1495 = vpop.f32.mrb[0].mxu0
        %1496 = vdwg.mxu0
        %1497 = vmatprep.subr.mxu0 0.0
        %v1498 = vand.u32 %v310, 4294901760
        %1499 = vmatpush1.msra.mxu0 %v1498
        %1500 = vmatprep.subr.mxu0 0.0
        %v1501 = vand.u32 %v311, 4294901760
        %1502 = vmatpush1.msra.mxu0 %v1501
        %1503 = vmatprep.subr.mxu0 0.0
        %v1504 = vand.u32 %v312, 4294901760
        %1505 = vmatpush1.msra.mxu0 %v1504
        %1506 = vmatprep.subr.mxu0 0.0
        %v1507 = vand.u32 %v313, 4294901760
        %1508 = vmatpush1.msra.mxu0 %v1507
        %1509 = vmatprep.subr.mxu0 0.0
        %v1510 = vand.u32 %v314, 4294901760
        %1511 = vmatpush1.msra.mxu0 %v1510
        %1512 = vmatprep.subr.mxu0 0.0
        %v1513 = vand.u32 %v315, 4294901760
        %1514 = vmatpush1.msra.mxu0 %v1513
        %1515 = vmatprep.subr.mxu0 0.0
        %v1516 = vand.u32 %v316, 4294901760
        %1517 = vmatpush1.msra.mxu0 %v1516
        %1518 = vmatprep.subr.mxu0 0.0
        %v1519 = vand.u32 %v317, 4294901760
        %1520 = vmatpush1.msra.mxu0 %v1519
        %1521 = vmatprep.subr.mxu0 0.0
        %v1522 = vand.u32 %v318, 4294901760
        %1523 = vmatpush1.msra.mxu0 %v1522
        %1524 = vmatprep.subr.mxu0 0.0
        %v1525 = vand.u32 %v319, 4294901760
        %1526 = vmatpush1.msra.mxu0 %v1525
        %1527 = vmatprep.subr.mxu0 0.0
        %v1528 = vand.u32 %v320, 4294901760
        %1529 = vmatpush1.msra.mxu0 %v1528
        %1530 = vmatprep.subr.mxu0 0.0
        %v1531 = vand.u32 %v321, 4294901760
        %1532 = vmatpush1.msra.mxu0 %v1531
        %1533 = vmatprep.subr.mxu0 0.0
        %v1534 = vand.u32 %v322, 4294901760
        %1535 = vmatpush1.msra.mxu0 %v1534
        %1536 = vmatprep.subr.mxu0 0.0
        %v1537 = vand.u32 %v323, 4294901760
        %1538 = vmatpush1.msra.mxu0 %v1537
        %1539 = vmatprep.subr.mxu0 0.0
        %v1540 = vand.u32 %v324, 4294901760
        %1541 = vmatpush1.msra.mxu0 %v1540
        %1542 = vmatprep.subr.mxu0 0.0
        %v1543 = vand.u32 %v325, 4294901760
        %1544 = vmatpush1.msra.mxu0 %v1543
        %1545 = vmatprep.subr.mxu0 0.0
        %1546 = vmatpush1.msra.mxu0 0.0
        %1547 = vmatprep.subr.mxu0 0.0
        %1548 = vmatpush1.msra.mxu0 0.0
        %1549 = vmatprep.subr.mxu0 0.0
        %1550 = vmatpush1.msra.mxu0 0.0
        %1551 = vmatprep.subr.mxu0 0.0
        %1552 = vmatpush1.msra.mxu0 0.0
        %1553 = vmatprep.subr.mxu0 0.0
        %1554 = vmatpush1.msra.mxu0 0.0
        %1555 = vmatprep.subr.mxu0 0.0
        %1556 = vmatpush1.msra.mxu0 0.0
        %1557 = vmatprep.subr.mxu0 0.0
        %1558 = vmatpush1.msra.mxu0 0.0
        %1559 = vmatprep.subr.mxu0 0.0
        %1560 = vmatpush1.msra.mxu0 0.0
        %1561 = vmatprep.subr.mxu0 0.0
        %1562 = vmatpush1.msra.mxu0 0.0
        %1563 = vmatprep.subr.mxu0 0.0
        %1564 = vmatpush1.msra.mxu0 0.0
        %1565 = vmatprep.subr.mxu0 0.0
        %1566 = vmatpush1.msra.mxu0 0.0
        %1567 = vmatprep.subr.mxu0 0.0
        %1568 = vmatpush1.msra.mxu0 0.0
        %1569 = vmatprep.subr.mxu0 0.0
        %1570 = vmatpush1.msra.mxu0 0.0
        %1571 = vmatprep.subr.mxu0 0.0
        %1572 = vmatpush1.msra.mxu0 0.0
        %1573 = vmatprep.subr.mxu0 0.0
        %1574 = vmatpush1.msra.mxu0 0.0
        %1575 = vmatprep.subr.mxu0 0.0
        %1576 = vmatpush1.msra.mxu0 0.0
        %1577 = vmatprep.mubr.f32.mxu0 0.0
        %v1578 = vand.u32 %v552, 4294901760
        %1579 = vmatmul.mubr.f32.gmra.mrb[0].mxu0 %v1578
        %v1580 = vpop.f32.mrb[0].mxu0
        %v1581 = vadd.f32 %v1434, %v1580
        %v1582 = vpop.f32.mrb[0].mxu0
        %1583 = vmatprep.mubr.f32.mxu0 0.0
        %v1584 = vand.u32 %v554, 4294901760
        %1585 = vmatmul.mubr.f32.gmra.mrb[0].mxu0 %v1584
        %v1586 = vpop.f32.mrb[0].mxu0
        %v1587 = vadd.f32 %v1440, %v1586
        %v1588 = vpop.f32.mrb[0].mxu0
        %1589 = vmatprep.mubr.f32.mxu0 0.0
        %v1590 = vand.u32 %v556, 4294901760
        %1591 = vmatmul.mubr.f32.gmra.mrb[0].mxu0 %v1590
        %v1592 = vpop.f32.mrb[0].mxu0
        %v1593 = vadd.f32 %v1446, %v1592
        %v1594 = vpop.f32.mrb[0].mxu0
        %1595 = vmatprep.mubr.f32.mxu0 0.0
        %v1596 = vand.u32 %v558, 4294901760
        %1597 = vmatmul.mubr.f32.gmra.mrb[0].mxu0 %v1596
        %v1598 = vpop.f32.mrb[0].mxu0
        %v1599 = vadd.f32 %v1452, %v1598
        %v1600 = vpop.f32.mrb[0].mxu0
        %1601 = vmatprep.mubr.f32.mxu0 0.0
        %v1602 = vand.u32 %v560, 4294901760
        %1603 = vmatmul.mubr.f32.gmra.mrb[0].mxu0 %v1602
        %v1604 = vpop.f32.mrb[0].mxu0
        %v1605 = vadd.f32 %v1458, %v1604
        %v1606 = vpop.f32.mrb[0].mxu0
        %1607 = vmatprep.mubr.f32.mxu0 0.0
        %v1608 = vand.u32 %v562, 4294901760
        %1609 = vmatmul.mubr.f32.gmra.mrb[0].mxu0 %v1608
        %v1610 = vpop.f32.mrb[0].mxu0
        %v1611 = vadd.f32 %v1464, %v1610
        %v1612 = vpop.f32.mrb[0].mxu0
        %1613 = vmatprep.mubr.f32.mxu0 0.0
        %v1614 = vand.u32 %v564, 4294901760
        %1615 = vmatmul.mubr.f32.gmra.mrb[0].mxu0 %v1614
        %v1616 = vpop.f32.mrb[0].mxu0
        %v1617 = vadd.f32 %v1470, %v1616
        %v1618 = vpop.f32.mrb[0].mxu0
        %1619 = vmatprep.mubr.f32.mxu0 0.0
        %v1620 = vand.u32 %v566, 4294901760
        %1621 = vmatmul.mubr.f32.gmra.mrb[0].mxu0 %v1620
        %v1622 = vpop.f32.mrb[0].mxu0
        %v1623 = vadd.f32 %v1476, %v1622
        %v1624 = vpop.f32.mrb[0].mxu0
        %1625 = vmatprep.mubr.f32.mxu0 0.0
        %v1626 = vand.u32 %v568, 4294901760
        %1627 = vmatmul.mubr.f32.gmra.mrb[0].mxu0 %v1626
        %v1628 = vpop.f32.mrb[0].mxu0
        %v1629 = vadd.f32 %v1482, %v1628
        %v1630 = vpop.f32.mrb[0].mxu0
        %1631 = vmatprep.mubr.f32.mxu0 0.0
        %v1632 = vand.u32 %v570, 4294901760
        %1633 = vmatmul.mubr.f32.gmra.mrb[0].mxu0 %v1632
        %v1634 = vpop.f32.mrb[0].mxu0
        %v1635 = vadd.f32 %v1488, %v1634
        %v1636 = vpop.f32.mrb[0].mxu0
        %1637 = vmatprep.mubr.f32.mxu0 0.0
        %v1638 = vand.u32 %v572, 4294901760
        %1639 = vmatmul.mubr.f32.gmra.mrb[0].mxu0 %v1638
        %v1640 = vpop.f32.mrb[0].mxu0
        %v1641 = vadd.f32 %v1494, %v1640
        %v1642 = vpop.f32.mrb[0].mxu0
        %1643 = vdwg.mxu0
        %v1644 = vsel %vm507, %v288, 0.0
        %v1645 = vsel %vm508, %v289, 0.0
        %v1646 = vsel %vm509, %v290, 0.0
        %v1647 = vsel %vm510, %v291, 0.0
        %v1648 = vsel %vm511, %v292, 0.0
        %v1649 = vsel %vm512, %v293, 0.0
        %v1650 = vsel %vm513, %v294, 0.0
        %v1651 = vsel %vm514, %v295, 0.0
        %v1652 = vsel %vm515, %v296, 0.0
        %v1653 = vsel %vm516, %v297, 0.0
        %v1654 = vsel %vm517, %v298, 0.0
        %1655 = vmatprep.subr.mxu0 0.0
        %v1656 = vand.u32 %v310, 4294901760
        %1657 = vmatpush1.msra.mxu0 %v1656
        %1658 = vmatprep.subr.mxu0 0.0
        %v1659 = vand.u32 %v311, 4294901760
        %1660 = vmatpush1.msra.mxu0 %v1659
        %1661 = vmatprep.subr.mxu0 0.0
        %v1662 = vand.u32 %v312, 4294901760
        %1663 = vmatpush1.msra.mxu0 %v1662
        %1664 = vmatprep.subr.mxu0 0.0
        %v1665 = vand.u32 %v313, 4294901760
        %1666 = vmatpush1.msra.mxu0 %v1665
        %1667 = vmatprep.subr.mxu0 0.0
        %v1668 = vand.u32 %v314, 4294901760
        %1669 = vmatpush1.msra.mxu0 %v1668
        %1670 = vmatprep.subr.mxu0 0.0
        %v1671 = vand.u32 %v315, 4294901760
        %1672 = vmatpush1.msra.mxu0 %v1671
        %1673 = vmatprep.subr.mxu0 0.0
        %v1674 = vand.u32 %v316, 4294901760
        %1675 = vmatpush1.msra.mxu0 %v1674
        %1676 = vmatprep.subr.mxu0 0.0
        %v1677 = vand.u32 %v317, 4294901760
        %1678 = vmatpush1.msra.mxu0 %v1677
        %1679 = vmatprep.subr.mxu0 0.0
        %v1680 = vand.u32 %v318, 4294901760
        %1681 = vmatpush1.msra.mxu0 %v1680
        %1682 = vmatprep.subr.mxu0 0.0
        %v1683 = vand.u32 %v319, 4294901760
        %1684 = vmatpush1.msra.mxu0 %v1683
        %1685 = vmatprep.subr.mxu0 0.0
        %v1686 = vand.u32 %v320, 4294901760
        %1687 = vmatpush1.msra.mxu0 %v1686
        %1688 = vmatprep.subr.mxu0 0.0
        %v1689 = vand.u32 %v321, 4294901760
        %1690 = vmatpush1.msra.mxu0 %v1689
        %1691 = vmatprep.subr.mxu0 0.0
        %v1692 = vand.u32 %v322, 4294901760
        %1693 = vmatpush1.msra.mxu0 %v1692
        %1694 = vmatprep.subr.mxu0 0.0
        %v1695 = vand.u32 %v323, 4294901760
        %1696 = vmatpush1.msra.mxu0 %v1695
        %1697 = vmatprep.subr.mxu0 0.0
        %v1698 = vand.u32 %v324, 4294901760
        %1699 = vmatpush1.msra.mxu0 %v1698
        %1700 = vmatprep.subr.mxu0 0.0
        %v1701 = vand.u32 %v325, 4294901760
        %1702 = vmatpush1.msra.mxu0 %v1701
        %1703 = vmatprep.subr.mxu0 0.0
        %1704 = vmatpush1.msra.mxu0 0.0
        %1705 = vmatprep.subr.mxu0 0.0
        %1706 = vmatpush1.msra.mxu0 0.0
        %1707 = vmatprep.subr.mxu0 0.0
        %1708 = vmatpush1.msra.mxu0 0.0
        %1709 = vmatprep.subr.mxu0 0.0
        %1710 = vmatpush1.msra.mxu0 0.0
        %1711 = vmatprep.subr.mxu0 0.0
        %1712 = vmatpush1.msra.mxu0 0.0
        %1713 = vmatprep.subr.mxu0 0.0
        %1714 = vmatpush1.msra.mxu0 0.0
        %1715 = vmatprep.subr.mxu0 0.0
        %1716 = vmatpush1.msra.mxu0 0.0
        %1717 = vmatprep.subr.mxu0 0.0
        %1718 = vmatpush1.msra.mxu0 0.0
        %1719 = vmatprep.subr.mxu0 0.0
        %1720 = vmatpush1.msra.mxu0 0.0
        %1721 = vmatprep.subr.mxu0 0.0
        %1722 = vmatpush1.msra.mxu0 0.0
        %1723 = vmatprep.subr.mxu0 0.0
        %1724 = vmatpush1.msra.mxu0 0.0
        %1725 = vmatprep.subr.mxu0 0.0
        %1726 = vmatpush1.msra.mxu0 0.0
        %1727 = vmatprep.subr.mxu0 0.0
        %1728 = vmatpush1.msra.mxu0 0.0
        %1729 = vmatprep.subr.mxu0 0.0
        %1730 = vmatpush1.msra.mxu0 0.0
        %1731 = vmatprep.subr.mxu0 0.0
        %1732 = vmatpush1.msra.mxu0 0.0
        %1733 = vmatprep.subr.mxu0 0.0
        %1734 = vmatpush1.msra.mxu0 0.0
        %1735 = vmatprep.mubr.f32.mxu0 0.0
        %v1736 = vand.u32 %v1644, 4294901760
        %v1737 = vsub.f32 %v1644, %v1736
        %v1738 = vand.u32 %v1737, 4294901760
        %v1739 = vsub.f32 %v1737, %v1738
        %v1740 = vand.u32 %v1739, 4294901760
        %1741 = vmatmul.mubr.f32.gmra.mrb[0].mxu0 %v1740
        %v1742 = vpop.f32.mrb[0].mxu0
        %v1743 = vadd.f32 0.0, %v1742
        %v1744 = vpop.f32.mrb[0].mxu0
        %1745 = vmatprep.mubr.f32.mxu0 0.0
        %v1746 = vand.u32 %v1645, 4294901760
        %v1747 = vsub.f32 %v1645, %v1746
        %v1748 = vand.u32 %v1747, 4294901760
        %v1749 = vsub.f32 %v1747, %v1748
        %v1750 = vand.u32 %v1749, 4294901760
        %1751 = vmatmul.mubr.f32.gmra.mrb[0].mxu0 %v1750
        %v1752 = vpop.f32.mrb[0].mxu0
        %v1753 = vadd.f32 0.0, %v1752
        %v1754 = vpop.f32.mrb[0].mxu0
        %1755 = vmatprep.mubr.f32.mxu0 0.0
        %v1756 = vand.u32 %v1646, 4294901760
        %v1757 = vsub.f32 %v1646, %v1756
        %v1758 = vand.u32 %v1757, 4294901760
        %v1759 = vsub.f32 %v1757, %v1758
        %v1760 = vand.u32 %v1759, 4294901760
        %1761 = vmatmul.mubr.f32.gmra.mrb[0].mxu0 %v1760
        %v1762 = vpop.f32.mrb[0].mxu0
        %v1763 = vadd.f32 0.0, %v1762
        %v1764 = vpop.f32.mrb[0].mxu0
        %1765 = vmatprep.mubr.f32.mxu0 0.0
        %v1766 = vand.u32 %v1647, 4294901760
        %v1767 = vsub.f32 %v1647, %v1766
        %v1768 = vand.u32 %v1767, 4294901760
        %v1769 = vsub.f32 %v1767, %v1768
        %v1770 = vand.u32 %v1769, 4294901760
        %1771 = vmatmul.mubr.f32.gmra.mrb[0].mxu0 %v1770
        %v1772 = vpop.f32.mrb[0].mxu0
        %v1773 = vadd.f32 0.0, %v1772
        %v1774 = vpop.f32.mrb[0].mxu0
        %1775 = vmatprep.mubr.f32.mxu0 0.0
        %v1776 = vand.u32 %v1648, 4294901760
        %v1777 = vsub.f32 %v1648, %v1776
        %v1778 = vand.u32 %v1777, 4294901760
        %v1779 = vsub.f32 %v1777, %v1778
        %v1780 = vand.u32 %v1779, 4294901760
        %1781 = vmatmul.mubr.f32.gmra.mrb[0].mxu0 %v1780
        %v1782 = vpop.f32.mrb[0].mxu0
        %v1783 = vadd.f32 0.0, %v1782
        %v1784 = vpop.f32.mrb[0].mxu0
        %1785 = vmatprep.mubr.f32.mxu0 0.0
        %v1786 = vand.u32 %v1649, 4294901760
        %v1787 = vsub.f32 %v1649, %v1786
        %v1788 = vand.u32 %v1787, 4294901760
        %v1789 = vsub.f32 %v1787, %v1788
        %v1790 = vand.u32 %v1789, 4294901760
        %1791 = vmatmul.mubr.f32.gmra.mrb[0].mxu0 %v1790
        %v1792 = vpop.f32.mrb[0].mxu0
        %v1793 = vadd.f32 0.0, %v1792
        %v1794 = vpop.f32.mrb[0].mxu0
        %1795 = vmatprep.mubr.f32.mxu0 0.0
        %v1796 = vand.u32 %v1650, 4294901760
        %v1797 = vsub.f32 %v1650, %v1796
        %v1798 = vand.u32 %v1797, 4294901760
        %v1799 = vsub.f32 %v1797, %v1798
        %v1800 = vand.u32 %v1799, 4294901760
        %1801 = vmatmul.mubr.f32.gmra.mrb[0].mxu0 %v1800
        %v1802 = vpop.f32.mrb[0].mxu0
        %v1803 = vadd.f32 0.0, %v1802
        %v1804 = vpop.f32.mrb[0].mxu0
        %1805 = vmatprep.mubr.f32.mxu0 0.0
        %v1806 = vand.u32 %v1651, 4294901760
        %v1807 = vsub.f32 %v1651, %v1806
        %v1808 = vand.u32 %v1807, 4294901760
        %v1809 = vsub.f32 %v1807, %v1808
        %v1810 = vand.u32 %v1809, 4294901760
        %1811 = vmatmul.mubr.f32.gmra.mrb[0].mxu0 %v1810
        %v1812 = vpop.f32.mrb[0].mxu0
        %v1813 = vadd.f32 0.0, %v1812
        %v1814 = vpop.f32.mrb[0].mxu0
        %1815 = vmatprep.mubr.f32.mxu0 0.0
        %v1816 = vand.u32 %v1652, 4294901760
        %v1817 = vsub.f32 %v1652, %v1816
        %v1818 = vand.u32 %v1817, 4294901760
        %v1819 = vsub.f32 %v1817, %v1818
        %v1820 = vand.u32 %v1819, 4294901760
        %1821 = vmatmul.mubr.f32.gmra.mrb[0].mxu0 %v1820
        %v1822 = vpop.f32.mrb[0].mxu0
        %v1823 = vadd.f32 0.0, %v1822
        %v1824 = vpop.f32.mrb[0].mxu0
        %1825 = vmatprep.mubr.f32.mxu0 0.0
        %v1826 = vand.u32 %v1653, 4294901760
        %v1827 = vsub.f32 %v1653, %v1826
        %v1828 = vand.u32 %v1827, 4294901760
        %v1829 = vsub.f32 %v1827, %v1828
        %v1830 = vand.u32 %v1829, 4294901760
        %1831 = vmatmul.mubr.f32.gmra.mrb[0].mxu0 %v1830
        %v1832 = vpop.f32.mrb[0].mxu0
        %v1833 = vadd.f32 0.0, %v1832
        %v1834 = vpop.f32.mrb[0].mxu0
        %1835 = vmatprep.mubr.f32.mxu0 0.0
        %v1836 = vand.u32 %v1654, 4294901760
        %v1837 = vsub.f32 %v1654, %v1836
        %v1838 = vand.u32 %v1837, 4294901760
        %v1839 = vsub.f32 %v1837, %v1838
        %v1840 = vand.u32 %v1839, 4294901760
        %1841 = vmatmul.mubr.f32.gmra.mrb[0].mxu0 %v1840
        %v1842 = vpop.f32.mrb[0].mxu0
        %v1843 = vadd.f32 0.0, %v1842
        %v1844 = vpop.f32.mrb[0].mxu0
        %1845 = vdwg.mxu0
        %1846 = vmatprep.subr.mxu0 0.0
        %v1847 = vand.u32 %v310, 4294901760
        %v1848 = vsub.f32 %v310, %v1847
        %v1849 = vand.u32 %v1848, 4294901760
        %v1850 = vsub.f32 %v1848, %v1849
        %v1851 = vand.u32 %v1850, 4294901760
        %1852 = vmatpush1.msra.mxu0 %v1851
        %1853 = vmatprep.subr.mxu0 0.0
        %v1854 = vand.u32 %v311, 4294901760
        %v1855 = vsub.f32 %v311, %v1854
        %v1856 = vand.u32 %v1855, 4294901760
        %v1857 = vsub.f32 %v1855, %v1856
        %v1858 = vand.u32 %v1857, 4294901760
        %1859 = vmatpush1.msra.mxu0 %v1858
        %1860 = vmatprep.subr.mxu0 0.0
        %v1861 = vand.u32 %v312, 4294901760
        %v1862 = vsub.f32 %v312, %v1861
        %v1863 = vand.u32 %v1862, 4294901760
        %v1864 = vsub.f32 %v1862, %v1863
        %v1865 = vand.u32 %v1864, 4294901760
        %1866 = vmatpush1.msra.mxu0 %v1865
        %1867 = vmatprep.subr.mxu0 0.0
        %v1868 = vand.u32 %v313, 4294901760
        %v1869 = vsub.f32 %v313, %v1868
        %v1870 = vand.u32 %v1869, 4294901760
        %v1871 = vsub.f32 %v1869, %v1870
        %v1872 = vand.u32 %v1871, 4294901760
        %1873 = vmatpush1.msra.mxu0 %v1872
        %1874 = vmatprep.subr.mxu0 0.0
        %v1875 = vand.u32 %v314, 4294901760
        %v1876 = vsub.f32 %v314, %v1875
        %v1877 = vand.u32 %v1876, 4294901760
        %v1878 = vsub.f32 %v1876, %v1877
        %v1879 = vand.u32 %v1878, 4294901760
        %1880 = vmatpush1.msra.mxu0 %v1879
        %1881 = vmatprep.subr.mxu0 0.0
        %v1882 = vand.u32 %v315, 4294901760
        %v1883 = vsub.f32 %v315, %v1882
        %v1884 = vand.u32 %v1883, 4294901760
        %v1885 = vsub.f32 %v1883, %v1884
        %v1886 = vand.u32 %v1885, 4294901760
        %1887 = vmatpush1.msra.mxu0 %v1886
        %1888 = vmatprep.subr.mxu0 0.0
        %v1889 = vand.u32 %v316, 4294901760
        %v1890 = vsub.f32 %v316, %v1889
        %v1891 = vand.u32 %v1890, 4294901760
        %v1892 = vsub.f32 %v1890, %v1891
        %v1893 = vand.u32 %v1892, 4294901760
        %1894 = vmatpush1.msra.mxu0 %v1893
        %1895 = vmatprep.subr.mxu0 0.0
        %v1896 = vand.u32 %v317, 4294901760
        %v1897 = vsub.f32 %v317, %v1896
        %v1898 = vand.u32 %v1897, 4294901760
        %v1899 = vsub.f32 %v1897, %v1898
        %v1900 = vand.u32 %v1899, 4294901760
        %1901 = vmatpush1.msra.mxu0 %v1900
        %1902 = vmatprep.subr.mxu0 0.0
        %v1903 = vand.u32 %v318, 4294901760
        %v1904 = vsub.f32 %v318, %v1903
        %v1905 = vand.u32 %v1904, 4294901760
        %v1906 = vsub.f32 %v1904, %v1905
        %v1907 = vand.u32 %v1906, 4294901760
        %1908 = vmatpush1.msra.mxu0 %v1907
        %1909 = vmatprep.subr.mxu0 0.0
        %v1910 = vand.u32 %v319, 4294901760
        %v1911 = vsub.f32 %v319, %v1910
        %v1912 = vand.u32 %v1911, 4294901760
        %v1913 = vsub.f32 %v1911, %v1912
        %v1914 = vand.u32 %v1913, 4294901760
        %1915 = vmatpush1.msra.mxu0 %v1914
        %1916 = vmatprep.subr.mxu0 0.0
        %v1917 = vand.u32 %v320, 4294901760
        %v1918 = vsub.f32 %v320, %v1917
        %v1919 = vand.u32 %v1918, 4294901760
        %v1920 = vsub.f32 %v1918, %v1919
        %v1921 = vand.u32 %v1920, 4294901760
        %1922 = vmatpush1.msra.mxu0 %v1921
        %1923 = vmatprep.subr.mxu0 0.0
        %v1924 = vand.u32 %v321, 4294901760
        %v1925 = vsub.f32 %v321, %v1924
        %v1926 = vand.u32 %v1925, 4294901760
        %v1927 = vsub.f32 %v1925, %v1926
        %v1928 = vand.u32 %v1927, 4294901760
        %1929 = vmatpush1.msra.mxu0 %v1928
        %1930 = vmatprep.subr.mxu0 0.0
        %v1931 = vand.u32 %v322, 4294901760
        %v1932 = vsub.f32 %v322, %v1931
        %v1933 = vand.u32 %v1932, 4294901760
        %v1934 = vsub.f32 %v1932, %v1933
        %v1935 = vand.u32 %v1934, 4294901760
        %1936 = vmatpush1.msra.mxu0 %v1935
        %1937 = vmatprep.subr.mxu0 0.0
        %v1938 = vand.u32 %v323, 4294901760
        %v1939 = vsub.f32 %v323, %v1938
        %v1940 = vand.u32 %v1939, 4294901760
        %v1941 = vsub.f32 %v1939, %v1940
        %v1942 = vand.u32 %v1941, 4294901760
        %1943 = vmatpush1.msra.mxu0 %v1942
        %1944 = vmatprep.subr.mxu0 0.0
        %v1945 = vand.u32 %v324, 4294901760
        %v1946 = vsub.f32 %v324, %v1945
        %v1947 = vand.u32 %v1946, 4294901760
        %v1948 = vsub.f32 %v1946, %v1947
        %v1949 = vand.u32 %v1948, 4294901760
        %1950 = vmatpush1.msra.mxu0 %v1949
        %1951 = vmatprep.subr.mxu0 0.0
        %v1952 = vand.u32 %v325, 4294901760
        %v1953 = vsub.f32 %v325, %v1952
        %v1954 = vand.u32 %v1953, 4294901760
        %v1955 = vsub.f32 %v1953, %v1954
        %v1956 = vand.u32 %v1955, 4294901760
        %1957 = vmatpush1.msra.mxu0 %v1956
        %1958 = vmatprep.subr.mxu0 0.0
        %1959 = vmatpush1.msra.mxu0 0.0
        %1960 = vmatprep.subr.mxu0 0.0
        %1961 = vmatpush1.msra.mxu0 0.0
        %1962 = vmatprep.subr.mxu0 0.0
        %1963 = vmatpush1.msra.mxu0 0.0
        %1964 = vmatprep.subr.mxu0 0.0
        %1965 = vmatpush1.msra.mxu0 0.0
        %1966 = vmatprep.subr.mxu0 0.0
        %1967 = vmatpush1.msra.mxu0 0.0
        %1968 = vmatprep.subr.mxu0 0.0
        %1969 = vmatpush1.msra.mxu0 0.0
        %1970 = vmatprep.subr.mxu0 0.0
        %1971 = vmatpush1.msra.mxu0 0.0
        %1972 = vmatprep.subr.mxu0 0.0
        %1973 = vmatpush1.msra.mxu0 0.0
        %1974 = vmatprep.subr.mxu0 0.0
        %1975 = vmatpush1.msra.mxu0 0.0
        %1976 = vmatprep.subr.mxu0 0.0
        %1977 = vmatpush1.msra.mxu0 0.0
        %1978 = vmatprep.subr.mxu0 0.0
        %1979 = vmatpush1.msra.mxu0 0.0
        %1980 = vmatprep.subr.mxu0 0.0
        %1981 = vmatpush1.msra.mxu0 0.0
        %1982 = vmatprep.subr.mxu0 0.0
        %1983 = vmatpush1.msra.mxu0 0.0
        %1984 = vmatprep.subr.mxu0 0.0
        %1985 = vmatpush1.msra.mxu0 0.0
        %1986 = vmatprep.subr.mxu0 0.0
        %1987 = vmatpush1.msra.mxu0 0.0
        %1988 = vmatprep.subr.mxu0 0.0
        %1989 = vmatpush1.msra.mxu0 0.0
        %1990 = vmatprep.mubr.f32.mxu0 0.0
        %v1991 = vand.u32 %v1644, 4294901760
        %1992 = vmatmul.mubr.f32.gmra.mrb[0].mxu0 %v1991
        %v1993 = vpop.f32.mrb[0].mxu0
        %v1994 = vadd.f32 %v1743, %v1993
        %v1995 = vpop.f32.mrb[0].mxu0
        %1996 = vmatprep.mubr.f32.mxu0 0.0
        %v1997 = vand.u32 %v1645, 4294901760
        %1998 = vmatmul.mubr.f32.gmra.mrb[0].mxu0 %v1997
        %v1999 = vpop.f32.mrb[0].mxu0
        %v2000 = vadd.f32 %v1753, %v1999
        %v2001 = vpop.f32.mrb[0].mxu0
        %2002 = vmatprep.mubr.f32.mxu0 0.0
        %v2003 = vand.u32 %v1646, 4294901760
        %2004 = vmatmul.mubr.f32.gmra.mrb[0].mxu0 %v2003
        %v2005 = vpop.f32.mrb[0].mxu0
        %v2006 = vadd.f32 %v1763, %v2005
        %v2007 = vpop.f32.mrb[0].mxu0
        %2008 = vmatprep.mubr.f32.mxu0 0.0
        %v2009 = vand.u32 %v1647, 4294901760
        %2010 = vmatmul.mubr.f32.gmra.mrb[0].mxu0 %v2009
        %v2011 = vpop.f32.mrb[0].mxu0
        %v2012 = vadd.f32 %v1773, %v2011
        %v2013 = vpop.f32.mrb[0].mxu0
        %2014 = vmatprep.mubr.f32.mxu0 0.0
        %v2015 = vand.u32 %v1648, 4294901760
        %2016 = vmatmul.mubr.f32.gmra.mrb[0].mxu0 %v2015
        %v2017 = vpop.f32.mrb[0].mxu0
        %v2018 = vadd.f32 %v1783, %v2017
        %v2019 = vpop.f32.mrb[0].mxu0
        %2020 = vmatprep.mubr.f32.mxu0 0.0
        %v2021 = vand.u32 %v1649, 4294901760
        %2022 = vmatmul.mubr.f32.gmra.mrb[0].mxu0 %v2021
        %v2023 = vpop.f32.mrb[0].mxu0
        %v2024 = vadd.f32 %v1793, %v2023
        %v2025 = vpop.f32.mrb[0].mxu0
        %2026 = vmatprep.mubr.f32.mxu0 0.0
        %v2027 = vand.u32 %v1650, 4294901760
        %2028 = vmatmul.mubr.f32.gmra.mrb[0].mxu0 %v2027
        %v2029 = vpop.f32.mrb[0].mxu0
        %v2030 = vadd.f32 %v1803, %v2029
        %v2031 = vpop.f32.mrb[0].mxu0
        %2032 = vmatprep.mubr.f32.mxu0 0.0
        %v2033 = vand.u32 %v1651, 4294901760
        %2034 = vmatmul.mubr.f32.gmra.mrb[0].mxu0 %v2033
        %v2035 = vpop.f32.mrb[0].mxu0
        %v2036 = vadd.f32 %v1813, %v2035
        %v2037 = vpop.f32.mrb[0].mxu0
        %2038 = vmatprep.mubr.f32.mxu0 0.0
        %v2039 = vand.u32 %v1652, 4294901760
        %2040 = vmatmul.mubr.f32.gmra.mrb[0].mxu0 %v2039
        %v2041 = vpop.f32.mrb[0].mxu0
        %v2042 = vadd.f32 %v1823, %v2041
        %v2043 = vpop.f32.mrb[0].mxu0
        %2044 = vmatprep.mubr.f32.mxu0 0.0
        %v2045 = vand.u32 %v1653, 4294901760
        %2046 = vmatmul.mubr.f32.gmra.mrb[0].mxu0 %v2045
        %v2047 = vpop.f32.mrb[0].mxu0
        %v2048 = vadd.f32 %v1833, %v2047
        %v2049 = vpop.f32.mrb[0].mxu0
        %2050 = vmatprep.mubr.f32.mxu0 0.0
        %v2051 = vand.u32 %v1654, 4294901760
        %2052 = vmatmul.mubr.f32.gmra.mrb[0].mxu0 %v2051
        %v2053 = vpop.f32.mrb[0].mxu0
        %v2054 = vadd.f32 %v1843, %v2053
        %v2055 = vpop.f32.mrb[0].mxu0
        %2056 = vdwg.mxu0
        %2057 = vmatprep.subr.mxu0 0.0
        %v2058 = vand.u32 %v310, 4294901760
        %v2059 = vsub.f32 %v310, %v2058
        %2060 = vmatpush1.msra.mxu0 %v2059
        %2061 = vmatprep.subr.mxu0 0.0
        %v2062 = vand.u32 %v311, 4294901760
        %v2063 = vsub.f32 %v311, %v2062
        %2064 = vmatpush1.msra.mxu0 %v2063
        %2065 = vmatprep.subr.mxu0 0.0
        %v2066 = vand.u32 %v312, 4294901760
        %v2067 = vsub.f32 %v312, %v2066
        %2068 = vmatpush1.msra.mxu0 %v2067
        %2069 = vmatprep.subr.mxu0 0.0
        %v2070 = vand.u32 %v313, 4294901760
        %v2071 = vsub.f32 %v313, %v2070
        %2072 = vmatpush1.msra.mxu0 %v2071
        %2073 = vmatprep.subr.mxu0 0.0
        %v2074 = vand.u32 %v314, 4294901760
        %v2075 = vsub.f32 %v314, %v2074
        %2076 = vmatpush1.msra.mxu0 %v2075
        %2077 = vmatprep.subr.mxu0 0.0
        %v2078 = vand.u32 %v315, 4294901760
        %v2079 = vsub.f32 %v315, %v2078
        %2080 = vmatpush1.msra.mxu0 %v2079
        %2081 = vmatprep.subr.mxu0 0.0
        %v2082 = vand.u32 %v316, 4294901760
        %v2083 = vsub.f32 %v316, %v2082
        %2084 = vmatpush1.msra.mxu0 %v2083
        %2085 = vmatprep.subr.mxu0 0.0
        %v2086 = vand.u32 %v317, 4294901760
        %v2087 = vsub.f32 %v317, %v2086
        %2088 = vmatpush1.msra.mxu0 %v2087
        %2089 = vmatprep.subr.mxu0 0.0
        %v2090 = vand.u32 %v318, 4294901760
        %v2091 = vsub.f32 %v318, %v2090
        %2092 = vmatpush1.msra.mxu0 %v2091
        %2093 = vmatprep.subr.mxu0 0.0
        %v2094 = vand.u32 %v319, 4294901760
        %v2095 = vsub.f32 %v319, %v2094
        %2096 = vmatpush1.msra.mxu0 %v2095
        %2097 = vmatprep.subr.mxu0 0.0
        %v2098 = vand.u32 %v320, 4294901760
        %v2099 = vsub.f32 %v320, %v2098
        %2100 = vmatpush1.msra.mxu0 %v2099
        %2101 = vmatprep.subr.mxu0 0.0
        %v2102 = vand.u32 %v321, 4294901760
        %v2103 = vsub.f32 %v321, %v2102
        %2104 = vmatpush1.msra.mxu0 %v2103
        %2105 = vmatprep.subr.mxu0 0.0
        %v2106 = vand.u32 %v322, 4294901760
        %v2107 = vsub.f32 %v322, %v2106
        %2108 = vmatpush1.msra.mxu0 %v2107
        %2109 = vmatprep.subr.mxu0 0.0
        %v2110 = vand.u32 %v323, 4294901760
        %v2111 = vsub.f32 %v323, %v2110
        %2112 = vmatpush1.msra.mxu0 %v2111
        %2113 = vmatprep.subr.mxu0 0.0
        %v2114 = vand.u32 %v324, 4294901760
        %v2115 = vsub.f32 %v324, %v2114
        %2116 = vmatpush1.msra.mxu0 %v2115
        %2117 = vmatprep.subr.mxu0 0.0
        %v2118 = vand.u32 %v325, 4294901760
        %v2119 = vsub.f32 %v325, %v2118
        %2120 = vmatpush1.msra.mxu0 %v2119
        %2121 = vmatprep.subr.mxu0 0.0
        %2122 = vmatpush1.msra.mxu0 0.0
        %2123 = vmatprep.subr.mxu0 0.0
        %2124 = vmatpush1.msra.mxu0 0.0
        %2125 = vmatprep.subr.mxu0 0.0
        %2126 = vmatpush1.msra.mxu0 0.0
        %2127 = vmatprep.subr.mxu0 0.0
        %2128 = vmatpush1.msra.mxu0 0.0
        %2129 = vmatprep.subr.mxu0 0.0
        %2130 = vmatpush1.msra.mxu0 0.0
        %2131 = vmatprep.subr.mxu0 0.0
        %2132 = vmatpush1.msra.mxu0 0.0
        %2133 = vmatprep.subr.mxu0 0.0
        %2134 = vmatpush1.msra.mxu0 0.0
        %2135 = vmatprep.subr.mxu0 0.0
        %2136 = vmatpush1.msra.mxu0 0.0
        %2137 = vmatprep.subr.mxu0 0.0
        %2138 = vmatpush1.msra.mxu0 0.0
        %2139 = vmatprep.subr.mxu0 0.0
        %2140 = vmatpush1.msra.mxu0 0.0
        %2141 = vmatprep.subr.mxu0 0.0
        %2142 = vmatpush1.msra.mxu0 0.0
        %2143 = vmatprep.subr.mxu0 0.0
        %2144 = vmatpush1.msra.mxu0 0.0
        %2145 = vmatprep.subr.mxu0 0.0
        %2146 = vmatpush1.msra.mxu0 0.0
        %2147 = vmatprep.subr.mxu0 0.0
        %2148 = vmatpush1.msra.mxu0 0.0
        %2149 = vmatprep.subr.mxu0 0.0
        %2150 = vmatpush1.msra.mxu0 0.0
        %2151 = vmatprep.subr.mxu0 0.0
        %2152 = vmatpush1.msra.mxu0 0.0
        %2153 = vmatprep.mubr.f32.mxu0 0.0
        %v2154 = vand.u32 %v1644, 4294901760
        %v2155 = vsub.f32 %v1644, %v2154
        %2156 = vmatmul.mubr.f32.gmra.mrb[0].mxu0 %v2155
        %v2157 = vpop.f32.mrb[0].mxu0
        %v2158 = vadd.f32 %v1994, %v2157
        %v2159 = vpop.f32.mrb[0].mxu0
        %2160 = vmatprep.mubr.f32.mxu0 0.0
        %v2161 = vand.u32 %v1645, 4294901760
        %v2162 = vsub.f32 %v1645, %v2161
        %2163 = vmatmul.mubr.f32.gmra.mrb[0].mxu0 %v2162
        %v2164 = vpop.f32.mrb[0].mxu0
        %v2165 = vadd.f32 %v2000, %v2164
        %v2166 = vpop.f32.mrb[0].mxu0
        %2167 = vmatprep.mubr.f32.mxu0 0.0
        %v2168 = vand.u32 %v1646, 4294901760
        %v2169 = vsub.f32 %v1646, %v2168
        %2170 = vmatmul.mubr.f32.gmra.mrb[0].mxu0 %v2169
        %v2171 = vpop.f32.mrb[0].mxu0
        %v2172 = vadd.f32 %v2006, %v2171
        %v2173 = vpop.f32.mrb[0].mxu0
        %2174 = vmatprep.mubr.f32.mxu0 0.0
        %v2175 = vand.u32 %v1647, 4294901760
        %v2176 = vsub.f32 %v1647, %v2175
        %2177 = vmatmul.mubr.f32.gmra.mrb[0].mxu0 %v2176
        %v2178 = vpop.f32.mrb[0].mxu0
        %v2179 = vadd.f32 %v2012, %v2178
        %v2180 = vpop.f32.mrb[0].mxu0
        %2181 = vmatprep.mubr.f32.mxu0 0.0
        %v2182 = vand.u32 %v1648, 4294901760
        %v2183 = vsub.f32 %v1648, %v2182
        %2184 = vmatmul.mubr.f32.gmra.mrb[0].mxu0 %v2183
        %v2185 = vpop.f32.mrb[0].mxu0
        %v2186 = vadd.f32 %v2018, %v2185
        %v2187 = vpop.f32.mrb[0].mxu0
        %2188 = vmatprep.mubr.f32.mxu0 0.0
        %v2189 = vand.u32 %v1649, 4294901760
        %v2190 = vsub.f32 %v1649, %v2189
        %2191 = vmatmul.mubr.f32.gmra.mrb[0].mxu0 %v2190
        %v2192 = vpop.f32.mrb[0].mxu0
        %v2193 = vadd.f32 %v2024, %v2192
        %v2194 = vpop.f32.mrb[0].mxu0
        %2195 = vmatprep.mubr.f32.mxu0 0.0
        %v2196 = vand.u32 %v1650, 4294901760
        %v2197 = vsub.f32 %v1650, %v2196
        %2198 = vmatmul.mubr.f32.gmra.mrb[0].mxu0 %v2197
        %v2199 = vpop.f32.mrb[0].mxu0
        %v2200 = vadd.f32 %v2030, %v2199
        %v2201 = vpop.f32.mrb[0].mxu0
        %2202 = vmatprep.mubr.f32.mxu0 0.0
        %v2203 = vand.u32 %v1651, 4294901760
        %v2204 = vsub.f32 %v1651, %v2203
        %2205 = vmatmul.mubr.f32.gmra.mrb[0].mxu0 %v2204
        %v2206 = vpop.f32.mrb[0].mxu0
        %v2207 = vadd.f32 %v2036, %v2206
        %v2208 = vpop.f32.mrb[0].mxu0
        %2209 = vmatprep.mubr.f32.mxu0 0.0
        %v2210 = vand.u32 %v1652, 4294901760
        %v2211 = vsub.f32 %v1652, %v2210
        %2212 = vmatmul.mubr.f32.gmra.mrb[0].mxu0 %v2211
        %v2213 = vpop.f32.mrb[0].mxu0
        %v2214 = vadd.f32 %v2042, %v2213
        %v2215 = vpop.f32.mrb[0].mxu0
        %2216 = vmatprep.mubr.f32.mxu0 0.0
        %v2217 = vand.u32 %v1653, 4294901760
        %v2218 = vsub.f32 %v1653, %v2217
        %2219 = vmatmul.mubr.f32.gmra.mrb[0].mxu0 %v2218
        %v2220 = vpop.f32.mrb[0].mxu0
        %v2221 = vadd.f32 %v2048, %v2220
        %v2222 = vpop.f32.mrb[0].mxu0
        %2223 = vmatprep.mubr.f32.mxu0 0.0
        %v2224 = vand.u32 %v1654, 4294901760
        %v2225 = vsub.f32 %v1654, %v2224
        %2226 = vmatmul.mubr.f32.gmra.mrb[0].mxu0 %v2225
        %v2227 = vpop.f32.mrb[0].mxu0
        %v2228 = vadd.f32 %v2054, %v2227
        %v2229 = vpop.f32.mrb[0].mxu0
        %2230 = vdwg.mxu0
        %2231 = vmatprep.subr.mxu0 0.0
        %v2232 = vand.u32 %v310, 4294901760
        %2233 = vmatpush1.msra.mxu0 %v2232
        %2234 = vmatprep.subr.mxu0 0.0
        %v2235 = vand.u32 %v311, 4294901760
        %2236 = vmatpush1.msra.mxu0 %v2235
        %2237 = vmatprep.subr.mxu0 0.0
        %v2238 = vand.u32 %v312, 4294901760
        %2239 = vmatpush1.msra.mxu0 %v2238
        %2240 = vmatprep.subr.mxu0 0.0
        %v2241 = vand.u32 %v313, 4294901760
        %2242 = vmatpush1.msra.mxu0 %v2241
        %2243 = vmatprep.subr.mxu0 0.0
        %v2244 = vand.u32 %v314, 4294901760
        %2245 = vmatpush1.msra.mxu0 %v2244
        %2246 = vmatprep.subr.mxu0 0.0
        %v2247 = vand.u32 %v315, 4294901760
        %2248 = vmatpush1.msra.mxu0 %v2247
        %2249 = vmatprep.subr.mxu0 0.0
        %v2250 = vand.u32 %v316, 4294901760
        %2251 = vmatpush1.msra.mxu0 %v2250
        %2252 = vmatprep.subr.mxu0 0.0
        %v2253 = vand.u32 %v317, 4294901760
        %2254 = vmatpush1.msra.mxu0 %v2253
        %2255 = vmatprep.subr.mxu0 0.0
        %v2256 = vand.u32 %v318, 4294901760
        %2257 = vmatpush1.msra.mxu0 %v2256
        %2258 = vmatprep.subr.mxu0 0.0
        %v2259 = vand.u32 %v319, 4294901760
        %2260 = vmatpush1.msra.mxu0 %v2259
        %2261 = vmatprep.subr.mxu0 0.0
        %v2262 = vand.u32 %v320, 4294901760
        %2263 = vmatpush1.msra.mxu0 %v2262
        %2264 = vmatprep.subr.mxu0 0.0
        %v2265 = vand.u32 %v321, 4294901760
        %2266 = vmatpush1.msra.mxu0 %v2265
        %2267 = vmatprep.subr.mxu0 0.0
        %v2268 = vand.u32 %v322, 4294901760
        %2269 = vmatpush1.msra.mxu0 %v2268
        %2270 = vmatprep.subr.mxu0 0.0
        %v2271 = vand.u32 %v323, 4294901760
        %2272 = vmatpush1.msra.mxu0 %v2271
        %2273 = vmatprep.subr.mxu0 0.0
        %v2274 = vand.u32 %v324, 4294901760
        %2275 = vmatpush1.msra.mxu0 %v2274
        %2276 = vmatprep.subr.mxu0 0.0
        %v2277 = vand.u32 %v325, 4294901760
        %2278 = vmatpush1.msra.mxu0 %v2277
        %2279 = vmatprep.subr.mxu0 0.0
        %2280 = vmatpush1.msra.mxu0 0.0
        %2281 = vmatprep.subr.mxu0 0.0
        %2282 = vmatpush1.msra.mxu0 0.0
        %2283 = vmatprep.subr.mxu0 0.0
        %2284 = vmatpush1.msra.mxu0 0.0
        %2285 = vmatprep.subr.mxu0 0.0
        %2286 = vmatpush1.msra.mxu0 0.0
        %2287 = vmatprep.subr.mxu0 0.0
        %2288 = vmatpush1.msra.mxu0 0.0
        %2289 = vmatprep.subr.mxu0 0.0
        %2290 = vmatpush1.msra.mxu0 0.0
        %2291 = vmatprep.subr.mxu0 0.0
        %2292 = vmatpush1.msra.mxu0 0.0
        %2293 = vmatprep.subr.mxu0 0.0
        %2294 = vmatpush1.msra.mxu0 0.0
        %2295 = vmatprep.subr.mxu0 0.0
        %2296 = vmatpush1.msra.mxu0 0.0
        %2297 = vmatprep.subr.mxu0 0.0
        %2298 = vmatpush1.msra.mxu0 0.0
        %2299 = vmatprep.subr.mxu0 0.0
        %2300 = vmatpush1.msra.mxu0 0.0
        %2301 = vmatprep.subr.mxu0 0.0
        %2302 = vmatpush1.msra.mxu0 0.0
        %2303 = vmatprep.subr.mxu0 0.0
        %2304 = vmatpush1.msra.mxu0 0.0
        %2305 = vmatprep.subr.mxu0 0.0
        %2306 = vmatpush1.msra.mxu0 0.0
        %2307 = vmatprep.subr.mxu0 0.0
        %2308 = vmatpush1.msra.mxu0 0.0
        %2309 = vmatprep.subr.mxu0 0.0
        %2310 = vmatpush1.msra.mxu0 0.0
        %2311 = vmatprep.mubr.f32.mxu0 0.0
        %v2312 = vand.u32 %v1644, 4294901760
        %v2313 = vsub.f32 %v1644, %v2312
        %v2314 = vand.u32 %v2313, 4294901760
        %2315 = vmatmul.mubr.f32.gmra.mrb[0].mxu0 %v2314
        %v2316 = vpop.f32.mrb[0].mxu0
        %v2317 = vadd.f32 %v2158, %v2316
        %v2318 = vpop.f32.mrb[0].mxu0
        %2319 = vmatprep.mubr.f32.mxu0 0.0
        %v2320 = vand.u32 %v1645, 4294901760
        %v2321 = vsub.f32 %v1645, %v2320
        %v2322 = vand.u32 %v2321, 4294901760
        %2323 = vmatmul.mubr.f32.gmra.mrb[0].mxu0 %v2322
        %v2324 = vpop.f32.mrb[0].mxu0
        %v2325 = vadd.f32 %v2165, %v2324
        %v2326 = vpop.f32.mrb[0].mxu0
        %2327 = vmatprep.mubr.f32.mxu0 0.0
        %v2328 = vand.u32 %v1646, 4294901760
        %v2329 = vsub.f32 %v1646, %v2328
        %v2330 = vand.u32 %v2329, 4294901760
        %2331 = vmatmul.mubr.f32.gmra.mrb[0].mxu0 %v2330
        %v2332 = vpop.f32.mrb[0].mxu0
        %v2333 = vadd.f32 %v2172, %v2332
        %v2334 = vpop.f32.mrb[0].mxu0
        %2335 = vmatprep.mubr.f32.mxu0 0.0
        %v2336 = vand.u32 %v1647, 4294901760
        %v2337 = vsub.f32 %v1647, %v2336
        %v2338 = vand.u32 %v2337, 4294901760
        %2339 = vmatmul.mubr.f32.gmra.mrb[0].mxu0 %v2338
        %v2340 = vpop.f32.mrb[0].mxu0
        %v2341 = vadd.f32 %v2179, %v2340
        %v2342 = vpop.f32.mrb[0].mxu0
        %2343 = vmatprep.mubr.f32.mxu0 0.0
        %v2344 = vand.u32 %v1648, 4294901760
        %v2345 = vsub.f32 %v1648, %v2344
        %v2346 = vand.u32 %v2345, 4294901760
        %2347 = vmatmul.mubr.f32.gmra.mrb[0].mxu0 %v2346
        %v2348 = vpop.f32.mrb[0].mxu0
        %v2349 = vadd.f32 %v2186, %v2348
        %v2350 = vpop.f32.mrb[0].mxu0
        %2351 = vmatprep.mubr.f32.mxu0 0.0
        %v2352 = vand.u32 %v1649, 4294901760
        %v2353 = vsub.f32 %v1649, %v2352
        %v2354 = vand.u32 %v2353, 4294901760
        %2355 = vmatmul.mubr.f32.gmra.mrb[0].mxu0 %v2354
        %v2356 = vpop.f32.mrb[0].mxu0
        %v2357 = vadd.f32 %v2193, %v2356
        %v2358 = vpop.f32.mrb[0].mxu0
        %2359 = vmatprep.mubr.f32.mxu0 0.0
        %v2360 = vand.u32 %v1650, 4294901760
        %v2361 = vsub.f32 %v1650, %v2360
        %v2362 = vand.u32 %v2361, 4294901760
        %2363 = vmatmul.mubr.f32.gmra.mrb[0].mxu0 %v2362
        %v2364 = vpop.f32.mrb[0].mxu0
        %v2365 = vadd.f32 %v2200, %v2364
        %v2366 = vpop.f32.mrb[0].mxu0
        %2367 = vmatprep.mubr.f32.mxu0 0.0
        %v2368 = vand.u32 %v1651, 4294901760
        %v2369 = vsub.f32 %v1651, %v2368
        %v2370 = vand.u32 %v2369, 4294901760
        %2371 = vmatmul.mubr.f32.gmra.mrb[0].mxu0 %v2370
        %v2372 = vpop.f32.mrb[0].mxu0
        %v2373 = vadd.f32 %v2207, %v2372
        %v2374 = vpop.f32.mrb[0].mxu0
        %2375 = vmatprep.mubr.f32.mxu0 0.0
        %v2376 = vand.u32 %v1652, 4294901760
        %v2377 = vsub.f32 %v1652, %v2376
        %v2378 = vand.u32 %v2377, 4294901760
        %2379 = vmatmul.mubr.f32.gmra.mrb[0].mxu0 %v2378
        %v2380 = vpop.f32.mrb[0].mxu0
        %v2381 = vadd.f32 %v2214, %v2380
        %v2382 = vpop.f32.mrb[0].mxu0
        %2383 = vmatprep.mubr.f32.mxu0 0.0
        %v2384 = vand.u32 %v1653, 4294901760
        %v2385 = vsub.f32 %v1653, %v2384
        %v2386 = vand.u32 %v2385, 4294901760
        %2387 = vmatmul.mubr.f32.gmra.mrb[0].mxu0 %v2386
        %v2388 = vpop.f32.mrb[0].mxu0
        %v2389 = vadd.f32 %v2221, %v2388
        %v2390 = vpop.f32.mrb[0].mxu0
        %2391 = vmatprep.mubr.f32.mxu0 0.0
        %v2392 = vand.u32 %v1654, 4294901760
        %v2393 = vsub.f32 %v1654, %v2392
        %v2394 = vand.u32 %v2393, 4294901760
        %2395 = vmatmul.mubr.f32.gmra.mrb[0].mxu0 %v2394
        %v2396 = vpop.f32.mrb[0].mxu0
        %v2397 = vadd.f32 %v2228, %v2396
        %v2398 = vpop.f32.mrb[0].mxu0
        %2399 = vdwg.mxu0
        %2400 = vmatprep.subr.mxu0 0.0
        %v2401 = vand.u32 %v310, 4294901760
        %v2402 = vsub.f32 %v310, %v2401
        %v2403 = vand.u32 %v2402, 4294901760
        %2404 = vmatpush1.msra.mxu0 %v2403
        %2405 = vmatprep.subr.mxu0 0.0
        %v2406 = vand.u32 %v311, 4294901760
        %v2407 = vsub.f32 %v311, %v2406
        %v2408 = vand.u32 %v2407, 4294901760
        %2409 = vmatpush1.msra.mxu0 %v2408
        %2410 = vmatprep.subr.mxu0 0.0
        %v2411 = vand.u32 %v312, 4294901760
        %v2412 = vsub.f32 %v312, %v2411
        %v2413 = vand.u32 %v2412, 4294901760
        %2414 = vmatpush1.msra.mxu0 %v2413
        %2415 = vmatprep.subr.mxu0 0.0
        %v2416 = vand.u32 %v313, 4294901760
        %v2417 = vsub.f32 %v313, %v2416
        %v2418 = vand.u32 %v2417, 4294901760
        %2419 = vmatpush1.msra.mxu0 %v2418
        %2420 = vmatprep.subr.mxu0 0.0
        %v2421 = vand.u32 %v314, 4294901760
        %v2422 = vsub.f32 %v314, %v2421
        %v2423 = vand.u32 %v2422, 4294901760
        %2424 = vmatpush1.msra.mxu0 %v2423
        %2425 = vmatprep.subr.mxu0 0.0
        %v2426 = vand.u32 %v315, 4294901760
        %v2427 = vsub.f32 %v315, %v2426
        %v2428 = vand.u32 %v2427, 4294901760
        %2429 = vmatpush1.msra.mxu0 %v2428
        %2430 = vmatprep.subr.mxu0 0.0
        %v2431 = vand.u32 %v316, 4294901760
        %v2432 = vsub.f32 %v316, %v2431
        %v2433 = vand.u32 %v2432, 4294901760
        %2434 = vmatpush1.msra.mxu0 %v2433
        %2435 = vmatprep.subr.mxu0 0.0
        %v2436 = vand.u32 %v317, 4294901760
        %v2437 = vsub.f32 %v317, %v2436
        %v2438 = vand.u32 %v2437, 4294901760
        %2439 = vmatpush1.msra.mxu0 %v2438
        %2440 = vmatprep.subr.mxu0 0.0
        %v2441 = vand.u32 %v318, 4294901760
        %v2442 = vsub.f32 %v318, %v2441
        %v2443 = vand.u32 %v2442, 4294901760
        %2444 = vmatpush1.msra.mxu0 %v2443
        %2445 = vmatprep.subr.mxu0 0.0
        %v2446 = vand.u32 %v319, 4294901760
        %v2447 = vsub.f32 %v319, %v2446
        %v2448 = vand.u32 %v2447, 4294901760
        %2449 = vmatpush1.msra.mxu0 %v2448
        %2450 = vmatprep.subr.mxu0 0.0
        %v2451 = vand.u32 %v320, 4294901760
        %v2452 = vsub.f32 %v320, %v2451
        %v2453 = vand.u32 %v2452, 4294901760
        %2454 = vmatpush1.msra.mxu0 %v2453
        %2455 = vmatprep.subr.mxu0 0.0
        %v2456 = vand.u32 %v321, 4294901760
        %v2457 = vsub.f32 %v321, %v2456
        %v2458 = vand.u32 %v2457, 4294901760
        %2459 = vmatpush1.msra.mxu0 %v2458
        %2460 = vmatprep.subr.mxu0 0.0
        %v2461 = vand.u32 %v322, 4294901760
        %v2462 = vsub.f32 %v322, %v2461
        %v2463 = vand.u32 %v2462, 4294901760
        %2464 = vmatpush1.msra.mxu0 %v2463
        %2465 = vmatprep.subr.mxu0 0.0
        %v2466 = vand.u32 %v323, 4294901760
        %v2467 = vsub.f32 %v323, %v2466
        %v2468 = vand.u32 %v2467, 4294901760
        %2469 = vmatpush1.msra.mxu0 %v2468
        %2470 = vmatprep.subr.mxu0 0.0
        %v2471 = vand.u32 %v324, 4294901760
        %v2472 = vsub.f32 %v324, %v2471
        %v2473 = vand.u32 %v2472, 4294901760
        %2474 = vmatpush1.msra.mxu0 %v2473
        %2475 = vmatprep.subr.mxu0 0.0
        %v2476 = vand.u32 %v325, 4294901760
        %v2477 = vsub.f32 %v325, %v2476
        %v2478 = vand.u32 %v2477, 4294901760
        %2479 = vmatpush1.msra.mxu0 %v2478
        %2480 = vmatprep.subr.mxu0 0.0
        %2481 = vmatpush1.msra.mxu0 0.0
        %2482 = vmatprep.subr.mxu0 0.0
        %2483 = vmatpush1.msra.mxu0 0.0
        %2484 = vmatprep.subr.mxu0 0.0
        %2485 = vmatpush1.msra.mxu0 0.0
        %2486 = vmatprep.subr.mxu0 0.0
        %2487 = vmatpush1.msra.mxu0 0.0
        %2488 = vmatprep.subr.mxu0 0.0
        %2489 = vmatpush1.msra.mxu0 0.0
        %2490 = vmatprep.subr.mxu0 0.0
        %2491 = vmatpush1.msra.mxu0 0.0
        %2492 = vmatprep.subr.mxu0 0.0
        %2493 = vmatpush1.msra.mxu0 0.0
        %2494 = vmatprep.subr.mxu0 0.0
        %2495 = vmatpush1.msra.mxu0 0.0
        %2496 = vmatprep.subr.mxu0 0.0
        %2497 = vmatpush1.msra.mxu0 0.0
        %2498 = vmatprep.subr.mxu0 0.0
        %2499 = vmatpush1.msra.mxu0 0.0
        %2500 = vmatprep.subr.mxu0 0.0
        %2501 = vmatpush1.msra.mxu0 0.0
        %2502 = vmatprep.subr.mxu0 0.0
        %2503 = vmatpush1.msra.mxu0 0.0
        %2504 = vmatprep.subr.mxu0 0.0
        %2505 = vmatpush1.msra.mxu0 0.0
        %2506 = vmatprep.subr.mxu0 0.0
        %2507 = vmatpush1.msra.mxu0 0.0
        %2508 = vmatprep.subr.mxu0 0.0
        %2509 = vmatpush1.msra.mxu0 0.0
        %2510 = vmatprep.subr.mxu0 0.0
        %2511 = vmatpush1.msra.mxu0 0.0
        %2512 = vmatprep.mubr.f32.mxu0 0.0
        %v2513 = vand.u32 %v1644, 4294901760
        %2514 = vmatmul.mubr.f32.gmra.mrb[0].mxu0 %v2513
        %v2515 = vpop.f32.mrb[0].mxu0
        %v2516 = vadd.f32 %v2317, %v2515
        %v2517 = vpop.f32.mrb[0].mxu0
        %2518 = vmatprep.mubr.f32.mxu0 0.0
        %v2519 = vand.u32 %v1645, 4294901760
        %2520 = vmatmul.mubr.f32.gmra.mrb[0].mxu0 %v2519
        %v2521 = vpop.f32.mrb[0].mxu0
        %v2522 = vadd.f32 %v2325, %v2521
        %v2523 = vpop.f32.mrb[0].mxu0
        %2524 = vmatprep.mubr.f32.mxu0 0.0
        %v2525 = vand.u32 %v1646, 4294901760
        %2526 = vmatmul.mubr.f32.gmra.mrb[0].mxu0 %v2525
        %v2527 = vpop.f32.mrb[0].mxu0
        %v2528 = vadd.f32 %v2333, %v2527
        %v2529 = vpop.f32.mrb[0].mxu0
        %2530 = vmatprep.mubr.f32.mxu0 0.0
        %v2531 = vand.u32 %v1647, 4294901760
        %2532 = vmatmul.mubr.f32.gmra.mrb[0].mxu0 %v2531
        %v2533 = vpop.f32.mrb[0].mxu0
        %v2534 = vadd.f32 %v2341, %v2533
        %v2535 = vpop.f32.mrb[0].mxu0
        %2536 = vmatprep.mubr.f32.mxu0 0.0
        %v2537 = vand.u32 %v1648, 4294901760
        %2538 = vmatmul.mubr.f32.gmra.mrb[0].mxu0 %v2537
        %v2539 = vpop.f32.mrb[0].mxu0
        %v2540 = vadd.f32 %v2349, %v2539
        %v2541 = vpop.f32.mrb[0].mxu0
        %2542 = vmatprep.mubr.f32.mxu0 0.0
        %v2543 = vand.u32 %v1649, 4294901760
        %2544 = vmatmul.mubr.f32.gmra.mrb[0].mxu0 %v2543
        %v2545 = vpop.f32.mrb[0].mxu0
        %v2546 = vadd.f32 %v2357, %v2545
        %v2547 = vpop.f32.mrb[0].mxu0
        %2548 = vmatprep.mubr.f32.mxu0 0.0
        %v2549 = vand.u32 %v1650, 4294901760
        %2550 = vmatmul.mubr.f32.gmra.mrb[0].mxu0 %v2549
        %v2551 = vpop.f32.mrb[0].mxu0
        %v2552 = vadd.f32 %v2365, %v2551
        %v2553 = vpop.f32.mrb[0].mxu0
        %2554 = vmatprep.mubr.f32.mxu0 0.0
        %v2555 = vand.u32 %v1651, 4294901760
        %2556 = vmatmul.mubr.f32.gmra.mrb[0].mxu0 %v2555
        %v2557 = vpop.f32.mrb[0].mxu0
        %v2558 = vadd.f32 %v2373, %v2557
        %v2559 = vpop.f32.mrb[0].mxu0
        %2560 = vmatprep.mubr.f32.mxu0 0.0
        %v2561 = vand.u32 %v1652, 4294901760
        %2562 = vmatmul.mubr.f32.gmra.mrb[0].mxu0 %v2561
        %v2563 = vpop.f32.mrb[0].mxu0
        %v2564 = vadd.f32 %v2381, %v2563
        %v2565 = vpop.f32.mrb[0].mxu0
        %2566 = vmatprep.mubr.f32.mxu0 0.0
        %v2567 = vand.u32 %v1653, 4294901760
        %2568 = vmatmul.mubr.f32.gmra.mrb[0].mxu0 %v2567
        %v2569 = vpop.f32.mrb[0].mxu0
        %v2570 = vadd.f32 %v2389, %v2569
        %v2571 = vpop.f32.mrb[0].mxu0
        %2572 = vmatprep.mubr.f32.mxu0 0.0
        %v2573 = vand.u32 %v1654, 4294901760
        %2574 = vmatmul.mubr.f32.gmra.mrb[0].mxu0 %v2573
        %v2575 = vpop.f32.mrb[0].mxu0
        %v2576 = vadd.f32 %v2397, %v2575
        %v2577 = vpop.f32.mrb[0].mxu0
        %2578 = vdwg.mxu0
        %2579 = vmatprep.subr.mxu0 0.0
        %v2580 = vand.u32 %v310, 4294901760
        %2581 = vmatpush1.msra.mxu0 %v2580
        %2582 = vmatprep.subr.mxu0 0.0
        %v2583 = vand.u32 %v311, 4294901760
        %2584 = vmatpush1.msra.mxu0 %v2583
        %2585 = vmatprep.subr.mxu0 0.0
        %v2586 = vand.u32 %v312, 4294901760
        %2587 = vmatpush1.msra.mxu0 %v2586
        %2588 = vmatprep.subr.mxu0 0.0
        %v2589 = vand.u32 %v313, 4294901760
        %2590 = vmatpush1.msra.mxu0 %v2589
        %2591 = vmatprep.subr.mxu0 0.0
        %v2592 = vand.u32 %v314, 4294901760
        %2593 = vmatpush1.msra.mxu0 %v2592
        %2594 = vmatprep.subr.mxu0 0.0
        %v2595 = vand.u32 %v315, 4294901760
        %2596 = vmatpush1.msra.mxu0 %v2595
        %2597 = vmatprep.subr.mxu0 0.0
        %v2598 = vand.u32 %v316, 4294901760
        %2599 = vmatpush1.msra.mxu0 %v2598
        %2600 = vmatprep.subr.mxu0 0.0
        %v2601 = vand.u32 %v317, 4294901760
        %2602 = vmatpush1.msra.mxu0 %v2601
        %2603 = vmatprep.subr.mxu0 0.0
        %v2604 = vand.u32 %v318, 4294901760
        %2605 = vmatpush1.msra.mxu0 %v2604
        %2606 = vmatprep.subr.mxu0 0.0
        %v2607 = vand.u32 %v319, 4294901760
        %2608 = vmatpush1.msra.mxu0 %v2607
        %2609 = vmatprep.subr.mxu0 0.0
        %v2610 = vand.u32 %v320, 4294901760
        %2611 = vmatpush1.msra.mxu0 %v2610
        %2612 = vmatprep.subr.mxu0 0.0
        %v2613 = vand.u32 %v321, 4294901760
        %2614 = vmatpush1.msra.mxu0 %v2613
        %2615 = vmatprep.subr.mxu0 0.0
        %v2616 = vand.u32 %v322, 4294901760
        %2617 = vmatpush1.msra.mxu0 %v2616
        %2618 = vmatprep.subr.mxu0 0.0
        %v2619 = vand.u32 %v323, 4294901760
        %2620 = vmatpush1.msra.mxu0 %v2619
        %2621 = vmatprep.subr.mxu0 0.0
        %v2622 = vand.u32 %v324, 4294901760
        %2623 = vmatpush1.msra.mxu0 %v2622
        %2624 = vmatprep.subr.mxu0 0.0
        %v2625 = vand.u32 %v325, 4294901760
        %2626 = vmatpush1.msra.mxu0 %v2625
        %2627 = vmatprep.subr.mxu0 0.0
        %2628 = vmatpush1.msra.mxu0 0.0
        %2629 = vmatprep.subr.mxu0 0.0
        %2630 = vmatpush1.msra.mxu0 0.0
        %2631 = vmatprep.subr.mxu0 0.0
        %2632 = vmatpush1.msra.mxu0 0.0
        %2633 = vmatprep.subr.mxu0 0.0
        %2634 = vmatpush1.msra.mxu0 0.0
        %2635 = vmatprep.subr.mxu0 0.0
        %2636 = vmatpush1.msra.mxu0 0.0
        %2637 = vmatprep.subr.mxu0 0.0
        %2638 = vmatpush1.msra.mxu0 0.0
        %2639 = vmatprep.subr.mxu0 0.0
        %2640 = vmatpush1.msra.mxu0 0.0
        %2641 = vmatprep.subr.mxu0 0.0
        %2642 = vmatpush1.msra.mxu0 0.0
        %2643 = vmatprep.subr.mxu0 0.0
        %2644 = vmatpush1.msra.mxu0 0.0
        %2645 = vmatprep.subr.mxu0 0.0
        %2646 = vmatpush1.msra.mxu0 0.0
        %2647 = vmatprep.subr.mxu0 0.0
        %2648 = vmatpush1.msra.mxu0 0.0
        %2649 = vmatprep.subr.mxu0 0.0
        %2650 = vmatpush1.msra.mxu0 0.0
        %2651 = vmatprep.subr.mxu0 0.0
        %2652 = vmatpush1.msra.mxu0 0.0
        %2653 = vmatprep.subr.mxu0 0.0
        %2654 = vmatpush1.msra.mxu0 0.0
        %2655 = vmatprep.subr.mxu0 0.0
        %2656 = vmatpush1.msra.mxu0 0.0
        %2657 = vmatprep.subr.mxu0 0.0
        %2658 = vmatpush1.msra.mxu0 0.0
        %2659 = vmatprep.mubr.f32.mxu0 0.0
        %v2660 = vand.u32 %v1644, 4294901760
        %2661 = vmatmul.mubr.f32.gmra.mrb[0].mxu0 %v2660
        %v2662 = vpop.f32.mrb[0].mxu0
        %v2663 = vadd.f32 %v2516, %v2662
        %v2664 = vpop.f32.mrb[0].mxu0
        %2665 = vmatprep.mubr.f32.mxu0 0.0
        %v2666 = vand.u32 %v1645, 4294901760
        %2667 = vmatmul.mubr.f32.gmra.mrb[0].mxu0 %v2666
        %v2668 = vpop.f32.mrb[0].mxu0
        %v2669 = vadd.f32 %v2522, %v2668
        %v2670 = vpop.f32.mrb[0].mxu0
        %2671 = vmatprep.mubr.f32.mxu0 0.0
        %v2672 = vand.u32 %v1646, 4294901760
        %2673 = vmatmul.mubr.f32.gmra.mrb[0].mxu0 %v2672
        %v2674 = vpop.f32.mrb[0].mxu0
        %v2675 = vadd.f32 %v2528, %v2674
        %v2676 = vpop.f32.mrb[0].mxu0
        %2677 = vmatprep.mubr.f32.mxu0 0.0
        %v2678 = vand.u32 %v1647, 4294901760
        %2679 = vmatmul.mubr.f32.gmra.mrb[0].mxu0 %v2678
        %v2680 = vpop.f32.mrb[0].mxu0
        %v2681 = vadd.f32 %v2534, %v2680
        %v2682 = vpop.f32.mrb[0].mxu0
        %2683 = vmatprep.mubr.f32.mxu0 0.0
        %v2684 = vand.u32 %v1648, 4294901760
        %2685 = vmatmul.mubr.f32.gmra.mrb[0].mxu0 %v2684
        %v2686 = vpop.f32.mrb[0].mxu0
        %v2687 = vadd.f32 %v2540, %v2686
        %v2688 = vpop.f32.mrb[0].mxu0
        %2689 = vmatprep.mubr.f32.mxu0 0.0
        %v2690 = vand.u32 %v1649, 4294901760
        %2691 = vmatmul.mubr.f32.gmra.mrb[0].mxu0 %v2690
        %v2692 = vpop.f32.mrb[0].mxu0
        %v2693 = vadd.f32 %v2546, %v2692
        %v2694 = vpop.f32.mrb[0].mxu0
        %2695 = vmatprep.mubr.f32.mxu0 0.0
        %v2696 = vand.u32 %v1650, 4294901760
        %2697 = vmatmul.mubr.f32.gmra.mrb[0].mxu0 %v2696
        %v2698 = vpop.f32.mrb[0].mxu0
        %v2699 = vadd.f32 %v2552, %v2698
        %v2700 = vpop.f32.mrb[0].mxu0
        %2701 = vmatprep.mubr.f32.mxu0 0.0
        %v2702 = vand.u32 %v1651, 4294901760
        %2703 = vmatmul.mubr.f32.gmra.mrb[0].mxu0 %v2702
        %v2704 = vpop.f32.mrb[0].mxu0
        %v2705 = vadd.f32 %v2558, %v2704
        %v2706 = vpop.f32.mrb[0].mxu0
        %2707 = vmatprep.mubr.f32.mxu0 0.0
        %v2708 = vand.u32 %v1652, 4294901760
        %2709 = vmatmul.mubr.f32.gmra.mrb[0].mxu0 %v2708
        %v2710 = vpop.f32.mrb[0].mxu0
        %v2711 = vadd.f32 %v2564, %v2710
        %v2712 = vpop.f32.mrb[0].mxu0
        %2713 = vmatprep.mubr.f32.mxu0 0.0
        %v2714 = vand.u32 %v1653, 4294901760
        %2715 = vmatmul.mubr.f32.gmra.mrb[0].mxu0 %v2714
        %v2716 = vpop.f32.mrb[0].mxu0
        %v2717 = vadd.f32 %v2570, %v2716
        %v2718 = vpop.f32.mrb[0].mxu0
        %2719 = vmatprep.mubr.f32.mxu0 0.0
        %v2720 = vand.u32 %v1654, 4294901760
        %2721 = vmatmul.mubr.f32.gmra.mrb[0].mxu0 %v2720
        %v2722 = vpop.f32.mrb[0].mxu0
        %v2723 = vadd.f32 %v2576, %v2722
        %v2724 = vpop.f32.mrb[0].mxu0
        %2725 = vdwg.mxu0
        %v2727 = vsel %vm331, %v2663, 0
        %v2730 = vsel %vm331, %v2669, 0
        %v2733 = vsel %vm331, %v2675, 0
        %v2736 = vsel %vm331, %v2681, 0
        %v2739 = vsel %vm331, %v2687, 0
        %v2742 = vsel %vm331, %v2693, 0
        %v2745 = vsel %vm331, %v2699, 0
        %v2748 = vsel %vm331, %v2705, 0
        %v2751 = vsel %vm331, %v2711, 0
        %v2754 = vsel %vm331, %v2717, 0
        %v2757 = vsel %vm331, %v2723, 0
        %2759 = vmatprep.subr.mxu0 0.0
        %v2760 = vand.u32 %v327, 4294901760
        %2761 = vmatpush1.msra.mxu0 %v2760
        %2762 = vmatprep.subr.mxu0 0.0
        %2763 = vmatpush1.msra.mxu0 0.0
        %2764 = vmatprep.subr.mxu0 0.0
        %2765 = vmatpush1.msra.mxu0 0.0
        %2766 = vmatprep.subr.mxu0 0.0
        %2767 = vmatpush1.msra.mxu0 0.0
        %2768 = vmatprep.subr.mxu0 0.0
        %2769 = vmatpush1.msra.mxu0 0.0
        %2770 = vmatprep.subr.mxu0 0.0
        %2771 = vmatpush1.msra.mxu0 0.0
        %2772 = vmatprep.subr.mxu0 0.0
        %2773 = vmatpush1.msra.mxu0 0.0
        %2774 = vmatprep.subr.mxu0 0.0
        %2775 = vmatpush1.msra.mxu0 0.0
        %2776 = vmatprep.subr.mxu0 0.0
        %2777 = vmatpush1.msra.mxu0 0.0
        %2778 = vmatprep.subr.mxu0 0.0
        %2779 = vmatpush1.msra.mxu0 0.0
        %2780 = vmatprep.subr.mxu0 0.0
        %2781 = vmatpush1.msra.mxu0 0.0
        %2782 = vmatprep.subr.mxu0 0.0
        %2783 = vmatpush1.msra.mxu0 0.0
        %2784 = vmatprep.subr.mxu0 0.0
        %2785 = vmatpush1.msra.mxu0 0.0
        %2786 = vmatprep.subr.mxu0 0.0
        %2787 = vmatpush1.msra.mxu0 0.0
        %2788 = vmatprep.subr.mxu0 0.0
        %2789 = vmatpush1.msra.mxu0 0.0
        %2790 = vmatprep.subr.mxu0 0.0
        %2791 = vmatpush1.msra.mxu0 0.0
        %2792 = vmatprep.subr.mxu0 0.0
        %2793 = vmatpush1.msra.mxu0 0.0
        %2794 = vmatprep.subr.mxu0 0.0
        %2795 = vmatpush1.msra.mxu0 0.0
        %2796 = vmatprep.subr.mxu0 0.0
        %2797 = vmatpush1.msra.mxu0 0.0
        %2798 = vmatprep.subr.mxu0 0.0
        %2799 = vmatpush1.msra.mxu0 0.0
        %2800 = vmatprep.subr.mxu0 0.0
        %2801 = vmatpush1.msra.mxu0 0.0
        %2802 = vmatprep.subr.mxu0 0.0
        %2803 = vmatpush1.msra.mxu0 0.0
        %2804 = vmatprep.subr.mxu0 0.0
        %2805 = vmatpush1.msra.mxu0 0.0
        %2806 = vmatprep.subr.mxu0 0.0
        %2807 = vmatpush1.msra.mxu0 0.0
        %2808 = vmatprep.subr.mxu0 0.0
        %2809 = vmatpush1.msra.mxu0 0.0
        %2810 = vmatprep.subr.mxu0 0.0
        %2811 = vmatpush1.msra.mxu0 0.0
        %2812 = vmatprep.subr.mxu0 0.0
        %2813 = vmatpush1.msra.mxu0 0.0
        %2814 = vmatprep.subr.mxu0 0.0
        %2815 = vmatpush1.msra.mxu0 0.0
        %2816 = vmatprep.subr.mxu0 0.0
        %2817 = vmatpush1.msra.mxu0 0.0
        %2818 = vmatprep.subr.mxu0 0.0
        %2819 = vmatpush1.msra.mxu0 0.0
        %2820 = vmatprep.subr.mxu0 0.0
        %2821 = vmatpush1.msra.mxu0 0.0
        %2822 = vmatprep.subr.mxu0 0.0
        %2823 = vmatpush1.msra.mxu0 0.0
        %2824 = vmatprep.mubr.f32.mxu0 0.0
        %v2825 = vand.u32 %v2727, 4294901760
        %v2826 = vsub.f32 %v2727, %v2825
        %v2827 = vand.u32 %v2826, 4294901760
        %v2828 = vsub.f32 %v2826, %v2827
        %v2829 = vand.u32 %v2828, 4294901760
        %2830 = vmatmul.mubr.f32.gmra.mrb[0].mxu0 %v2829
        %v2831 = vpop.f32.mrb[0].mxu0
        %v2832 = vadd.f32 0.0, %v2831
        %v2833 = vpop.f32.mrb[0].mxu0
        %2834 = vmatprep.mubr.f32.mxu0 0.0
        %v2835 = vand.u32 %v2730, 4294901760
        %v2836 = vsub.f32 %v2730, %v2835
        %v2837 = vand.u32 %v2836, 4294901760
        %v2838 = vsub.f32 %v2836, %v2837
        %v2839 = vand.u32 %v2838, 4294901760
        %2840 = vmatmul.mubr.f32.gmra.mrb[0].mxu0 %v2839
        %v2841 = vpop.f32.mrb[0].mxu0
        %v2842 = vadd.f32 0.0, %v2841
        %v2843 = vpop.f32.mrb[0].mxu0
        %2844 = vmatprep.mubr.f32.mxu0 0.0
        %v2845 = vand.u32 %v2733, 4294901760
        %v2846 = vsub.f32 %v2733, %v2845
        %v2847 = vand.u32 %v2846, 4294901760
        %v2848 = vsub.f32 %v2846, %v2847
        %v2849 = vand.u32 %v2848, 4294901760
        %2850 = vmatmul.mubr.f32.gmra.mrb[0].mxu0 %v2849
        %v2851 = vpop.f32.mrb[0].mxu0
        %v2852 = vadd.f32 0.0, %v2851
        %v2853 = vpop.f32.mrb[0].mxu0
        %2854 = vmatprep.mubr.f32.mxu0 0.0
        %v2855 = vand.u32 %v2736, 4294901760
        %v2856 = vsub.f32 %v2736, %v2855
        %v2857 = vand.u32 %v2856, 4294901760
        %v2858 = vsub.f32 %v2856, %v2857
        %v2859 = vand.u32 %v2858, 4294901760
        %2860 = vmatmul.mubr.f32.gmra.mrb[0].mxu0 %v2859
        %v2861 = vpop.f32.mrb[0].mxu0
        %v2862 = vadd.f32 0.0, %v2861
        %v2863 = vpop.f32.mrb[0].mxu0
        %2864 = vmatprep.mubr.f32.mxu0 0.0
        %v2865 = vand.u32 %v2739, 4294901760
        %v2866 = vsub.f32 %v2739, %v2865
        %v2867 = vand.u32 %v2866, 4294901760
        %v2868 = vsub.f32 %v2866, %v2867
        %v2869 = vand.u32 %v2868, 4294901760
        %2870 = vmatmul.mubr.f32.gmra.mrb[0].mxu0 %v2869
        %v2871 = vpop.f32.mrb[0].mxu0
        %v2872 = vadd.f32 0.0, %v2871
        %v2873 = vpop.f32.mrb[0].mxu0
        %2874 = vmatprep.mubr.f32.mxu0 0.0
        %v2875 = vand.u32 %v2742, 4294901760
        %v2876 = vsub.f32 %v2742, %v2875
        %v2877 = vand.u32 %v2876, 4294901760
        %v2878 = vsub.f32 %v2876, %v2877
        %v2879 = vand.u32 %v2878, 4294901760
        %2880 = vmatmul.mubr.f32.gmra.mrb[0].mxu0 %v2879
        %v2881 = vpop.f32.mrb[0].mxu0
        %v2882 = vadd.f32 0.0, %v2881
        %v2883 = vpop.f32.mrb[0].mxu0
        %2884 = vmatprep.mubr.f32.mxu0 0.0
        %v2885 = vand.u32 %v2745, 4294901760
        %v2886 = vsub.f32 %v2745, %v2885
        %v2887 = vand.u32 %v2886, 4294901760
        %v2888 = vsub.f32 %v2886, %v2887
        %v2889 = vand.u32 %v2888, 4294901760
        %2890 = vmatmul.mubr.f32.gmra.mrb[0].mxu0 %v2889
        %v2891 = vpop.f32.mrb[0].mxu0
        %v2892 = vadd.f32 0.0, %v2891
        %v2893 = vpop.f32.mrb[0].mxu0
        %2894 = vmatprep.mubr.f32.mxu0 0.0
        %v2895 = vand.u32 %v2748, 4294901760
        %v2896 = vsub.f32 %v2748, %v2895
        %v2897 = vand.u32 %v2896, 4294901760
        %v2898 = vsub.f32 %v2896, %v2897
        %v2899 = vand.u32 %v2898, 4294901760
        %2900 = vmatmul.mubr.f32.gmra.mrb[0].mxu0 %v2899
        %v2901 = vpop.f32.mrb[0].mxu0
        %v2902 = vadd.f32 0.0, %v2901
        %v2903 = vpop.f32.mrb[0].mxu0
        %2904 = vmatprep.mubr.f32.mxu0 0.0
        %v2905 = vand.u32 %v2751, 4294901760
        %v2906 = vsub.f32 %v2751, %v2905
        %v2907 = vand.u32 %v2906, 4294901760
        %v2908 = vsub.f32 %v2906, %v2907
        %v2909 = vand.u32 %v2908, 4294901760
        %2910 = vmatmul.mubr.f32.gmra.mrb[0].mxu0 %v2909
        %v2911 = vpop.f32.mrb[0].mxu0
        %v2912 = vadd.f32 0.0, %v2911
        %v2913 = vpop.f32.mrb[0].mxu0
        %2914 = vmatprep.mubr.f32.mxu0 0.0
        %v2915 = vand.u32 %v2754, 4294901760
        %v2916 = vsub.f32 %v2754, %v2915
        %v2917 = vand.u32 %v2916, 4294901760
        %v2918 = vsub.f32 %v2916, %v2917
        %v2919 = vand.u32 %v2918, 4294901760
        %2920 = vmatmul.mubr.f32.gmra.mrb[0].mxu0 %v2919
        %v2921 = vpop.f32.mrb[0].mxu0
        %v2922 = vadd.f32 0.0, %v2921
        %v2923 = vpop.f32.mrb[0].mxu0
        %2924 = vmatprep.mubr.f32.mxu0 0.0
        %v2925 = vand.u32 %v2757, 4294901760
        %v2926 = vsub.f32 %v2757, %v2925
        %v2927 = vand.u32 %v2926, 4294901760
        %v2928 = vsub.f32 %v2926, %v2927
        %v2929 = vand.u32 %v2928, 4294901760
        %2930 = vmatmul.mubr.f32.gmra.mrb[0].mxu0 %v2929
        %v2931 = vpop.f32.mrb[0].mxu0
        %v2932 = vadd.f32 0.0, %v2931
        %v2933 = vpop.f32.mrb[0].mxu0
        %2934 = vdwg.mxu0
        %2935 = vmatprep.subr.mxu0 0.0
        %v2936 = vand.u32 %v327, 4294901760
        %v2937 = vsub.f32 %v327, %v2936
        %v2938 = vand.u32 %v2937, 4294901760
        %v2939 = vsub.f32 %v2937, %v2938
        %v2940 = vand.u32 %v2939, 4294901760
        %2941 = vmatpush1.msra.mxu0 %v2940
        %2942 = vmatprep.subr.mxu0 0.0
        %2943 = vmatpush1.msra.mxu0 0.0
        %2944 = vmatprep.subr.mxu0 0.0
        %2945 = vmatpush1.msra.mxu0 0.0
        %2946 = vmatprep.subr.mxu0 0.0
        %2947 = vmatpush1.msra.mxu0 0.0
        %2948 = vmatprep.subr.mxu0 0.0
        %2949 = vmatpush1.msra.mxu0 0.0
        %2950 = vmatprep.subr.mxu0 0.0
        %2951 = vmatpush1.msra.mxu0 0.0
        %2952 = vmatprep.subr.mxu0 0.0
        %2953 = vmatpush1.msra.mxu0 0.0
        %2954 = vmatprep.subr.mxu0 0.0
        %2955 = vmatpush1.msra.mxu0 0.0
        %2956 = vmatprep.subr.mxu0 0.0
        %2957 = vmatpush1.msra.mxu0 0.0
        %2958 = vmatprep.subr.mxu0 0.0
        %2959 = vmatpush1.msra.mxu0 0.0
        %2960 = vmatprep.subr.mxu0 0.0
        %2961 = vmatpush1.msra.mxu0 0.0
        %2962 = vmatprep.subr.mxu0 0.0
        %2963 = vmatpush1.msra.mxu0 0.0
        %2964 = vmatprep.subr.mxu0 0.0
        %2965 = vmatpush1.msra.mxu0 0.0
        %2966 = vmatprep.subr.mxu0 0.0
        %2967 = vmatpush1.msra.mxu0 0.0
        %2968 = vmatprep.subr.mxu0 0.0
        %2969 = vmatpush1.msra.mxu0 0.0
        %2970 = vmatprep.subr.mxu0 0.0
        %2971 = vmatpush1.msra.mxu0 0.0
        %2972 = vmatprep.subr.mxu0 0.0
        %2973 = vmatpush1.msra.mxu0 0.0
        %2974 = vmatprep.subr.mxu0 0.0
        %2975 = vmatpush1.msra.mxu0 0.0
        %2976 = vmatprep.subr.mxu0 0.0
        %2977 = vmatpush1.msra.mxu0 0.0
        %2978 = vmatprep.subr.mxu0 0.0
        %2979 = vmatpush1.msra.mxu0 0.0
        %2980 = vmatprep.subr.mxu0 0.0
        %2981 = vmatpush1.msra.mxu0 0.0
        %2982 = vmatprep.subr.mxu0 0.0
        %2983 = vmatpush1.msra.mxu0 0.0
        %2984 = vmatprep.subr.mxu0 0.0
        %2985 = vmatpush1.msra.mxu0 0.0
        %2986 = vmatprep.subr.mxu0 0.0
        %2987 = vmatpush1.msra.mxu0 0.0
        %2988 = vmatprep.subr.mxu0 0.0
        %2989 = vmatpush1.msra.mxu0 0.0
        %2990 = vmatprep.subr.mxu0 0.0
        %2991 = vmatpush1.msra.mxu0 0.0
        %2992 = vmatprep.subr.mxu0 0.0
        %2993 = vmatpush1.msra.mxu0 0.0
        %2994 = vmatprep.subr.mxu0 0.0
        %2995 = vmatpush1.msra.mxu0 0.0
        %2996 = vmatprep.subr.mxu0 0.0
        %2997 = vmatpush1.msra.mxu0 0.0
        %2998 = vmatprep.subr.mxu0 0.0
        %2999 = vmatpush1.msra.mxu0 0.0
        %3000 = vmatprep.subr.mxu0 0.0
        %3001 = vmatpush1.msra.mxu0 0.0
        %3002 = vmatprep.subr.mxu0 0.0
        %3003 = vmatpush1.msra.mxu0 0.0
        %3004 = vmatprep.mubr.f32.mxu0 0.0
        %v3005 = vand.u32 %v2727, 4294901760
        %3006 = vmatmul.mubr.f32.gmra.mrb[0].mxu0 %v3005
        %v3007 = vpop.f32.mrb[0].mxu0
        %v3008 = vadd.f32 %v2832, %v3007
        %v3009 = vpop.f32.mrb[0].mxu0
        %3010 = vmatprep.mubr.f32.mxu0 0.0
        %v3011 = vand.u32 %v2730, 4294901760
        %3012 = vmatmul.mubr.f32.gmra.mrb[0].mxu0 %v3011
        %v3013 = vpop.f32.mrb[0].mxu0
        %v3014 = vadd.f32 %v2842, %v3013
        %v3015 = vpop.f32.mrb[0].mxu0
        %3016 = vmatprep.mubr.f32.mxu0 0.0
        %v3017 = vand.u32 %v2733, 4294901760
        %3018 = vmatmul.mubr.f32.gmra.mrb[0].mxu0 %v3017
        %v3019 = vpop.f32.mrb[0].mxu0
        %v3020 = vadd.f32 %v2852, %v3019
        %v3021 = vpop.f32.mrb[0].mxu0
        %3022 = vmatprep.mubr.f32.mxu0 0.0
        %v3023 = vand.u32 %v2736, 4294901760
        %3024 = vmatmul.mubr.f32.gmra.mrb[0].mxu0 %v3023
        %v3025 = vpop.f32.mrb[0].mxu0
        %v3026 = vadd.f32 %v2862, %v3025
        %v3027 = vpop.f32.mrb[0].mxu0
        %3028 = vmatprep.mubr.f32.mxu0 0.0
        %v3029 = vand.u32 %v2739, 4294901760
        %3030 = vmatmul.mubr.f32.gmra.mrb[0].mxu0 %v3029
        %v3031 = vpop.f32.mrb[0].mxu0
        %v3032 = vadd.f32 %v2872, %v3031
        %v3033 = vpop.f32.mrb[0].mxu0
        %3034 = vmatprep.mubr.f32.mxu0 0.0
        %v3035 = vand.u32 %v2742, 4294901760
        %3036 = vmatmul.mubr.f32.gmra.mrb[0].mxu0 %v3035
        %v3037 = vpop.f32.mrb[0].mxu0
        %v3038 = vadd.f32 %v2882, %v3037
        %v3039 = vpop.f32.mrb[0].mxu0
        %3040 = vmatprep.mubr.f32.mxu0 0.0
        %v3041 = vand.u32 %v2745, 4294901760
        %3042 = vmatmul.mubr.f32.gmra.mrb[0].mxu0 %v3041
        %v3043 = vpop.f32.mrb[0].mxu0
        %v3044 = vadd.f32 %v2892, %v3043
        %v3045 = vpop.f32.mrb[0].mxu0
        %3046 = vmatprep.mubr.f32.mxu0 0.0
        %v3047 = vand.u32 %v2748, 4294901760
        %3048 = vmatmul.mubr.f32.gmra.mrb[0].mxu0 %v3047
        %v3049 = vpop.f32.mrb[0].mxu0
        %v3050 = vadd.f32 %v2902, %v3049
        %v3051 = vpop.f32.mrb[0].mxu0
        %3052 = vmatprep.mubr.f32.mxu0 0.0
        %v3053 = vand.u32 %v2751, 4294901760
        %3054 = vmatmul.mubr.f32.gmra.mrb[0].mxu0 %v3053
        %v3055 = vpop.f32.mrb[0].mxu0
        %v3056 = vadd.f32 %v2912, %v3055
        %v3057 = vpop.f32.mrb[0].mxu0
        %3058 = vmatprep.mubr.f32.mxu0 0.0
        %v3059 = vand.u32 %v2754, 4294901760
        %3060 = vmatmul.mubr.f32.gmra.mrb[0].mxu0 %v3059
        %v3061 = vpop.f32.mrb[0].mxu0
        %v3062 = vadd.f32 %v2922, %v3061
        %v3063 = vpop.f32.mrb[0].mxu0
        %3064 = vmatprep.mubr.f32.mxu0 0.0
        %v3065 = vand.u32 %v2757, 4294901760
        %3066 = vmatmul.mubr.f32.gmra.mrb[0].mxu0 %v3065
        %v3067 = vpop.f32.mrb[0].mxu0
        %v3068 = vadd.f32 %v2932, %v3067
        %v3069 = vpop.f32.mrb[0].mxu0
        %3070 = vdwg.mxu0
        %3071 = vmatprep.subr.mxu0 0.0
        %v3072 = vand.u32 %v327, 4294901760
        %v3073 = vsub.f32 %v327, %v3072
        %3074 = vmatpush1.msra.mxu0 %v3073
        %3075 = vmatprep.subr.mxu0 0.0
        %3076 = vmatpush1.msra.mxu0 0.0
        %3077 = vmatprep.subr.mxu0 0.0
        %3078 = vmatpush1.msra.mxu0 0.0
        %3079 = vmatprep.subr.mxu0 0.0
        %3080 = vmatpush1.msra.mxu0 0.0
        %3081 = vmatprep.subr.mxu0 0.0
        %3082 = vmatpush1.msra.mxu0 0.0
        %3083 = vmatprep.subr.mxu0 0.0
        %3084 = vmatpush1.msra.mxu0 0.0
        %3085 = vmatprep.subr.mxu0 0.0
        %3086 = vmatpush1.msra.mxu0 0.0
        %3087 = vmatprep.subr.mxu0 0.0
        %3088 = vmatpush1.msra.mxu0 0.0
        %3089 = vmatprep.subr.mxu0 0.0
        %3090 = vmatpush1.msra.mxu0 0.0
        %3091 = vmatprep.subr.mxu0 0.0
        %3092 = vmatpush1.msra.mxu0 0.0
        %3093 = vmatprep.subr.mxu0 0.0
        %3094 = vmatpush1.msra.mxu0 0.0
        %3095 = vmatprep.subr.mxu0 0.0
        %3096 = vmatpush1.msra.mxu0 0.0
        %3097 = vmatprep.subr.mxu0 0.0
        %3098 = vmatpush1.msra.mxu0 0.0
        %3099 = vmatprep.subr.mxu0 0.0
        %3100 = vmatpush1.msra.mxu0 0.0
        %3101 = vmatprep.subr.mxu0 0.0
        %3102 = vmatpush1.msra.mxu0 0.0
        %3103 = vmatprep.subr.mxu0 0.0
        %3104 = vmatpush1.msra.mxu0 0.0
        %3105 = vmatprep.subr.mxu0 0.0
        %3106 = vmatpush1.msra.mxu0 0.0
        %3107 = vmatprep.subr.mxu0 0.0
        %3108 = vmatpush1.msra.mxu0 0.0
        %3109 = vmatprep.subr.mxu0 0.0
        %3110 = vmatpush1.msra.mxu0 0.0
        %3111 = vmatprep.subr.mxu0 0.0
        %3112 = vmatpush1.msra.mxu0 0.0
        %3113 = vmatprep.subr.mxu0 0.0
        %3114 = vmatpush1.msra.mxu0 0.0
        %3115 = vmatprep.subr.mxu0 0.0
        %3116 = vmatpush1.msra.mxu0 0.0
        %3117 = vmatprep.subr.mxu0 0.0
        %3118 = vmatpush1.msra.mxu0 0.0
        %3119 = vmatprep.subr.mxu0 0.0
        %3120 = vmatpush1.msra.mxu0 0.0
        %3121 = vmatprep.subr.mxu0 0.0
        %3122 = vmatpush1.msra.mxu0 0.0
        %3123 = vmatprep.subr.mxu0 0.0
        %3124 = vmatpush1.msra.mxu0 0.0
        %3125 = vmatprep.subr.mxu0 0.0
        %3126 = vmatpush1.msra.mxu0 0.0
        %3127 = vmatprep.subr.mxu0 0.0
        %3128 = vmatpush1.msra.mxu0 0.0
        %3129 = vmatprep.subr.mxu0 0.0
        %3130 = vmatpush1.msra.mxu0 0.0
        %3131 = vmatprep.subr.mxu0 0.0
        %3132 = vmatpush1.msra.mxu0 0.0
        %3133 = vmatprep.subr.mxu0 0.0
        %3134 = vmatpush1.msra.mxu0 0.0
        %3135 = vmatprep.subr.mxu0 0.0
        %3136 = vmatpush1.msra.mxu0 0.0
        %3137 = vmatprep.mubr.f32.mxu0 0.0
        %v3138 = vand.u32 %v2727, 4294901760
        %v3139 = vsub.f32 %v2727, %v3138
        %3140 = vmatmul.mubr.f32.gmra.mrb[0].mxu0 %v3139
        %v3141 = vpop.f32.mrb[0].mxu0
        %v3142 = vadd.f32 %v3008, %v3141
        %v3143 = vpop.f32.mrb[0].mxu0
        %3144 = vmatprep.mubr.f32.mxu0 0.0
        %v3145 = vand.u32 %v2730, 4294901760
        %v3146 = vsub.f32 %v2730, %v3145
        %3147 = vmatmul.mubr.f32.gmra.mrb[0].mxu0 %v3146
        %v3148 = vpop.f32.mrb[0].mxu0
        %v3149 = vadd.f32 %v3014, %v3148
        %v3150 = vpop.f32.mrb[0].mxu0
        %3151 = vmatprep.mubr.f32.mxu0 0.0
        %v3152 = vand.u32 %v2733, 4294901760
        %v3153 = vsub.f32 %v2733, %v3152
        %3154 = vmatmul.mubr.f32.gmra.mrb[0].mxu0 %v3153
        %v3155 = vpop.f32.mrb[0].mxu0
        %v3156 = vadd.f32 %v3020, %v3155
        %v3157 = vpop.f32.mrb[0].mxu0
        %3158 = vmatprep.mubr.f32.mxu0 0.0
        %v3159 = vand.u32 %v2736, 4294901760
        %v3160 = vsub.f32 %v2736, %v3159
        %3161 = vmatmul.mubr.f32.gmra.mrb[0].mxu0 %v3160
        %v3162 = vpop.f32.mrb[0].mxu0
        %v3163 = vadd.f32 %v3026, %v3162
        %v3164 = vpop.f32.mrb[0].mxu0
        %3165 = vmatprep.mubr.f32.mxu0 0.0
        %v3166 = vand.u32 %v2739, 4294901760
        %v3167 = vsub.f32 %v2739, %v3166
        %3168 = vmatmul.mubr.f32.gmra.mrb[0].mxu0 %v3167
        %v3169 = vpop.f32.mrb[0].mxu0
        %v3170 = vadd.f32 %v3032, %v3169
        %v3171 = vpop.f32.mrb[0].mxu0
        %3172 = vmatprep.mubr.f32.mxu0 0.0
        %v3173 = vand.u32 %v2742, 4294901760
        %v3174 = vsub.f32 %v2742, %v3173
        %3175 = vmatmul.mubr.f32.gmra.mrb[0].mxu0 %v3174
        %v3176 = vpop.f32.mrb[0].mxu0
        %v3177 = vadd.f32 %v3038, %v3176
        %v3178 = vpop.f32.mrb[0].mxu0
        %3179 = vmatprep.mubr.f32.mxu0 0.0
        %v3180 = vand.u32 %v2745, 4294901760
        %v3181 = vsub.f32 %v2745, %v3180
        %3182 = vmatmul.mubr.f32.gmra.mrb[0].mxu0 %v3181
        %v3183 = vpop.f32.mrb[0].mxu0
        %v3184 = vadd.f32 %v3044, %v3183
        %v3185 = vpop.f32.mrb[0].mxu0
        %3186 = vmatprep.mubr.f32.mxu0 0.0
        %v3187 = vand.u32 %v2748, 4294901760
        %v3188 = vsub.f32 %v2748, %v3187
        %3189 = vmatmul.mubr.f32.gmra.mrb[0].mxu0 %v3188
        %v3190 = vpop.f32.mrb[0].mxu0
        %v3191 = vadd.f32 %v3050, %v3190
        %v3192 = vpop.f32.mrb[0].mxu0
        %3193 = vmatprep.mubr.f32.mxu0 0.0
        %v3194 = vand.u32 %v2751, 4294901760
        %v3195 = vsub.f32 %v2751, %v3194
        %3196 = vmatmul.mubr.f32.gmra.mrb[0].mxu0 %v3195
        %v3197 = vpop.f32.mrb[0].mxu0
        %v3198 = vadd.f32 %v3056, %v3197
        %v3199 = vpop.f32.mrb[0].mxu0
        %3200 = vmatprep.mubr.f32.mxu0 0.0
        %v3201 = vand.u32 %v2754, 4294901760
        %v3202 = vsub.f32 %v2754, %v3201
        %3203 = vmatmul.mubr.f32.gmra.mrb[0].mxu0 %v3202
        %v3204 = vpop.f32.mrb[0].mxu0
        %v3205 = vadd.f32 %v3062, %v3204
        %v3206 = vpop.f32.mrb[0].mxu0
        %3207 = vmatprep.mubr.f32.mxu0 0.0
        %v3208 = vand.u32 %v2757, 4294901760
        %v3209 = vsub.f32 %v2757, %v3208
        %3210 = vmatmul.mubr.f32.gmra.mrb[0].mxu0 %v3209
        %v3211 = vpop.f32.mrb[0].mxu0
        %v3212 = vadd.f32 %v3068, %v3211
        %v3213 = vpop.f32.mrb[0].mxu0
        %3214 = vdwg.mxu0
        %3215 = vmatprep.subr.mxu0 0.0
        %v3216 = vand.u32 %v327, 4294901760
        %3217 = vmatpush1.msra.mxu0 %v3216
        %3218 = vmatprep.subr.mxu0 0.0
        %3219 = vmatpush1.msra.mxu0 0.0
        %3220 = vmatprep.subr.mxu0 0.0
        %3221 = vmatpush1.msra.mxu0 0.0
        %3222 = vmatprep.subr.mxu0 0.0
        %3223 = vmatpush1.msra.mxu0 0.0
        %3224 = vmatprep.subr.mxu0 0.0
        %3225 = vmatpush1.msra.mxu0 0.0
        %3226 = vmatprep.subr.mxu0 0.0
        %3227 = vmatpush1.msra.mxu0 0.0
        %3228 = vmatprep.subr.mxu0 0.0
        %3229 = vmatpush1.msra.mxu0 0.0
        %3230 = vmatprep.subr.mxu0 0.0
        %3231 = vmatpush1.msra.mxu0 0.0
        %3232 = vmatprep.subr.mxu0 0.0
        %3233 = vmatpush1.msra.mxu0 0.0
        %3234 = vmatprep.subr.mxu0 0.0
        %3235 = vmatpush1.msra.mxu0 0.0
        %3236 = vmatprep.subr.mxu0 0.0
        %3237 = vmatpush1.msra.mxu0 0.0
        %3238 = vmatprep.subr.mxu0 0.0
        %3239 = vmatpush1.msra.mxu0 0.0
        %3240 = vmatprep.subr.mxu0 0.0
        %3241 = vmatpush1.msra.mxu0 0.0
        %3242 = vmatprep.subr.mxu0 0.0
        %3243 = vmatpush1.msra.mxu0 0.0
        %3244 = vmatprep.subr.mxu0 0.0
        %3245 = vmatpush1.msra.mxu0 0.0
        %3246 = vmatprep.subr.mxu0 0.0
        %3247 = vmatpush1.msra.mxu0 0.0
        %3248 = vmatprep.subr.mxu0 0.0
        %3249 = vmatpush1.msra.mxu0 0.0
        %3250 = vmatprep.subr.mxu0 0.0
        %3251 = vmatpush1.msra.mxu0 0.0
        %3252 = vmatprep.subr.mxu0 0.0
        %3253 = vmatpush1.msra.mxu0 0.0
        %3254 = vmatprep.subr.mxu0 0.0
        %3255 = vmatpush1.msra.mxu0 0.0
        %3256 = vmatprep.subr.mxu0 0.0
        %3257 = vmatpush1.msra.mxu0 0.0
        %3258 = vmatprep.subr.mxu0 0.0
        %3259 = vmatpush1.msra.mxu0 0.0
        %3260 = vmatprep.subr.mxu0 0.0
        %3261 = vmatpush1.msra.mxu0 0.0
        %3262 = vmatprep.subr.mxu0 0.0
        %3263 = vmatpush1.msra.mxu0 0.0
        %3264 = vmatprep.subr.mxu0 0.0
        %3265 = vmatpush1.msra.mxu0 0.0
        %3266 = vmatprep.subr.mxu0 0.0
        %3267 = vmatpush1.msra.mxu0 0.0
        %3268 = vmatprep.subr.mxu0 0.0
        %3269 = vmatpush1.msra.mxu0 0.0
        %3270 = vmatprep.subr.mxu0 0.0
        %3271 = vmatpush1.msra.mxu0 0.0
        %3272 = vmatprep.subr.mxu0 0.0
        %3273 = vmatpush1.msra.mxu0 0.0
        %3274 = vmatprep.subr.mxu0 0.0
        %3275 = vmatpush1.msra.mxu0 0.0
        %3276 = vmatprep.subr.mxu0 0.0
        %3277 = vmatpush1.msra.mxu0 0.0
        %3278 = vmatprep.subr.mxu0 0.0
        %3279 = vmatpush1.msra.mxu0 0.0
        %3280 = vmatprep.mubr.f32.mxu0 0.0
        %v3281 = vand.u32 %v2727, 4294901760
        %v3282 = vsub.f32 %v2727, %v3281
        %v3283 = vand.u32 %v3282, 4294901760
        %3284 = vmatmul.mubr.f32.gmra.mrb[0].mxu0 %v3283
        %v3285 = vpop.f32.mrb[0].mxu0
        %v3286 = vadd.f32 %v3142, %v3285
        %v3287 = vpop.f32.mrb[0].mxu0
        %3288 = vmatprep.mubr.f32.mxu0 0.0
        %v3289 = vand.u32 %v2730, 4294901760
        %v3290 = vsub.f32 %v2730, %v3289
        %v3291 = vand.u32 %v3290, 4294901760
        %3292 = vmatmul.mubr.f32.gmra.mrb[0].mxu0 %v3291
        %v3293 = vpop.f32.mrb[0].mxu0
        %v3294 = vadd.f32 %v3149, %v3293
        %v3295 = vpop.f32.mrb[0].mxu0
        %3296 = vmatprep.mubr.f32.mxu0 0.0
        %v3297 = vand.u32 %v2733, 4294901760
        %v3298 = vsub.f32 %v2733, %v3297
        %v3299 = vand.u32 %v3298, 4294901760
        %3300 = vmatmul.mubr.f32.gmra.mrb[0].mxu0 %v3299
        %v3301 = vpop.f32.mrb[0].mxu0
        %v3302 = vadd.f32 %v3156, %v3301
        %v3303 = vpop.f32.mrb[0].mxu0
        %3304 = vmatprep.mubr.f32.mxu0 0.0
        %v3305 = vand.u32 %v2736, 4294901760
        %v3306 = vsub.f32 %v2736, %v3305
        %v3307 = vand.u32 %v3306, 4294901760
        %3308 = vmatmul.mubr.f32.gmra.mrb[0].mxu0 %v3307
        %v3309 = vpop.f32.mrb[0].mxu0
        %v3310 = vadd.f32 %v3163, %v3309
        %v3311 = vpop.f32.mrb[0].mxu0
        %3312 = vmatprep.mubr.f32.mxu0 0.0
        %v3313 = vand.u32 %v2739, 4294901760
        %v3314 = vsub.f32 %v2739, %v3313
        %v3315 = vand.u32 %v3314, 4294901760
        %3316 = vmatmul.mubr.f32.gmra.mrb[0].mxu0 %v3315
        %v3317 = vpop.f32.mrb[0].mxu0
        %v3318 = vadd.f32 %v3170, %v3317
        %v3319 = vpop.f32.mrb[0].mxu0
        %3320 = vmatprep.mubr.f32.mxu0 0.0
        %v3321 = vand.u32 %v2742, 4294901760
        %v3322 = vsub.f32 %v2742, %v3321
        %v3323 = vand.u32 %v3322, 4294901760
        %3324 = vmatmul.mubr.f32.gmra.mrb[0].mxu0 %v3323
        %v3325 = vpop.f32.mrb[0].mxu0
        %v3326 = vadd.f32 %v3177, %v3325
        %v3327 = vpop.f32.mrb[0].mxu0
        %3328 = vmatprep.mubr.f32.mxu0 0.0
        %v3329 = vand.u32 %v2745, 4294901760
        %v3330 = vsub.f32 %v2745, %v3329
        %v3331 = vand.u32 %v3330, 4294901760
        %3332 = vmatmul.mubr.f32.gmra.mrb[0].mxu0 %v3331
        %v3333 = vpop.f32.mrb[0].mxu0
        %v3334 = vadd.f32 %v3184, %v3333
        %v3335 = vpop.f32.mrb[0].mxu0
        %3336 = vmatprep.mubr.f32.mxu0 0.0
        %v3337 = vand.u32 %v2748, 4294901760
        %v3338 = vsub.f32 %v2748, %v3337
        %v3339 = vand.u32 %v3338, 4294901760
        %3340 = vmatmul.mubr.f32.gmra.mrb[0].mxu0 %v3339
        %v3341 = vpop.f32.mrb[0].mxu0
        %v3342 = vadd.f32 %v3191, %v3341
        %v3343 = vpop.f32.mrb[0].mxu0
        %3344 = vmatprep.mubr.f32.mxu0 0.0
        %v3345 = vand.u32 %v2751, 4294901760
        %v3346 = vsub.f32 %v2751, %v3345
        %v3347 = vand.u32 %v3346, 4294901760
        %3348 = vmatmul.mubr.f32.gmra.mrb[0].mxu0 %v3347
        %v3349 = vpop.f32.mrb[0].mxu0
        %v3350 = vadd.f32 %v3198, %v3349
        %v3351 = vpop.f32.mrb[0].mxu0
        %3352 = vmatprep.mubr.f32.mxu0 0.0
        %v3353 = vand.u32 %v2754, 4294901760
        %v3354 = vsub.f32 %v2754, %v3353
        %v3355 = vand.u32 %v3354, 4294901760
        %3356 = vmatmul.mubr.f32.gmra.mrb[0].mxu0 %v3355
        %v3357 = vpop.f32.mrb[0].mxu0
        %v3358 = vadd.f32 %v3205, %v3357
        %v3359 = vpop.f32.mrb[0].mxu0
        %3360 = vmatprep.mubr.f32.mxu0 0.0
        %v3361 = vand.u32 %v2757, 4294901760
        %v3362 = vsub.f32 %v2757, %v3361
        %v3363 = vand.u32 %v3362, 4294901760
        %3364 = vmatmul.mubr.f32.gmra.mrb[0].mxu0 %v3363
        %v3365 = vpop.f32.mrb[0].mxu0
        %v3366 = vadd.f32 %v3212, %v3365
        %v3367 = vpop.f32.mrb[0].mxu0
        %3368 = vdwg.mxu0
        %3369 = vmatprep.subr.mxu0 0.0
        %v3370 = vand.u32 %v327, 4294901760
        %v3371 = vsub.f32 %v327, %v3370
        %v3372 = vand.u32 %v3371, 4294901760
        %3373 = vmatpush1.msra.mxu0 %v3372
        %3374 = vmatprep.subr.mxu0 0.0
        %3375 = vmatpush1.msra.mxu0 0.0
        %3376 = vmatprep.subr.mxu0 0.0
        %3377 = vmatpush1.msra.mxu0 0.0
        %3378 = vmatprep.subr.mxu0 0.0
        %3379 = vmatpush1.msra.mxu0 0.0
        %3380 = vmatprep.subr.mxu0 0.0
        %3381 = vmatpush1.msra.mxu0 0.0
        %3382 = vmatprep.subr.mxu0 0.0
        %3383 = vmatpush1.msra.mxu0 0.0
        %3384 = vmatprep.subr.mxu0 0.0
        %3385 = vmatpush1.msra.mxu0 0.0
        %3386 = vmatprep.subr.mxu0 0.0
        %3387 = vmatpush1.msra.mxu0 0.0
        %3388 = vmatprep.subr.mxu0 0.0
        %3389 = vmatpush1.msra.mxu0 0.0
        %3390 = vmatprep.subr.mxu0 0.0
        %3391 = vmatpush1.msra.mxu0 0.0
        %3392 = vmatprep.subr.mxu0 0.0
        %3393 = vmatpush1.msra.mxu0 0.0
        %3394 = vmatprep.subr.mxu0 0.0
        %3395 = vmatpush1.msra.mxu0 0.0
        %3396 = vmatprep.subr.mxu0 0.0
        %3397 = vmatpush1.msra.mxu0 0.0
        %3398 = vmatprep.subr.mxu0 0.0
        %3399 = vmatpush1.msra.mxu0 0.0
        %3400 = vmatprep.subr.mxu0 0.0
        %3401 = vmatpush1.msra.mxu0 0.0
        %3402 = vmatprep.subr.mxu0 0.0
        %3403 = vmatpush1.msra.mxu0 0.0
        %3404 = vmatprep.subr.mxu0 0.0
        %3405 = vmatpush1.msra.mxu0 0.0
        %3406 = vmatprep.subr.mxu0 0.0
        %3407 = vmatpush1.msra.mxu0 0.0
        %3408 = vmatprep.subr.mxu0 0.0
        %3409 = vmatpush1.msra.mxu0 0.0
        %3410 = vmatprep.subr.mxu0 0.0
        %3411 = vmatpush1.msra.mxu0 0.0
        %3412 = vmatprep.subr.mxu0 0.0
        %3413 = vmatpush1.msra.mxu0 0.0
        %3414 = vmatprep.subr.mxu0 0.0
        %3415 = vmatpush1.msra.mxu0 0.0
        %3416 = vmatprep.subr.mxu0 0.0
        %3417 = vmatpush1.msra.mxu0 0.0
        %3418 = vmatprep.subr.mxu0 0.0
        %3419 = vmatpush1.msra.mxu0 0.0
        %3420 = vmatprep.subr.mxu0 0.0
        %3421 = vmatpush1.msra.mxu0 0.0
        %3422 = vmatprep.subr.mxu0 0.0
        %3423 = vmatpush1.msra.mxu0 0.0
        %3424 = vmatprep.subr.mxu0 0.0
        %3425 = vmatpush1.msra.mxu0 0.0
        %3426 = vmatprep.subr.mxu0 0.0
        %3427 = vmatpush1.msra.mxu0 0.0
        %3428 = vmatprep.subr.mxu0 0.0
        %3429 = vmatpush1.msra.mxu0 0.0
        %3430 = vmatprep.subr.mxu0 0.0
        %3431 = vmatpush1.msra.mxu0 0.0
        %3432 = vmatprep.subr.mxu0 0.0
        %3433 = vmatpush1.msra.mxu0 0.0
        %3434 = vmatprep.subr.mxu0 0.0
        %3435 = vmatpush1.msra.mxu0 0.0
        %3436 = vmatprep.mubr.f32.mxu0 0.0
        %v3437 = vand.u32 %v2727, 4294901760
        %3438 = vmatmul.mubr.f32.gmra.mrb[0].mxu0 %v3437
        %v3439 = vpop.f32.mrb[0].mxu0
        %v3440 = vadd.f32 %v3286, %v3439
        %v3441 = vpop.f32.mrb[0].mxu0
        %3442 = vmatprep.mubr.f32.mxu0 0.0
        %v3443 = vand.u32 %v2730, 4294901760
        %3444 = vmatmul.mubr.f32.gmra.mrb[0].mxu0 %v3443
        %v3445 = vpop.f32.mrb[0].mxu0
        %v3446 = vadd.f32 %v3294, %v3445
        %v3447 = vpop.f32.mrb[0].mxu0
        %3448 = vmatprep.mubr.f32.mxu0 0.0
        %v3449 = vand.u32 %v2733, 4294901760
        %3450 = vmatmul.mubr.f32.gmra.mrb[0].mxu0 %v3449
        %v3451 = vpop.f32.mrb[0].mxu0
        %v3452 = vadd.f32 %v3302, %v3451
        %v3453 = vpop.f32.mrb[0].mxu0
        %3454 = vmatprep.mubr.f32.mxu0 0.0
        %v3455 = vand.u32 %v2736, 4294901760
        %3456 = vmatmul.mubr.f32.gmra.mrb[0].mxu0 %v3455
        %v3457 = vpop.f32.mrb[0].mxu0
        %v3458 = vadd.f32 %v3310, %v3457
        %v3459 = vpop.f32.mrb[0].mxu0
        %3460 = vmatprep.mubr.f32.mxu0 0.0
        %v3461 = vand.u32 %v2739, 4294901760
        %3462 = vmatmul.mubr.f32.gmra.mrb[0].mxu0 %v3461
        %v3463 = vpop.f32.mrb[0].mxu0
        %v3464 = vadd.f32 %v3318, %v3463
        %v3465 = vpop.f32.mrb[0].mxu0
        %3466 = vmatprep.mubr.f32.mxu0 0.0
        %v3467 = vand.u32 %v2742, 4294901760
        %3468 = vmatmul.mubr.f32.gmra.mrb[0].mxu0 %v3467
        %v3469 = vpop.f32.mrb[0].mxu0
        %v3470 = vadd.f32 %v3326, %v3469
        %v3471 = vpop.f32.mrb[0].mxu0
        %3472 = vmatprep.mubr.f32.mxu0 0.0
        %v3473 = vand.u32 %v2745, 4294901760
        %3474 = vmatmul.mubr.f32.gmra.mrb[0].mxu0 %v3473
        %v3475 = vpop.f32.mrb[0].mxu0
        %v3476 = vadd.f32 %v3334, %v3475
        %v3477 = vpop.f32.mrb[0].mxu0
        %3478 = vmatprep.mubr.f32.mxu0 0.0
        %v3479 = vand.u32 %v2748, 4294901760
        %3480 = vmatmul.mubr.f32.gmra.mrb[0].mxu0 %v3479
        %v3481 = vpop.f32.mrb[0].mxu0
        %v3482 = vadd.f32 %v3342, %v3481
        %v3483 = vpop.f32.mrb[0].mxu0
        %3484 = vmatprep.mubr.f32.mxu0 0.0
        %v3485 = vand.u32 %v2751, 4294901760
        %3486 = vmatmul.mubr.f32.gmra.mrb[0].mxu0 %v3485
        %v3487 = vpop.f32.mrb[0].mxu0
        %v3488 = vadd.f32 %v3350, %v3487
        %v3489 = vpop.f32.mrb[0].mxu0
        %3490 = vmatprep.mubr.f32.mxu0 0.0
        %v3491 = vand.u32 %v2754, 4294901760
        %3492 = vmatmul.mubr.f32.gmra.mrb[0].mxu0 %v3491
        %v3493 = vpop.f32.mrb[0].mxu0
        %v3494 = vadd.f32 %v3358, %v3493
        %v3495 = vpop.f32.mrb[0].mxu0
        %3496 = vmatprep.mubr.f32.mxu0 0.0
        %v3497 = vand.u32 %v2757, 4294901760
        %3498 = vmatmul.mubr.f32.gmra.mrb[0].mxu0 %v3497
        %v3499 = vpop.f32.mrb[0].mxu0
        %v3500 = vadd.f32 %v3366, %v3499
        %v3501 = vpop.f32.mrb[0].mxu0
        %3502 = vdwg.mxu0
        %3503 = vmatprep.subr.mxu0 0.0
        %v3504 = vand.u32 %v327, 4294901760
        %3505 = vmatpush1.msra.mxu0 %v3504
        %3506 = vmatprep.subr.mxu0 0.0
        %3507 = vmatpush1.msra.mxu0 0.0
        %3508 = vmatprep.subr.mxu0 0.0
        %3509 = vmatpush1.msra.mxu0 0.0
        %3510 = vmatprep.subr.mxu0 0.0
        %3511 = vmatpush1.msra.mxu0 0.0
        %3512 = vmatprep.subr.mxu0 0.0
        %3513 = vmatpush1.msra.mxu0 0.0
        %3514 = vmatprep.subr.mxu0 0.0
        %3515 = vmatpush1.msra.mxu0 0.0
        %3516 = vmatprep.subr.mxu0 0.0
        %3517 = vmatpush1.msra.mxu0 0.0
        %3518 = vmatprep.subr.mxu0 0.0
        %3519 = vmatpush1.msra.mxu0 0.0
        %3520 = vmatprep.subr.mxu0 0.0
        %3521 = vmatpush1.msra.mxu0 0.0
        %3522 = vmatprep.subr.mxu0 0.0
        %3523 = vmatpush1.msra.mxu0 0.0
        %3524 = vmatprep.subr.mxu0 0.0
        %3525 = vmatpush1.msra.mxu0 0.0
        %3526 = vmatprep.subr.mxu0 0.0
        %3527 = vmatpush1.msra.mxu0 0.0
        %3528 = vmatprep.subr.mxu0 0.0
        %3529 = vmatpush1.msra.mxu0 0.0
        %3530 = vmatprep.subr.mxu0 0.0
        %3531 = vmatpush1.msra.mxu0 0.0
        %3532 = vmatprep.subr.mxu0 0.0
        %3533 = vmatpush1.msra.mxu0 0.0
        %3534 = vmatprep.subr.mxu0 0.0
        %3535 = vmatpush1.msra.mxu0 0.0
        %3536 = vmatprep.subr.mxu0 0.0
        %3537 = vmatpush1.msra.mxu0 0.0
        %3538 = vmatprep.subr.mxu0 0.0
        %3539 = vmatpush1.msra.mxu0 0.0
        %3540 = vmatprep.subr.mxu0 0.0
        %3541 = vmatpush1.msra.mxu0 0.0
        %3542 = vmatprep.subr.mxu0 0.0
        %3543 = vmatpush1.msra.mxu0 0.0
        %3544 = vmatprep.subr.mxu0 0.0
        %3545 = vmatpush1.msra.mxu0 0.0
        %3546 = vmatprep.subr.mxu0 0.0
        %3547 = vmatpush1.msra.mxu0 0.0
        %3548 = vmatprep.subr.mxu0 0.0
        %3549 = vmatpush1.msra.mxu0 0.0
        %3550 = vmatprep.subr.mxu0 0.0
        %3551 = vmatpush1.msra.mxu0 0.0
        %3552 = vmatprep.subr.mxu0 0.0
        %3553 = vmatpush1.msra.mxu0 0.0
        %3554 = vmatprep.subr.mxu0 0.0
        %3555 = vmatpush1.msra.mxu0 0.0
        %3556 = vmatprep.subr.mxu0 0.0
        %3557 = vmatpush1.msra.mxu0 0.0
        %3558 = vmatprep.subr.mxu0 0.0
        %3559 = vmatpush1.msra.mxu0 0.0
        %3560 = vmatprep.subr.mxu0 0.0
        %3561 = vmatpush1.msra.mxu0 0.0
        %3562 = vmatprep.subr.mxu0 0.0
        %3563 = vmatpush1.msra.mxu0 0.0
        %3564 = vmatprep.subr.mxu0 0.0
        %3565 = vmatpush1.msra.mxu0 0.0
        %3566 = vmatprep.subr.mxu0 0.0
        %3567 = vmatpush1.msra.mxu0 0.0
        %3568 = vmatprep.mubr.f32.mxu0 0.0
        %v3569 = vand.u32 %v2727, 4294901760
        %3570 = vmatmul.mubr.f32.gmra.mrb[0].mxu0 %v3569
        %v3571 = vpop.f32.mrb[0].mxu0
        %v3572 = vadd.f32 %v3440, %v3571
        %v3573 = vpop.f32.mrb[0].mxu0
        %3574 = vmatprep.mubr.f32.mxu0 0.0
        %v3575 = vand.u32 %v2730, 4294901760
        %3576 = vmatmul.mubr.f32.gmra.mrb[0].mxu0 %v3575
        %v3577 = vpop.f32.mrb[0].mxu0
        %v3578 = vadd.f32 %v3446, %v3577
        %v3579 = vpop.f32.mrb[0].mxu0
        %3580 = vmatprep.mubr.f32.mxu0 0.0
        %v3581 = vand.u32 %v2733, 4294901760
        %3582 = vmatmul.mubr.f32.gmra.mrb[0].mxu0 %v3581
        %v3583 = vpop.f32.mrb[0].mxu0
        %v3584 = vadd.f32 %v3452, %v3583
        %v3585 = vpop.f32.mrb[0].mxu0
        %3586 = vmatprep.mubr.f32.mxu0 0.0
        %v3587 = vand.u32 %v2736, 4294901760
        %3588 = vmatmul.mubr.f32.gmra.mrb[0].mxu0 %v3587
        %v3589 = vpop.f32.mrb[0].mxu0
        %v3590 = vadd.f32 %v3458, %v3589
        %v3591 = vpop.f32.mrb[0].mxu0
        %3592 = vmatprep.mubr.f32.mxu0 0.0
        %v3593 = vand.u32 %v2739, 4294901760
        %3594 = vmatmul.mubr.f32.gmra.mrb[0].mxu0 %v3593
        %v3595 = vpop.f32.mrb[0].mxu0
        %v3596 = vadd.f32 %v3464, %v3595
        %v3597 = vpop.f32.mrb[0].mxu0
        %3598 = vmatprep.mubr.f32.mxu0 0.0
        %v3599 = vand.u32 %v2742, 4294901760
        %3600 = vmatmul.mubr.f32.gmra.mrb[0].mxu0 %v3599
        %v3601 = vpop.f32.mrb[0].mxu0
        %v3602 = vadd.f32 %v3470, %v3601
        %v3603 = vpop.f32.mrb[0].mxu0
        %3604 = vmatprep.mubr.f32.mxu0 0.0
        %v3605 = vand.u32 %v2745, 4294901760
        %3606 = vmatmul.mubr.f32.gmra.mrb[0].mxu0 %v3605
        %v3607 = vpop.f32.mrb[0].mxu0
        %v3608 = vadd.f32 %v3476, %v3607
        %v3609 = vpop.f32.mrb[0].mxu0
        %3610 = vmatprep.mubr.f32.mxu0 0.0
        %v3611 = vand.u32 %v2748, 4294901760
        %3612 = vmatmul.mubr.f32.gmra.mrb[0].mxu0 %v3611
        %v3613 = vpop.f32.mrb[0].mxu0
        %v3614 = vadd.f32 %v3482, %v3613
        %v3615 = vpop.f32.mrb[0].mxu0
        %3616 = vmatprep.mubr.f32.mxu0 0.0
        %v3617 = vand.u32 %v2751, 4294901760
        %3618 = vmatmul.mubr.f32.gmra.mrb[0].mxu0 %v3617
        %v3619 = vpop.f32.mrb[0].mxu0
        %v3620 = vadd.f32 %v3488, %v3619
        %v3621 = vpop.f32.mrb[0].mxu0
        %3622 = vmatprep.mubr.f32.mxu0 0.0
        %v3623 = vand.u32 %v2754, 4294901760
        %3624 = vmatmul.mubr.f32.gmra.mrb[0].mxu0 %v3623
        %v3625 = vpop.f32.mrb[0].mxu0
        %v3626 = vadd.f32 %v3494, %v3625
        %v3627 = vpop.f32.mrb[0].mxu0
        %3628 = vmatprep.mubr.f32.mxu0 0.0
        %v3629 = vand.u32 %v2757, 4294901760
        %3630 = vmatmul.mubr.f32.gmra.mrb[0].mxu0 %v3629
        %v3631 = vpop.f32.mrb[0].mxu0
        %v3632 = vadd.f32 %v3500, %v3631
        %v3633 = vpop.f32.mrb[0].mxu0
        %3634 = vdwg.mxu0
        %v3635 = vmax.f32 %v1581, 1.1754944e-38
        %v3636 = vmax.f32 %v1587, 1.1754944e-38
        %v3637 = vmax.f32 %v1593, 1.1754944e-38
        %v3638 = vmax.f32 %v1599, 1.1754944e-38
        %v3639 = vmax.f32 %v1605, 1.1754944e-38
        %v3640 = vmax.f32 %v1611, 1.1754944e-38
        %v3641 = vmax.f32 %v1617, 1.1754944e-38
        %v3642 = vmax.f32 %v1623, 1.1754944e-38
        %v3643 = vmax.f32 %v1629, 1.1754944e-38
        %v3644 = vmax.f32 %v1635, 1.1754944e-38
        %v3645 = vmax.f32 %v1641, 1.1754944e-38
        %v3646 = vlog2.pop %v3635
        %v3647 = vmul.f32 %v3646, 0.6931472
        %v3648 = vlog2.pop %v3636
        %v3649 = vmul.f32 %v3648, 0.6931472
        %v3650 = vlog2.pop %v3637
        %v3651 = vmul.f32 %v3650, 0.6931472
        %v3652 = vlog2.pop %v3638
        %v3653 = vmul.f32 %v3652, 0.6931472
        %v3654 = vlog2.pop %v3639
        %v3655 = vmul.f32 %v3654, 0.6931472
        %v3656 = vlog2.pop %v3640
        %v3657 = vmul.f32 %v3656, 0.6931472
        %v3658 = vlog2.pop %v3641
        %v3659 = vmul.f32 %v3658, 0.6931472
        %v3660 = vlog2.pop %v3642
        %v3661 = vmul.f32 %v3660, 0.6931472
        %v3662 = vlog2.pop %v3643
        %v3663 = vmul.f32 %v3662, 0.6931472
        %v3664 = vlog2.pop %v3644
        %v3665 = vmul.f32 %v3664, 0.6931472
        %v3666 = vlog2.pop %v3645
        %v3667 = vmul.f32 %v3666, 0.6931472
        %v3668 = vmul.f32 %v519, 4.0
        %v3669 = vmul.f32 %v521, 4.0
        %v3670 = vmul.f32 %v523, 4.0
        %v3671 = vmul.f32 %v525, 4.0
        %v3672 = vmul.f32 %v527, 4.0
        %v3673 = vmul.f32 %v529, 4.0
        %v3674 = vmul.f32 %v531, 4.0
        %v3675 = vmul.f32 %v533, 4.0
        %v3676 = vmul.f32 %v535, 4.0
        %v3677 = vmul.f32 %v537, 4.0
        %v3678 = vmul.f32 %v539, 4.0
        %v3680 = vsel %vm331, %v3647, 0
        %v3683 = vsel %vm331, %v3649, 0
        %v3686 = vsel %vm331, %v3651, 0
        %v3689 = vsel %vm331, %v3653, 0
        %v3692 = vsel %vm331, %v3655, 0
        %v3695 = vsel %vm331, %v3657, 0
        %v3698 = vsel %vm331, %v3659, 0
        %v3701 = vsel %vm331, %v3661, 0
        %v3704 = vsel %vm331, %v3663, 0
        %v3707 = vsel %vm331, %v3665, 0
        %v3710 = vsel %vm331, %v3667, 0
        %3712 = vmatprep.subr.mxu0 0.0
        %v3713 = vand.u32 %v327, 4294901760
        %3714 = vmatpush1.msra.mxu0 %v3713
        %3715 = vmatprep.subr.mxu0 0.0
        %3716 = vmatpush1.msra.mxu0 0.0
        %3717 = vmatprep.subr.mxu0 0.0
        %3718 = vmatpush1.msra.mxu0 0.0
        %3719 = vmatprep.subr.mxu0 0.0
        %3720 = vmatpush1.msra.mxu0 0.0
        %3721 = vmatprep.subr.mxu0 0.0
        %3722 = vmatpush1.msra.mxu0 0.0
        %3723 = vmatprep.subr.mxu0 0.0
        %3724 = vmatpush1.msra.mxu0 0.0
        %3725 = vmatprep.subr.mxu0 0.0
        %3726 = vmatpush1.msra.mxu0 0.0
        %3727 = vmatprep.subr.mxu0 0.0
        %3728 = vmatpush1.msra.mxu0 0.0
        %3729 = vmatprep.subr.mxu0 0.0
        %3730 = vmatpush1.msra.mxu0 0.0
        %3731 = vmatprep.subr.mxu0 0.0
        %3732 = vmatpush1.msra.mxu0 0.0
        %3733 = vmatprep.subr.mxu0 0.0
        %3734 = vmatpush1.msra.mxu0 0.0
        %3735 = vmatprep.subr.mxu0 0.0
        %3736 = vmatpush1.msra.mxu0 0.0
        %3737 = vmatprep.subr.mxu0 0.0
        %3738 = vmatpush1.msra.mxu0 0.0
        %3739 = vmatprep.subr.mxu0 0.0
        %3740 = vmatpush1.msra.mxu0 0.0
        %3741 = vmatprep.subr.mxu0 0.0
        %3742 = vmatpush1.msra.mxu0 0.0
        %3743 = vmatprep.subr.mxu0 0.0
        %3744 = vmatpush1.msra.mxu0 0.0
        %3745 = vmatprep.subr.mxu0 0.0
        %3746 = vmatpush1.msra.mxu0 0.0
        %3747 = vmatprep.subr.mxu0 0.0
        %3748 = vmatpush1.msra.mxu0 0.0
        %3749 = vmatprep.subr.mxu0 0.0
        %3750 = vmatpush1.msra.mxu0 0.0
        %3751 = vmatprep.subr.mxu0 0.0
        %3752 = vmatpush1.msra.mxu0 0.0
        %3753 = vmatprep.subr.mxu0 0.0
        %3754 = vmatpush1.msra.mxu0 0.0
        %3755 = vmatprep.subr.mxu0 0.0
        %3756 = vmatpush1.msra.mxu0 0.0
        %3757 = vmatprep.subr.mxu0 0.0
        %3758 = vmatpush1.msra.mxu0 0.0
        %3759 = vmatprep.subr.mxu0 0.0
        %3760 = vmatpush1.msra.mxu0 0.0
        %3761 = vmatprep.subr.mxu0 0.0
        %3762 = vmatpush1.msra.mxu0 0.0
        %3763 = vmatprep.subr.mxu0 0.0
        %3764 = vmatpush1.msra.mxu0 0.0
        %3765 = vmatprep.subr.mxu0 0.0
        %3766 = vmatpush1.msra.mxu0 0.0
        %3767 = vmatprep.subr.mxu0 0.0
        %3768 = vmatpush1.msra.mxu0 0.0
        %3769 = vmatprep.subr.mxu0 0.0
        %3770 = vmatpush1.msra.mxu0 0.0
        %3771 = vmatprep.subr.mxu0 0.0
        %3772 = vmatpush1.msra.mxu0 0.0
        %3773 = vmatprep.subr.mxu0 0.0
        %3774 = vmatpush1.msra.mxu0 0.0
        %3775 = vmatprep.subr.mxu0 0.0
        %3776 = vmatpush1.msra.mxu0 0.0
        %3777 = vmatprep.mubr.f32.mxu0 0.0
        %v3778 = vand.u32 %v3680, 4294901760
        %v3779 = vsub.f32 %v3680, %v3778
        %v3780 = vand.u32 %v3779, 4294901760
        %v3781 = vsub.f32 %v3779, %v3780
        %v3782 = vand.u32 %v3781, 4294901760
        %3783 = vmatmul.mubr.f32.gmra.mrb[0].mxu0 %v3782
        %v3784 = vpop.f32.mrb[0].mxu0
        %v3785 = vadd.f32 %v3668, %v3784
        %v3786 = vpop.f32.mrb[0].mxu0
        %3787 = vmatprep.mubr.f32.mxu0 0.0
        %v3788 = vand.u32 %v3683, 4294901760
        %v3789 = vsub.f32 %v3683, %v3788
        %v3790 = vand.u32 %v3789, 4294901760
        %v3791 = vsub.f32 %v3789, %v3790
        %v3792 = vand.u32 %v3791, 4294901760
        %3793 = vmatmul.mubr.f32.gmra.mrb[0].mxu0 %v3792
        %v3794 = vpop.f32.mrb[0].mxu0
        %v3795 = vadd.f32 %v3669, %v3794
        %v3796 = vpop.f32.mrb[0].mxu0
        %3797 = vmatprep.mubr.f32.mxu0 0.0
        %v3798 = vand.u32 %v3686, 4294901760
        %v3799 = vsub.f32 %v3686, %v3798
        %v3800 = vand.u32 %v3799, 4294901760
        %v3801 = vsub.f32 %v3799, %v3800
        %v3802 = vand.u32 %v3801, 4294901760
        %3803 = vmatmul.mubr.f32.gmra.mrb[0].mxu0 %v3802
        %v3804 = vpop.f32.mrb[0].mxu0
        %v3805 = vadd.f32 %v3670, %v3804
        %v3806 = vpop.f32.mrb[0].mxu0
        %3807 = vmatprep.mubr.f32.mxu0 0.0
        %v3808 = vand.u32 %v3689, 4294901760
        %v3809 = vsub.f32 %v3689, %v3808
        %v3810 = vand.u32 %v3809, 4294901760
        %v3811 = vsub.f32 %v3809, %v3810
        %v3812 = vand.u32 %v3811, 4294901760
        %3813 = vmatmul.mubr.f32.gmra.mrb[0].mxu0 %v3812
        %v3814 = vpop.f32.mrb[0].mxu0
        %v3815 = vadd.f32 %v3671, %v3814
        %v3816 = vpop.f32.mrb[0].mxu0
        %3817 = vmatprep.mubr.f32.mxu0 0.0
        %v3818 = vand.u32 %v3692, 4294901760
        %v3819 = vsub.f32 %v3692, %v3818
        %v3820 = vand.u32 %v3819, 4294901760
        %v3821 = vsub.f32 %v3819, %v3820
        %v3822 = vand.u32 %v3821, 4294901760
        %3823 = vmatmul.mubr.f32.gmra.mrb[0].mxu0 %v3822
        %v3824 = vpop.f32.mrb[0].mxu0
        %v3825 = vadd.f32 %v3672, %v3824
        %v3826 = vpop.f32.mrb[0].mxu0
        %3827 = vmatprep.mubr.f32.mxu0 0.0
        %v3828 = vand.u32 %v3695, 4294901760
        %v3829 = vsub.f32 %v3695, %v3828
        %v3830 = vand.u32 %v3829, 4294901760
        %v3831 = vsub.f32 %v3829, %v3830
        %v3832 = vand.u32 %v3831, 4294901760
        %3833 = vmatmul.mubr.f32.gmra.mrb[0].mxu0 %v3832
        %v3834 = vpop.f32.mrb[0].mxu0
        %v3835 = vadd.f32 %v3673, %v3834
        %v3836 = vpop.f32.mrb[0].mxu0
        %3837 = vmatprep.mubr.f32.mxu0 0.0
        %v3838 = vand.u32 %v3698, 4294901760
        %v3839 = vsub.f32 %v3698, %v3838
        %v3840 = vand.u32 %v3839, 4294901760
        %v3841 = vsub.f32 %v3839, %v3840
        %v3842 = vand.u32 %v3841, 4294901760
        %3843 = vmatmul.mubr.f32.gmra.mrb[0].mxu0 %v3842
        %v3844 = vpop.f32.mrb[0].mxu0
        %v3845 = vadd.f32 %v3674, %v3844
        %v3846 = vpop.f32.mrb[0].mxu0
        %3847 = vmatprep.mubr.f32.mxu0 0.0
        %v3848 = vand.u32 %v3701, 4294901760
        %v3849 = vsub.f32 %v3701, %v3848
        %v3850 = vand.u32 %v3849, 4294901760
        %v3851 = vsub.f32 %v3849, %v3850
        %v3852 = vand.u32 %v3851, 4294901760
        %3853 = vmatmul.mubr.f32.gmra.mrb[0].mxu0 %v3852
        %v3854 = vpop.f32.mrb[0].mxu0
        %v3855 = vadd.f32 %v3675, %v3854
        %v3856 = vpop.f32.mrb[0].mxu0
        %3857 = vmatprep.mubr.f32.mxu0 0.0
        %v3858 = vand.u32 %v3704, 4294901760
        %v3859 = vsub.f32 %v3704, %v3858
        %v3860 = vand.u32 %v3859, 4294901760
        %v3861 = vsub.f32 %v3859, %v3860
        %v3862 = vand.u32 %v3861, 4294901760
        %3863 = vmatmul.mubr.f32.gmra.mrb[0].mxu0 %v3862
        %v3864 = vpop.f32.mrb[0].mxu0
        %v3865 = vadd.f32 %v3676, %v3864
        %v3866 = vpop.f32.mrb[0].mxu0
        %3867 = vmatprep.mubr.f32.mxu0 0.0
        %v3868 = vand.u32 %v3707, 4294901760
        %v3869 = vsub.f32 %v3707, %v3868
        %v3870 = vand.u32 %v3869, 4294901760
        %v3871 = vsub.f32 %v3869, %v3870
        %v3872 = vand.u32 %v3871, 4294901760
        %3873 = vmatmul.mubr.f32.gmra.mrb[0].mxu0 %v3872
        %v3874 = vpop.f32.mrb[0].mxu0
        %v3875 = vadd.f32 %v3677, %v3874
        %v3876 = vpop.f32.mrb[0].mxu0
        %3877 = vmatprep.mubr.f32.mxu0 0.0
        %v3878 = vand.u32 %v3710, 4294901760
        %v3879 = vsub.f32 %v3710, %v3878
        %v3880 = vand.u32 %v3879, 4294901760
        %v3881 = vsub.f32 %v3879, %v3880
        %v3882 = vand.u32 %v3881, 4294901760
        %3883 = vmatmul.mubr.f32.gmra.mrb[0].mxu0 %v3882
        %v3884 = vpop.f32.mrb[0].mxu0
        %v3885 = vadd.f32 %v3678, %v3884
        %v3886 = vpop.f32.mrb[0].mxu0
        %3887 = vdwg.mxu0
        %3888 = vmatprep.subr.mxu0 0.0
        %v3889 = vand.u32 %v327, 4294901760
        %v3890 = vsub.f32 %v327, %v3889
        %v3891 = vand.u32 %v3890, 4294901760
        %v3892 = vsub.f32 %v3890, %v3891
        %v3893 = vand.u32 %v3892, 4294901760
        %3894 = vmatpush1.msra.mxu0 %v3893
        %3895 = vmatprep.subr.mxu0 0.0
        %3896 = vmatpush1.msra.mxu0 0.0
        %3897 = vmatprep.subr.mxu0 0.0
        %3898 = vmatpush1.msra.mxu0 0.0
        %3899 = vmatprep.subr.mxu0 0.0
        %3900 = vmatpush1.msra.mxu0 0.0
        %3901 = vmatprep.subr.mxu0 0.0
        %3902 = vmatpush1.msra.mxu0 0.0
        %3903 = vmatprep.subr.mxu0 0.0
        %3904 = vmatpush1.msra.mxu0 0.0
        %3905 = vmatprep.subr.mxu0 0.0
        %3906 = vmatpush1.msra.mxu0 0.0
        %3907 = vmatprep.subr.mxu0 0.0
        %3908 = vmatpush1.msra.mxu0 0.0
        %3909 = vmatprep.subr.mxu0 0.0
        %3910 = vmatpush1.msra.mxu0 0.0
        %3911 = vmatprep.subr.mxu0 0.0
        %3912 = vmatpush1.msra.mxu0 0.0
        %3913 = vmatprep.subr.mxu0 0.0
        %3914 = vmatpush1.msra.mxu0 0.0
        %3915 = vmatprep.subr.mxu0 0.0
        %3916 = vmatpush1.msra.mxu0 0.0
        %3917 = vmatprep.subr.mxu0 0.0
        %3918 = vmatpush1.msra.mxu0 0.0
        %3919 = vmatprep.subr.mxu0 0.0
        %3920 = vmatpush1.msra.mxu0 0.0
        %3921 = vmatprep.subr.mxu0 0.0
        %3922 = vmatpush1.msra.mxu0 0.0
        %3923 = vmatprep.subr.mxu0 0.0
        %3924 = vmatpush1.msra.mxu0 0.0
        %3925 = vmatprep.subr.mxu0 0.0
        %3926 = vmatpush1.msra.mxu0 0.0
        %3927 = vmatprep.subr.mxu0 0.0
        %3928 = vmatpush1.msra.mxu0 0.0
        %3929 = vmatprep.subr.mxu0 0.0
        %3930 = vmatpush1.msra.mxu0 0.0
        %3931 = vmatprep.subr.mxu0 0.0
        %3932 = vmatpush1.msra.mxu0 0.0
        %3933 = vmatprep.subr.mxu0 0.0
        %3934 = vmatpush1.msra.mxu0 0.0
        %3935 = vmatprep.subr.mxu0 0.0
        %3936 = vmatpush1.msra.mxu0 0.0
        %3937 = vmatprep.subr.mxu0 0.0
        %3938 = vmatpush1.msra.mxu0 0.0
        %3939 = vmatprep.subr.mxu0 0.0
        %3940 = vmatpush1.msra.mxu0 0.0
        %3941 = vmatprep.subr.mxu0 0.0
        %3942 = vmatpush1.msra.mxu0 0.0
        %3943 = vmatprep.subr.mxu0 0.0
        %3944 = vmatpush1.msra.mxu0 0.0
        %3945 = vmatprep.subr.mxu0 0.0
        %3946 = vmatpush1.msra.mxu0 0.0
        %3947 = vmatprep.subr.mxu0 0.0
        %3948 = vmatpush1.msra.mxu0 0.0
        %3949 = vmatprep.subr.mxu0 0.0
        %3950 = vmatpush1.msra.mxu0 0.0
        %3951 = vmatprep.subr.mxu0 0.0
        %3952 = vmatpush1.msra.mxu0 0.0
        %3953 = vmatprep.subr.mxu0 0.0
        %3954 = vmatpush1.msra.mxu0 0.0
        %3955 = vmatprep.subr.mxu0 0.0
        %3956 = vmatpush1.msra.mxu0 0.0
        %3957 = vmatprep.mubr.f32.mxu0 0.0
        %v3958 = vand.u32 %v3680, 4294901760
        %3959 = vmatmul.mubr.f32.gmra.mrb[0].mxu0 %v3958
        %v3960 = vpop.f32.mrb[0].mxu0
        %v3961 = vadd.f32 %v3785, %v3960
        %v3962 = vpop.f32.mrb[0].mxu0
        %3963 = vmatprep.mubr.f32.mxu0 0.0
        %v3964 = vand.u32 %v3683, 4294901760
        %3965 = vmatmul.mubr.f32.gmra.mrb[0].mxu0 %v3964
        %v3966 = vpop.f32.mrb[0].mxu0
        %v3967 = vadd.f32 %v3795, %v3966
        %v3968 = vpop.f32.mrb[0].mxu0
        %3969 = vmatprep.mubr.f32.mxu0 0.0
        %v3970 = vand.u32 %v3686, 4294901760
        %3971 = vmatmul.mubr.f32.gmra.mrb[0].mxu0 %v3970
        %v3972 = vpop.f32.mrb[0].mxu0
        %v3973 = vadd.f32 %v3805, %v3972
        %v3974 = vpop.f32.mrb[0].mxu0
        %3975 = vmatprep.mubr.f32.mxu0 0.0
        %v3976 = vand.u32 %v3689, 4294901760
        %3977 = vmatmul.mubr.f32.gmra.mrb[0].mxu0 %v3976
        %v3978 = vpop.f32.mrb[0].mxu0
        %v3979 = vadd.f32 %v3815, %v3978
        %v3980 = vpop.f32.mrb[0].mxu0
        %3981 = vmatprep.mubr.f32.mxu0 0.0
        %v3982 = vand.u32 %v3692, 4294901760
        %3983 = vmatmul.mubr.f32.gmra.mrb[0].mxu0 %v3982
        %v3984 = vpop.f32.mrb[0].mxu0
        %v3985 = vadd.f32 %v3825, %v3984
        %v3986 = vpop.f32.mrb[0].mxu0
        %3987 = vmatprep.mubr.f32.mxu0 0.0
        %v3988 = vand.u32 %v3695, 4294901760
        %3989 = vmatmul.mubr.f32.gmra.mrb[0].mxu0 %v3988
        %v3990 = vpop.f32.mrb[0].mxu0
        %v3991 = vadd.f32 %v3835, %v3990
        %v3992 = vpop.f32.mrb[0].mxu0
        %3993 = vmatprep.mubr.f32.mxu0 0.0
        %v3994 = vand.u32 %v3698, 4294901760
        %3995 = vmatmul.mubr.f32.gmra.mrb[0].mxu0 %v3994
        %v3996 = vpop.f32.mrb[0].mxu0
        %v3997 = vadd.f32 %v3845, %v3996
        %v3998 = vpop.f32.mrb[0].mxu0
        %3999 = vmatprep.mubr.f32.mxu0 0.0
        %v4000 = vand.u32 %v3701, 4294901760
        %4001 = vmatmul.mubr.f32.gmra.mrb[0].mxu0 %v4000
        %v4002 = vpop.f32.mrb[0].mxu0
        %v4003 = vadd.f32 %v3855, %v4002
        %v4004 = vpop.f32.mrb[0].mxu0
        %4005 = vmatprep.mubr.f32.mxu0 0.0
        %v4006 = vand.u32 %v3704, 4294901760
        %4007 = vmatmul.mubr.f32.gmra.mrb[0].mxu0 %v4006
        %v4008 = vpop.f32.mrb[0].mxu0
        %v4009 = vadd.f32 %v3865, %v4008
        %v4010 = vpop.f32.mrb[0].mxu0
        %4011 = vmatprep.mubr.f32.mxu0 0.0
        %v4012 = vand.u32 %v3707, 4294901760
        %4013 = vmatmul.mubr.f32.gmra.mrb[0].mxu0 %v4012
        %v4014 = vpop.f32.mrb[0].mxu0
        %v4015 = vadd.f32 %v3875, %v4014
        %v4016 = vpop.f32.mrb[0].mxu0
        %4017 = vmatprep.mubr.f32.mxu0 0.0
        %v4018 = vand.u32 %v3710, 4294901760
        %4019 = vmatmul.mubr.f32.gmra.mrb[0].mxu0 %v4018
        %v4020 = vpop.f32.mrb[0].mxu0
        %v4021 = vadd.f32 %v3885, %v4020
        %v4022 = vpop.f32.mrb[0].mxu0
        %4023 = vdwg.mxu0
        %4024 = vmatprep.subr.mxu0 0.0
        %v4025 = vand.u32 %v327, 4294901760
        %v4026 = vsub.f32 %v327, %v4025
        %4027 = vmatpush1.msra.mxu0 %v4026
        %4028 = vmatprep.subr.mxu0 0.0
        %4029 = vmatpush1.msra.mxu0 0.0
        %4030 = vmatprep.subr.mxu0 0.0
        %4031 = vmatpush1.msra.mxu0 0.0
        %4032 = vmatprep.subr.mxu0 0.0
        %4033 = vmatpush1.msra.mxu0 0.0
        %4034 = vmatprep.subr.mxu0 0.0
        %4035 = vmatpush1.msra.mxu0 0.0
        %4036 = vmatprep.subr.mxu0 0.0
        %4037 = vmatpush1.msra.mxu0 0.0
        %4038 = vmatprep.subr.mxu0 0.0
        %4039 = vmatpush1.msra.mxu0 0.0
        %4040 = vmatprep.subr.mxu0 0.0
        %4041 = vmatpush1.msra.mxu0 0.0
        %4042 = vmatprep.subr.mxu0 0.0
        %4043 = vmatpush1.msra.mxu0 0.0
        %4044 = vmatprep.subr.mxu0 0.0
        %4045 = vmatpush1.msra.mxu0 0.0
        %4046 = vmatprep.subr.mxu0 0.0
        %4047 = vmatpush1.msra.mxu0 0.0
        %4048 = vmatprep.subr.mxu0 0.0
        %4049 = vmatpush1.msra.mxu0 0.0
        %4050 = vmatprep.subr.mxu0 0.0
        %4051 = vmatpush1.msra.mxu0 0.0
        %4052 = vmatprep.subr.mxu0 0.0
        %4053 = vmatpush1.msra.mxu0 0.0
        %4054 = vmatprep.subr.mxu0 0.0
        %4055 = vmatpush1.msra.mxu0 0.0
        %4056 = vmatprep.subr.mxu0 0.0
        %4057 = vmatpush1.msra.mxu0 0.0
        %4058 = vmatprep.subr.mxu0 0.0
        %4059 = vmatpush1.msra.mxu0 0.0
        %4060 = vmatprep.subr.mxu0 0.0
        %4061 = vmatpush1.msra.mxu0 0.0
        %4062 = vmatprep.subr.mxu0 0.0
        %4063 = vmatpush1.msra.mxu0 0.0
        %4064 = vmatprep.subr.mxu0 0.0
        %4065 = vmatpush1.msra.mxu0 0.0
        %4066 = vmatprep.subr.mxu0 0.0
        %4067 = vmatpush1.msra.mxu0 0.0
        %4068 = vmatprep.subr.mxu0 0.0
        %4069 = vmatpush1.msra.mxu0 0.0
        %4070 = vmatprep.subr.mxu0 0.0
        %4071 = vmatpush1.msra.mxu0 0.0
        %4072 = vmatprep.subr.mxu0 0.0
        %4073 = vmatpush1.msra.mxu0 0.0
        %4074 = vmatprep.subr.mxu0 0.0
        %4075 = vmatpush1.msra.mxu0 0.0
        %4076 = vmatprep.subr.mxu0 0.0
        %4077 = vmatpush1.msra.mxu0 0.0
        %4078 = vmatprep.subr.mxu0 0.0
        %4079 = vmatpush1.msra.mxu0 0.0
        %4080 = vmatprep.subr.mxu0 0.0
        %4081 = vmatpush1.msra.mxu0 0.0
        %4082 = vmatprep.subr.mxu0 0.0
        %4083 = vmatpush1.msra.mxu0 0.0
        %4084 = vmatprep.subr.mxu0 0.0
        %4085 = vmatpush1.msra.mxu0 0.0
        %4086 = vmatprep.subr.mxu0 0.0
        %4087 = vmatpush1.msra.mxu0 0.0
        %4088 = vmatprep.subr.mxu0 0.0
        %4089 = vmatpush1.msra.mxu0 0.0
        %4090 = vmatprep.mubr.f32.mxu0 0.0
        %v4091 = vand.u32 %v3680, 4294901760
        %v4092 = vsub.f32 %v3680, %v4091
        %4093 = vmatmul.mubr.f32.gmra.mrb[0].mxu0 %v4092
        %v4094 = vpop.f32.mrb[0].mxu0
        %v4095 = vadd.f32 %v3961, %v4094
        %v4096 = vpop.f32.mrb[0].mxu0
        %4097 = vmatprep.mubr.f32.mxu0 0.0
        %v4098 = vand.u32 %v3683, 4294901760
        %v4099 = vsub.f32 %v3683, %v4098
        %4100 = vmatmul.mubr.f32.gmra.mrb[0].mxu0 %v4099
        %v4101 = vpop.f32.mrb[0].mxu0
        %v4102 = vadd.f32 %v3967, %v4101
        %v4103 = vpop.f32.mrb[0].mxu0
        %4104 = vmatprep.mubr.f32.mxu0 0.0
        %v4105 = vand.u32 %v3686, 4294901760
        %v4106 = vsub.f32 %v3686, %v4105
        %4107 = vmatmul.mubr.f32.gmra.mrb[0].mxu0 %v4106
        %v4108 = vpop.f32.mrb[0].mxu0
        %v4109 = vadd.f32 %v3973, %v4108
        %v4110 = vpop.f32.mrb[0].mxu0
        %4111 = vmatprep.mubr.f32.mxu0 0.0
        %v4112 = vand.u32 %v3689, 4294901760
        %v4113 = vsub.f32 %v3689, %v4112
        %4114 = vmatmul.mubr.f32.gmra.mrb[0].mxu0 %v4113
        %v4115 = vpop.f32.mrb[0].mxu0
        %v4116 = vadd.f32 %v3979, %v4115
        %v4117 = vpop.f32.mrb[0].mxu0
        %4118 = vmatprep.mubr.f32.mxu0 0.0
        %v4119 = vand.u32 %v3692, 4294901760
        %v4120 = vsub.f32 %v3692, %v4119
        %4121 = vmatmul.mubr.f32.gmra.mrb[0].mxu0 %v4120
        %v4122 = vpop.f32.mrb[0].mxu0
        %v4123 = vadd.f32 %v3985, %v4122
        %v4124 = vpop.f32.mrb[0].mxu0
        %4125 = vmatprep.mubr.f32.mxu0 0.0
        %v4126 = vand.u32 %v3695, 4294901760
        %v4127 = vsub.f32 %v3695, %v4126
        %4128 = vmatmul.mubr.f32.gmra.mrb[0].mxu0 %v4127
        %v4129 = vpop.f32.mrb[0].mxu0
        %v4130 = vadd.f32 %v3991, %v4129
        %v4131 = vpop.f32.mrb[0].mxu0
        %4132 = vmatprep.mubr.f32.mxu0 0.0
        %v4133 = vand.u32 %v3698, 4294901760
        %v4134 = vsub.f32 %v3698, %v4133
        %4135 = vmatmul.mubr.f32.gmra.mrb[0].mxu0 %v4134
        %v4136 = vpop.f32.mrb[0].mxu0
        %v4137 = vadd.f32 %v3997, %v4136
        %v4138 = vpop.f32.mrb[0].mxu0
        %4139 = vmatprep.mubr.f32.mxu0 0.0
        %v4140 = vand.u32 %v3701, 4294901760
        %v4141 = vsub.f32 %v3701, %v4140
        %4142 = vmatmul.mubr.f32.gmra.mrb[0].mxu0 %v4141
        %v4143 = vpop.f32.mrb[0].mxu0
        %v4144 = vadd.f32 %v4003, %v4143
        %v4145 = vpop.f32.mrb[0].mxu0
        %4146 = vmatprep.mubr.f32.mxu0 0.0
        %v4147 = vand.u32 %v3704, 4294901760
        %v4148 = vsub.f32 %v3704, %v4147
        %4149 = vmatmul.mubr.f32.gmra.mrb[0].mxu0 %v4148
        %v4150 = vpop.f32.mrb[0].mxu0
        %v4151 = vadd.f32 %v4009, %v4150
        %v4152 = vpop.f32.mrb[0].mxu0
        %4153 = vmatprep.mubr.f32.mxu0 0.0
        %v4154 = vand.u32 %v3707, 4294901760
        %v4155 = vsub.f32 %v3707, %v4154
        %4156 = vmatmul.mubr.f32.gmra.mrb[0].mxu0 %v4155
        %v4157 = vpop.f32.mrb[0].mxu0
        %v4158 = vadd.f32 %v4015, %v4157
        %v4159 = vpop.f32.mrb[0].mxu0
        %4160 = vmatprep.mubr.f32.mxu0 0.0
        %v4161 = vand.u32 %v3710, 4294901760
        %v4162 = vsub.f32 %v3710, %v4161
        %4163 = vmatmul.mubr.f32.gmra.mrb[0].mxu0 %v4162
        %v4164 = vpop.f32.mrb[0].mxu0
        %v4165 = vadd.f32 %v4021, %v4164
        %v4166 = vpop.f32.mrb[0].mxu0
        %4167 = vdwg.mxu0
        %4168 = vmatprep.subr.mxu0 0.0
        %v4169 = vand.u32 %v327, 4294901760
        %4170 = vmatpush1.msra.mxu0 %v4169
        %4171 = vmatprep.subr.mxu0 0.0
        %4172 = vmatpush1.msra.mxu0 0.0
        %4173 = vmatprep.subr.mxu0 0.0
        %4174 = vmatpush1.msra.mxu0 0.0
        %4175 = vmatprep.subr.mxu0 0.0
        %4176 = vmatpush1.msra.mxu0 0.0
        %4177 = vmatprep.subr.mxu0 0.0
        %4178 = vmatpush1.msra.mxu0 0.0
        %4179 = vmatprep.subr.mxu0 0.0
        %4180 = vmatpush1.msra.mxu0 0.0
        %4181 = vmatprep.subr.mxu0 0.0
        %4182 = vmatpush1.msra.mxu0 0.0
        %4183 = vmatprep.subr.mxu0 0.0
        %4184 = vmatpush1.msra.mxu0 0.0
        %4185 = vmatprep.subr.mxu0 0.0
        %4186 = vmatpush1.msra.mxu0 0.0
        %4187 = vmatprep.subr.mxu0 0.0
        %4188 = vmatpush1.msra.mxu0 0.0
        %4189 = vmatprep.subr.mxu0 0.0
        %4190 = vmatpush1.msra.mxu0 0.0
        %4191 = vmatprep.subr.mxu0 0.0
        %4192 = vmatpush1.msra.mxu0 0.0
        %4193 = vmatprep.subr.mxu0 0.0
        %4194 = vmatpush1.msra.mxu0 0.0
        %4195 = vmatprep.subr.mxu0 0.0
        %4196 = vmatpush1.msra.mxu0 0.0
        %4197 = vmatprep.subr.mxu0 0.0
        %4198 = vmatpush1.msra.mxu0 0.0
        %4199 = vmatprep.subr.mxu0 0.0
        %4200 = vmatpush1.msra.mxu0 0.0
        %4201 = vmatprep.subr.mxu0 0.0
        %4202 = vmatpush1.msra.mxu0 0.0
        %4203 = vmatprep.subr.mxu0 0.0
        %4204 = vmatpush1.msra.mxu0 0.0
        %4205 = vmatprep.subr.mxu0 0.0
        %4206 = vmatpush1.msra.mxu0 0.0
        %4207 = vmatprep.subr.mxu0 0.0
        %4208 = vmatpush1.msra.mxu0 0.0
        %4209 = vmatprep.subr.mxu0 0.0
        %4210 = vmatpush1.msra.mxu0 0.0
        %4211 = vmatprep.subr.mxu0 0.0
        %4212 = vmatpush1.msra.mxu0 0.0
        %4213 = vmatprep.subr.mxu0 0.0
        %4214 = vmatpush1.msra.mxu0 0.0
        %4215 = vmatprep.subr.mxu0 0.0
        %4216 = vmatpush1.msra.mxu0 0.0
        %4217 = vmatprep.subr.mxu0 0.0
        %4218 = vmatpush1.msra.mxu0 0.0
        %4219 = vmatprep.subr.mxu0 0.0
        %4220 = vmatpush1.msra.mxu0 0.0
        %4221 = vmatprep.subr.mxu0 0.0
        %4222 = vmatpush1.msra.mxu0 0.0
        %4223 = vmatprep.subr.mxu0 0.0
        %4224 = vmatpush1.msra.mxu0 0.0
        %4225 = vmatprep.subr.mxu0 0.0
        %4226 = vmatpush1.msra.mxu0 0.0
        %4227 = vmatprep.subr.mxu0 0.0
        %4228 = vmatpush1.msra.mxu0 0.0
        %4229 = vmatprep.subr.mxu0 0.0
        %4230 = vmatpush1.msra.mxu0 0.0
        %4231 = vmatprep.subr.mxu0 0.0
        %4232 = vmatpush1.msra.mxu0 0.0
        %4233 = vmatprep.mubr.f32.mxu0 0.0
        %v4234 = vand.u32 %v3680, 4294901760
        %v4235 = vsub.f32 %v3680, %v4234
        %v4236 = vand.u32 %v4235, 4294901760
        %4237 = vmatmul.mubr.f32.gmra.mrb[0].mxu0 %v4236
        %v4238 = vpop.f32.mrb[0].mxu0
        %v4239 = vadd.f32 %v4095, %v4238
        %v4240 = vpop.f32.mrb[0].mxu0
        %4241 = vmatprep.mubr.f32.mxu0 0.0
        %v4242 = vand.u32 %v3683, 4294901760
        %v4243 = vsub.f32 %v3683, %v4242
        %v4244 = vand.u32 %v4243, 4294901760
        %4245 = vmatmul.mubr.f32.gmra.mrb[0].mxu0 %v4244
        %v4246 = vpop.f32.mrb[0].mxu0
        %v4247 = vadd.f32 %v4102, %v4246
        %v4248 = vpop.f32.mrb[0].mxu0
        %4249 = vmatprep.mubr.f32.mxu0 0.0
        %v4250 = vand.u32 %v3686, 4294901760
        %v4251 = vsub.f32 %v3686, %v4250
        %v4252 = vand.u32 %v4251, 4294901760
        %4253 = vmatmul.mubr.f32.gmra.mrb[0].mxu0 %v4252
        %v4254 = vpop.f32.mrb[0].mxu0
        %v4255 = vadd.f32 %v4109, %v4254
        %v4256 = vpop.f32.mrb[0].mxu0
        %4257 = vmatprep.mubr.f32.mxu0 0.0
        %v4258 = vand.u32 %v3689, 4294901760
        %v4259 = vsub.f32 %v3689, %v4258
        %v4260 = vand.u32 %v4259, 4294901760
        %4261 = vmatmul.mubr.f32.gmra.mrb[0].mxu0 %v4260
        %v4262 = vpop.f32.mrb[0].mxu0
        %v4263 = vadd.f32 %v4116, %v4262
        %v4264 = vpop.f32.mrb[0].mxu0
        %4265 = vmatprep.mubr.f32.mxu0 0.0
        %v4266 = vand.u32 %v3692, 4294901760
        %v4267 = vsub.f32 %v3692, %v4266
        %v4268 = vand.u32 %v4267, 4294901760
        %4269 = vmatmul.mubr.f32.gmra.mrb[0].mxu0 %v4268
        %v4270 = vpop.f32.mrb[0].mxu0
        %v4271 = vadd.f32 %v4123, %v4270
        %v4272 = vpop.f32.mrb[0].mxu0
        %4273 = vmatprep.mubr.f32.mxu0 0.0
        %v4274 = vand.u32 %v3695, 4294901760
        %v4275 = vsub.f32 %v3695, %v4274
        %v4276 = vand.u32 %v4275, 4294901760
        %4277 = vmatmul.mubr.f32.gmra.mrb[0].mxu0 %v4276
        %v4278 = vpop.f32.mrb[0].mxu0
        %v4279 = vadd.f32 %v4130, %v4278
        %v4280 = vpop.f32.mrb[0].mxu0
        %4281 = vmatprep.mubr.f32.mxu0 0.0
        %v4282 = vand.u32 %v3698, 4294901760
        %v4283 = vsub.f32 %v3698, %v4282
        %v4284 = vand.u32 %v4283, 4294901760
        %4285 = vmatmul.mubr.f32.gmra.mrb[0].mxu0 %v4284
        %v4286 = vpop.f32.mrb[0].mxu0
        %v4287 = vadd.f32 %v4137, %v4286
        %v4288 = vpop.f32.mrb[0].mxu0
        %4289 = vmatprep.mubr.f32.mxu0 0.0
        %v4290 = vand.u32 %v3701, 4294901760
        %v4291 = vsub.f32 %v3701, %v4290
        %v4292 = vand.u32 %v4291, 4294901760
        %4293 = vmatmul.mubr.f32.gmra.mrb[0].mxu0 %v4292
        %v4294 = vpop.f32.mrb[0].mxu0
        %v4295 = vadd.f32 %v4144, %v4294
        %v4296 = vpop.f32.mrb[0].mxu0
        %4297 = vmatprep.mubr.f32.mxu0 0.0
        %v4298 = vand.u32 %v3704, 4294901760
        %v4299 = vsub.f32 %v3704, %v4298
        %v4300 = vand.u32 %v4299, 4294901760
        %4301 = vmatmul.mubr.f32.gmra.mrb[0].mxu0 %v4300
        %v4302 = vpop.f32.mrb[0].mxu0
        %v4303 = vadd.f32 %v4151, %v4302
        %v4304 = vpop.f32.mrb[0].mxu0
        %4305 = vmatprep.mubr.f32.mxu0 0.0
        %v4306 = vand.u32 %v3707, 4294901760
        %v4307 = vsub.f32 %v3707, %v4306
        %v4308 = vand.u32 %v4307, 4294901760
        %4309 = vmatmul.mubr.f32.gmra.mrb[0].mxu0 %v4308
        %v4310 = vpop.f32.mrb[0].mxu0
        %v4311 = vadd.f32 %v4158, %v4310
        %v4312 = vpop.f32.mrb[0].mxu0
        %4313 = vmatprep.mubr.f32.mxu0 0.0
        %v4314 = vand.u32 %v3710, 4294901760
        %v4315 = vsub.f32 %v3710, %v4314
        %v4316 = vand.u32 %v4315, 4294901760
        %4317 = vmatmul.mubr.f32.gmra.mrb[0].mxu0 %v4316
        %v4318 = vpop.f32.mrb[0].mxu0
        %v4319 = vadd.f32 %v4165, %v4318
        %v4320 = vpop.f32.mrb[0].mxu0
        %4321 = vdwg.mxu0
        %4322 = vmatprep.subr.mxu0 0.0
        %v4323 = vand.u32 %v327, 4294901760
        %v4324 = vsub.f32 %v327, %v4323
        %v4325 = vand.u32 %v4324, 4294901760
        %4326 = vmatpush1.msra.mxu0 %v4325
        %4327 = vmatprep.subr.mxu0 0.0
        %4328 = vmatpush1.msra.mxu0 0.0
        %4329 = vmatprep.subr.mxu0 0.0
        %4330 = vmatpush1.msra.mxu0 0.0
        %4331 = vmatprep.subr.mxu0 0.0
        %4332 = vmatpush1.msra.mxu0 0.0
        %4333 = vmatprep.subr.mxu0 0.0
        %4334 = vmatpush1.msra.mxu0 0.0
        %4335 = vmatprep.subr.mxu0 0.0
        %4336 = vmatpush1.msra.mxu0 0.0
        %4337 = vmatprep.subr.mxu0 0.0
        %4338 = vmatpush1.msra.mxu0 0.0
        %4339 = vmatprep.subr.mxu0 0.0
        %4340 = vmatpush1.msra.mxu0 0.0
        %4341 = vmatprep.subr.mxu0 0.0
        %4342 = vmatpush1.msra.mxu0 0.0
        %4343 = vmatprep.subr.mxu0 0.0
        %4344 = vmatpush1.msra.mxu0 0.0
        %4345 = vmatprep.subr.mxu0 0.0
        %4346 = vmatpush1.msra.mxu0 0.0
        %4347 = vmatprep.subr.mxu0 0.0
        %4348 = vmatpush1.msra.mxu0 0.0
        %4349 = vmatprep.subr.mxu0 0.0
        %4350 = vmatpush1.msra.mxu0 0.0
        %4351 = vmatprep.subr.mxu0 0.0
        %4352 = vmatpush1.msra.mxu0 0.0
        %4353 = vmatprep.subr.mxu0 0.0
        %4354 = vmatpush1.msra.mxu0 0.0
        %4355 = vmatprep.subr.mxu0 0.0
        %4356 = vmatpush1.msra.mxu0 0.0
        %4357 = vmatprep.subr.mxu0 0.0
        %4358 = vmatpush1.msra.mxu0 0.0
        %4359 = vmatprep.subr.mxu0 0.0
        %4360 = vmatpush1.msra.mxu0 0.0
        %4361 = vmatprep.subr.mxu0 0.0
        %4362 = vmatpush1.msra.mxu0 0.0
        %4363 = vmatprep.subr.mxu0 0.0
        %4364 = vmatpush1.msra.mxu0 0.0
        %4365 = vmatprep.subr.mxu0 0.0
        %4366 = vmatpush1.msra.mxu0 0.0
        %4367 = vmatprep.subr.mxu0 0.0
        %4368 = vmatpush1.msra.mxu0 0.0
        %4369 = vmatprep.subr.mxu0 0.0
        %4370 = vmatpush1.msra.mxu0 0.0
        %4371 = vmatprep.subr.mxu0 0.0
        %4372 = vmatpush1.msra.mxu0 0.0
        %4373 = vmatprep.subr.mxu0 0.0
        %4374 = vmatpush1.msra.mxu0 0.0
        %4375 = vmatprep.subr.mxu0 0.0
        %4376 = vmatpush1.msra.mxu0 0.0
        %4377 = vmatprep.subr.mxu0 0.0
        %4378 = vmatpush1.msra.mxu0 0.0
        %4379 = vmatprep.subr.mxu0 0.0
        %4380 = vmatpush1.msra.mxu0 0.0
        %4381 = vmatprep.subr.mxu0 0.0
        %4382 = vmatpush1.msra.mxu0 0.0
        %4383 = vmatprep.subr.mxu0 0.0
        %4384 = vmatpush1.msra.mxu0 0.0
        %4385 = vmatprep.subr.mxu0 0.0
        %4386 = vmatpush1.msra.mxu0 0.0
        %4387 = vmatprep.subr.mxu0 0.0
        %4388 = vmatpush1.msra.mxu0 0.0
        %4389 = vmatprep.mubr.f32.mxu0 0.0
        %v4390 = vand.u32 %v3680, 4294901760
        %4391 = vmatmul.mubr.f32.gmra.mrb[0].mxu0 %v4390
        %v4392 = vpop.f32.mrb[0].mxu0
        %v4393 = vadd.f32 %v4239, %v4392
        %v4394 = vpop.f32.mrb[0].mxu0
        %4395 = vmatprep.mubr.f32.mxu0 0.0
        %v4396 = vand.u32 %v3683, 4294901760
        %4397 = vmatmul.mubr.f32.gmra.mrb[0].mxu0 %v4396
        %v4398 = vpop.f32.mrb[0].mxu0
        %v4399 = vadd.f32 %v4247, %v4398
        %v4400 = vpop.f32.mrb[0].mxu0
        %4401 = vmatprep.mubr.f32.mxu0 0.0
        %v4402 = vand.u32 %v3686, 4294901760
        %4403 = vmatmul.mubr.f32.gmra.mrb[0].mxu0 %v4402
        %v4404 = vpop.f32.mrb[0].mxu0
        %v4405 = vadd.f32 %v4255, %v4404
        %v4406 = vpop.f32.mrb[0].mxu0
        %4407 = vmatprep.mubr.f32.mxu0 0.0
        %v4408 = vand.u32 %v3689, 4294901760
        %4409 = vmatmul.mubr.f32.gmra.mrb[0].mxu0 %v4408
        %v4410 = vpop.f32.mrb[0].mxu0
        %v4411 = vadd.f32 %v4263, %v4410
        %v4412 = vpop.f32.mrb[0].mxu0
        %4413 = vmatprep.mubr.f32.mxu0 0.0
        %v4414 = vand.u32 %v3692, 4294901760
        %4415 = vmatmul.mubr.f32.gmra.mrb[0].mxu0 %v4414
        %v4416 = vpop.f32.mrb[0].mxu0
        %v4417 = vadd.f32 %v4271, %v4416
        %v4418 = vpop.f32.mrb[0].mxu0
        %4419 = vmatprep.mubr.f32.mxu0 0.0
        %v4420 = vand.u32 %v3695, 4294901760
        %4421 = vmatmul.mubr.f32.gmra.mrb[0].mxu0 %v4420
        %v4422 = vpop.f32.mrb[0].mxu0
        %v4423 = vadd.f32 %v4279, %v4422
        %v4424 = vpop.f32.mrb[0].mxu0
        %4425 = vmatprep.mubr.f32.mxu0 0.0
        %v4426 = vand.u32 %v3698, 4294901760
        %4427 = vmatmul.mubr.f32.gmra.mrb[0].mxu0 %v4426
        %v4428 = vpop.f32.mrb[0].mxu0
        %v4429 = vadd.f32 %v4287, %v4428
        %v4430 = vpop.f32.mrb[0].mxu0
        %4431 = vmatprep.mubr.f32.mxu0 0.0
        %v4432 = vand.u32 %v3701, 4294901760
        %4433 = vmatmul.mubr.f32.gmra.mrb[0].mxu0 %v4432
        %v4434 = vpop.f32.mrb[0].mxu0
        %v4435 = vadd.f32 %v4295, %v4434
        %v4436 = vpop.f32.mrb[0].mxu0
        %4437 = vmatprep.mubr.f32.mxu0 0.0
        %v4438 = vand.u32 %v3704, 4294901760
        %4439 = vmatmul.mubr.f32.gmra.mrb[0].mxu0 %v4438
        %v4440 = vpop.f32.mrb[0].mxu0
        %v4441 = vadd.f32 %v4303, %v4440
        %v4442 = vpop.f32.mrb[0].mxu0
        %4443 = vmatprep.mubr.f32.mxu0 0.0
        %v4444 = vand.u32 %v3707, 4294901760
        %4445 = vmatmul.mubr.f32.gmra.mrb[0].mxu0 %v4444
        %v4446 = vpop.f32.mrb[0].mxu0
        %v4447 = vadd.f32 %v4311, %v4446
        %v4448 = vpop.f32.mrb[0].mxu0
        %4449 = vmatprep.mubr.f32.mxu0 0.0
        %v4450 = vand.u32 %v3710, 4294901760
        %4451 = vmatmul.mubr.f32.gmra.mrb[0].mxu0 %v4450
        %v4452 = vpop.f32.mrb[0].mxu0
        %v4453 = vadd.f32 %v4319, %v4452
        %v4454 = vpop.f32.mrb[0].mxu0
        %4455 = vdwg.mxu0
        %4456 = vmatprep.subr.mxu0 0.0
        %v4457 = vand.u32 %v327, 4294901760
        %4458 = vmatpush1.msra.mxu0 %v4457
        %4459 = vmatprep.subr.mxu0 0.0
        %4460 = vmatpush1.msra.mxu0 0.0
        %4461 = vmatprep.subr.mxu0 0.0
        %4462 = vmatpush1.msra.mxu0 0.0
        %4463 = vmatprep.subr.mxu0 0.0
        %4464 = vmatpush1.msra.mxu0 0.0
        %4465 = vmatprep.subr.mxu0 0.0
        %4466 = vmatpush1.msra.mxu0 0.0
        %4467 = vmatprep.subr.mxu0 0.0
        %4468 = vmatpush1.msra.mxu0 0.0
        %4469 = vmatprep.subr.mxu0 0.0
        %4470 = vmatpush1.msra.mxu0 0.0
        %4471 = vmatprep.subr.mxu0 0.0
        %4472 = vmatpush1.msra.mxu0 0.0
        %4473 = vmatprep.subr.mxu0 0.0
        %4474 = vmatpush1.msra.mxu0 0.0
        %4475 = vmatprep.subr.mxu0 0.0
        %4476 = vmatpush1.msra.mxu0 0.0
        %4477 = vmatprep.subr.mxu0 0.0
        %4478 = vmatpush1.msra.mxu0 0.0
        %4479 = vmatprep.subr.mxu0 0.0
        %4480 = vmatpush1.msra.mxu0 0.0
        %4481 = vmatprep.subr.mxu0 0.0
        %4482 = vmatpush1.msra.mxu0 0.0
        %4483 = vmatprep.subr.mxu0 0.0
        %4484 = vmatpush1.msra.mxu0 0.0
        %4485 = vmatprep.subr.mxu0 0.0
        %4486 = vmatpush1.msra.mxu0 0.0
        %4487 = vmatprep.subr.mxu0 0.0
        %4488 = vmatpush1.msra.mxu0 0.0
        %4489 = vmatprep.subr.mxu0 0.0
        %4490 = vmatpush1.msra.mxu0 0.0
        %4491 = vmatprep.subr.mxu0 0.0
        %4492 = vmatpush1.msra.mxu0 0.0
        %4493 = vmatprep.subr.mxu0 0.0
        %4494 = vmatpush1.msra.mxu0 0.0
        %4495 = vmatprep.subr.mxu0 0.0
        %4496 = vmatpush1.msra.mxu0 0.0
        %4497 = vmatprep.subr.mxu0 0.0
        %4498 = vmatpush1.msra.mxu0 0.0
        %4499 = vmatprep.subr.mxu0 0.0
        %4500 = vmatpush1.msra.mxu0 0.0
        %4501 = vmatprep.subr.mxu0 0.0
        %4502 = vmatpush1.msra.mxu0 0.0
        %4503 = vmatprep.subr.mxu0 0.0
        %4504 = vmatpush1.msra.mxu0 0.0
        %4505 = vmatprep.subr.mxu0 0.0
        %4506 = vmatpush1.msra.mxu0 0.0
        %4507 = vmatprep.subr.mxu0 0.0
        %4508 = vmatpush1.msra.mxu0 0.0
        %4509 = vmatprep.subr.mxu0 0.0
        %4510 = vmatpush1.msra.mxu0 0.0
        %4511 = vmatprep.subr.mxu0 0.0
        %4512 = vmatpush1.msra.mxu0 0.0
        %4513 = vmatprep.subr.mxu0 0.0
        %4514 = vmatpush1.msra.mxu0 0.0
        %4515 = vmatprep.subr.mxu0 0.0
        %4516 = vmatpush1.msra.mxu0 0.0
        %4517 = vmatprep.subr.mxu0 0.0
        %4518 = vmatpush1.msra.mxu0 0.0
        %4519 = vmatprep.subr.mxu0 0.0
        %4520 = vmatpush1.msra.mxu0 0.0
        %4521 = vmatprep.mubr.f32.mxu0 0.0
        %v4522 = vand.u32 %v3680, 4294901760
        %4523 = vmatmul.mubr.f32.gmra.mrb[0].mxu0 %v4522
        %v4524 = vpop.f32.mrb[0].mxu0
        %v4525 = vadd.f32 %v4393, %v4524
        %v4526 = vpop.f32.mrb[0].mxu0
        %4527 = vmatprep.mubr.f32.mxu0 0.0
        %v4528 = vand.u32 %v3683, 4294901760
        %4529 = vmatmul.mubr.f32.gmra.mrb[0].mxu0 %v4528
        %v4530 = vpop.f32.mrb[0].mxu0
        %v4531 = vadd.f32 %v4399, %v4530
        %v4532 = vpop.f32.mrb[0].mxu0
        %4533 = vmatprep.mubr.f32.mxu0 0.0
        %v4534 = vand.u32 %v3686, 4294901760
        %4535 = vmatmul.mubr.f32.gmra.mrb[0].mxu0 %v4534
        %v4536 = vpop.f32.mrb[0].mxu0
        %v4537 = vadd.f32 %v4405, %v4536
        %v4538 = vpop.f32.mrb[0].mxu0
        %4539 = vmatprep.mubr.f32.mxu0 0.0
        %v4540 = vand.u32 %v3689, 4294901760
        %4541 = vmatmul.mubr.f32.gmra.mrb[0].mxu0 %v4540
        %v4542 = vpop.f32.mrb[0].mxu0
        %v4543 = vadd.f32 %v4411, %v4542
        %v4544 = vpop.f32.mrb[0].mxu0
        %4545 = vmatprep.mubr.f32.mxu0 0.0
        %v4546 = vand.u32 %v3692, 4294901760
        %4547 = vmatmul.mubr.f32.gmra.mrb[0].mxu0 %v4546
        %v4548 = vpop.f32.mrb[0].mxu0
        %v4549 = vadd.f32 %v4417, %v4548
        %v4550 = vpop.f32.mrb[0].mxu0
        %4551 = vmatprep.mubr.f32.mxu0 0.0
        %v4552 = vand.u32 %v3695, 4294901760
        %4553 = vmatmul.mubr.f32.gmra.mrb[0].mxu0 %v4552
        %v4554 = vpop.f32.mrb[0].mxu0
        %v4555 = vadd.f32 %v4423, %v4554
        %v4556 = vpop.f32.mrb[0].mxu0
        %4557 = vmatprep.mubr.f32.mxu0 0.0
        %v4558 = vand.u32 %v3698, 4294901760
        %4559 = vmatmul.mubr.f32.gmra.mrb[0].mxu0 %v4558
        %v4560 = vpop.f32.mrb[0].mxu0
        %v4561 = vadd.f32 %v4429, %v4560
        %v4562 = vpop.f32.mrb[0].mxu0
        %4563 = vmatprep.mubr.f32.mxu0 0.0
        %v4564 = vand.u32 %v3701, 4294901760
        %4565 = vmatmul.mubr.f32.gmra.mrb[0].mxu0 %v4564
        %v4566 = vpop.f32.mrb[0].mxu0
        %v4567 = vadd.f32 %v4435, %v4566
        %v4568 = vpop.f32.mrb[0].mxu0
        %4569 = vmatprep.mubr.f32.mxu0 0.0
        %v4570 = vand.u32 %v3704, 4294901760
        %4571 = vmatmul.mubr.f32.gmra.mrb[0].mxu0 %v4570
        %v4572 = vpop.f32.mrb[0].mxu0
        %v4573 = vadd.f32 %v4441, %v4572
        %v4574 = vpop.f32.mrb[0].mxu0
        %4575 = vmatprep.mubr.f32.mxu0 0.0
        %v4576 = vand.u32 %v3707, 4294901760
        %4577 = vmatmul.mubr.f32.gmra.mrb[0].mxu0 %v4576
        %v4578 = vpop.f32.mrb[0].mxu0
        %v4579 = vadd.f32 %v4447, %v4578
        %v4580 = vpop.f32.mrb[0].mxu0
        %4581 = vmatprep.mubr.f32.mxu0 0.0
        %v4582 = vand.u32 %v3710, 4294901760
        %4583 = vmatmul.mubr.f32.gmra.mrb[0].mxu0 %v4582
        %v4584 = vpop.f32.mrb[0].mxu0
        %v4585 = vadd.f32 %v4453, %v4584
        %v4586 = vpop.f32.mrb[0].mxu0
        %4587 = vdwg.mxu0
        %v4588 = vsub.f32 %v4525, %v3572
        %v4589 = vsub.f32 %v4531, %v3578
        %v4590 = vsub.f32 %v4537, %v3584
        %v4591 = vsub.f32 %v4543, %v3590
        %v4592 = vsub.f32 %v4549, %v3596
        %v4593 = vsub.f32 %v4555, %v3602
        %v4594 = vsub.f32 %v4561, %v3608
        %v4595 = vsub.f32 %v4567, %v3614
        %v4596 = vsub.f32 %v4573, %v3620
        %v4597 = vsub.f32 %v4579, %v3626
        %v4598 = vsub.f32 %v4585, %v3632
        %v4599 = vmul.f32 %v4588, 0.25
        %v4600 = vmul.f32 %v4589, 0.25
        %v4601 = vmul.f32 %v4590, 0.25
        %v4602 = vmul.f32 %v4591, 0.25
        %v4603 = vmul.f32 %v4592, 0.25
        %v4604 = vmul.f32 %v4593, 0.25
        %v4605 = vmul.f32 %v4594, 0.25
        %v4606 = vmul.f32 %v4595, 0.25
        %v4607 = vmul.f32 %v4596, 0.25
        %v4608 = vmul.f32 %v4597, 0.25
        %v4609 = vmul.f32 %v4598, 0.25
        %4610 = vmatprep.subr.mxu0 0.0
        %v4611 = vand.u32 %v326, 4294901760
        %4612 = vmatpush1.msra.mxu0 %v4611
        %4613 = vmatprep.subr.mxu0 0.0
        %4614 = vmatpush1.msra.mxu0 0.0
        %4615 = vmatprep.subr.mxu0 0.0
        %4616 = vmatpush1.msra.mxu0 0.0
        %4617 = vmatprep.subr.mxu0 0.0
        %4618 = vmatpush1.msra.mxu0 0.0
        %4619 = vmatprep.subr.mxu0 0.0
        %4620 = vmatpush1.msra.mxu0 0.0
        %4621 = vmatprep.subr.mxu0 0.0
        %4622 = vmatpush1.msra.mxu0 0.0
        %4623 = vmatprep.subr.mxu0 0.0
        %4624 = vmatpush1.msra.mxu0 0.0
        %4625 = vmatprep.subr.mxu0 0.0
        %4626 = vmatpush1.msra.mxu0 0.0
        %4627 = vmatprep.subr.mxu0 0.0
        %4628 = vmatpush1.msra.mxu0 0.0
        %4629 = vmatprep.subr.mxu0 0.0
        %4630 = vmatpush1.msra.mxu0 0.0
        %4631 = vmatprep.subr.mxu0 0.0
        %4632 = vmatpush1.msra.mxu0 0.0
        %4633 = vmatprep.subr.mxu0 0.0
        %4634 = vmatpush1.msra.mxu0 0.0
        %4635 = vmatprep.subr.mxu0 0.0
        %4636 = vmatpush1.msra.mxu0 0.0
        %4637 = vmatprep.subr.mxu0 0.0
        %4638 = vmatpush1.msra.mxu0 0.0
        %4639 = vmatprep.subr.mxu0 0.0
        %4640 = vmatpush1.msra.mxu0 0.0
        %4641 = vmatprep.subr.mxu0 0.0
        %4642 = vmatpush1.msra.mxu0 0.0
        %4643 = vmatprep.subr.mxu0 0.0
        %4644 = vmatpush1.msra.mxu0 0.0
        %4645 = vmatprep.subr.mxu0 0.0
        %4646 = vmatpush1.msra.mxu0 0.0
        %4647 = vmatprep.subr.mxu0 0.0
        %4648 = vmatpush1.msra.mxu0 0.0
        %4649 = vmatprep.subr.mxu0 0.0
        %4650 = vmatpush1.msra.mxu0 0.0
        %4651 = vmatprep.subr.mxu0 0.0
        %4652 = vmatpush1.msra.mxu0 0.0
        %4653 = vmatprep.subr.mxu0 0.0
        %4654 = vmatpush1.msra.mxu0 0.0
        %4655 = vmatprep.subr.mxu0 0.0
        %4656 = vmatpush1.msra.mxu0 0.0
        %4657 = vmatprep.subr.mxu0 0.0
        %4658 = vmatpush1.msra.mxu0 0.0
        %4659 = vmatprep.subr.mxu0 0.0
        %4660 = vmatpush1.msra.mxu0 0.0
        %4661 = vmatprep.subr.mxu0 0.0
        %4662 = vmatpush1.msra.mxu0 0.0
        %4663 = vmatprep.subr.mxu0 0.0
        %4664 = vmatpush1.msra.mxu0 0.0
        %4665 = vmatprep.subr.mxu0 0.0
        %4666 = vmatpush1.msra.mxu0 0.0
        %4667 = vmatprep.subr.mxu0 0.0
        %4668 = vmatpush1.msra.mxu0 0.0
        %4669 = vmatprep.subr.mxu0 0.0
        %4670 = vmatpush1.msra.mxu0 0.0
        %4671 = vmatprep.subr.mxu0 0.0
        %4672 = vmatpush1.msra.mxu0 0.0
        %4673 = vmatprep.subr.mxu0 0.0
        %4674 = vmatpush1.msra.mxu0 0.0
        %4675 = vmatprep.mubr.f32.mxu0 0.0
        %v4676 = vand.u32 %v2727, 4294901760
        %v4677 = vsub.f32 %v2727, %v4676
        %v4678 = vand.u32 %v4677, 4294901760
        %v4679 = vsub.f32 %v4677, %v4678
        %v4680 = vand.u32 %v4679, 4294901760
        %4681 = vmatmul.mubr.f32.gmra.mrb[0].mxu0 %v4680
        %v4682 = vpop.f32.mrb[0].mxu0
        %v4683 = vadd.f32 0.0, %v4682
        %v4684 = vpop.f32.mrb[0].mxu0
        %4685 = vmatprep.mubr.f32.mxu0 0.0
        %v4686 = vand.u32 %v2730, 4294901760
        %v4687 = vsub.f32 %v2730, %v4686
        %v4688 = vand.u32 %v4687, 4294901760
        %v4689 = vsub.f32 %v4687, %v4688
        %v4690 = vand.u32 %v4689, 4294901760
        %4691 = vmatmul.mubr.f32.gmra.mrb[0].mxu0 %v4690
        %v4692 = vpop.f32.mrb[0].mxu0
        %v4693 = vadd.f32 0.0, %v4692
        %v4694 = vpop.f32.mrb[0].mxu0
        %4695 = vmatprep.mubr.f32.mxu0 0.0
        %v4696 = vand.u32 %v2733, 4294901760
        %v4697 = vsub.f32 %v2733, %v4696
        %v4698 = vand.u32 %v4697, 4294901760
        %v4699 = vsub.f32 %v4697, %v4698
        %v4700 = vand.u32 %v4699, 4294901760
        %4701 = vmatmul.mubr.f32.gmra.mrb[0].mxu0 %v4700
        %v4702 = vpop.f32.mrb[0].mxu0
        %v4703 = vadd.f32 0.0, %v4702
        %v4704 = vpop.f32.mrb[0].mxu0
        %4705 = vmatprep.mubr.f32.mxu0 0.0
        %v4706 = vand.u32 %v2736, 4294901760
        %v4707 = vsub.f32 %v2736, %v4706
        %v4708 = vand.u32 %v4707, 4294901760
        %v4709 = vsub.f32 %v4707, %v4708
        %v4710 = vand.u32 %v4709, 4294901760
        %4711 = vmatmul.mubr.f32.gmra.mrb[0].mxu0 %v4710
        %v4712 = vpop.f32.mrb[0].mxu0
        %v4713 = vadd.f32 0.0, %v4712
        %v4714 = vpop.f32.mrb[0].mxu0
        %4715 = vmatprep.mubr.f32.mxu0 0.0
        %v4716 = vand.u32 %v2739, 4294901760
        %v4717 = vsub.f32 %v2739, %v4716
        %v4718 = vand.u32 %v4717, 4294901760
        %v4719 = vsub.f32 %v4717, %v4718
        %v4720 = vand.u32 %v4719, 4294901760
        %4721 = vmatmul.mubr.f32.gmra.mrb[0].mxu0 %v4720
        %v4722 = vpop.f32.mrb[0].mxu0
        %v4723 = vadd.f32 0.0, %v4722
        %v4724 = vpop.f32.mrb[0].mxu0
        %4725 = vmatprep.mubr.f32.mxu0 0.0
        %v4726 = vand.u32 %v2742, 4294901760
        %v4727 = vsub.f32 %v2742, %v4726
        %v4728 = vand.u32 %v4727, 4294901760
        %v4729 = vsub.f32 %v4727, %v4728
        %v4730 = vand.u32 %v4729, 4294901760
        %4731 = vmatmul.mubr.f32.gmra.mrb[0].mxu0 %v4730
        %v4732 = vpop.f32.mrb[0].mxu0
        %v4733 = vadd.f32 0.0, %v4732
        %v4734 = vpop.f32.mrb[0].mxu0
        %4735 = vmatprep.mubr.f32.mxu0 0.0
        %v4736 = vand.u32 %v2745, 4294901760
        %v4737 = vsub.f32 %v2745, %v4736
        %v4738 = vand.u32 %v4737, 4294901760
        %v4739 = vsub.f32 %v4737, %v4738
        %v4740 = vand.u32 %v4739, 4294901760
        %4741 = vmatmul.mubr.f32.gmra.mrb[0].mxu0 %v4740
        %v4742 = vpop.f32.mrb[0].mxu0
        %v4743 = vadd.f32 0.0, %v4742
        %v4744 = vpop.f32.mrb[0].mxu0
        %4745 = vmatprep.mubr.f32.mxu0 0.0
        %v4746 = vand.u32 %v2748, 4294901760
        %v4747 = vsub.f32 %v2748, %v4746
        %v4748 = vand.u32 %v4747, 4294901760
        %v4749 = vsub.f32 %v4747, %v4748
        %v4750 = vand.u32 %v4749, 4294901760
        %4751 = vmatmul.mubr.f32.gmra.mrb[0].mxu0 %v4750
        %v4752 = vpop.f32.mrb[0].mxu0
        %v4753 = vadd.f32 0.0, %v4752
        %v4754 = vpop.f32.mrb[0].mxu0
        %4755 = vmatprep.mubr.f32.mxu0 0.0
        %v4756 = vand.u32 %v2751, 4294901760
        %v4757 = vsub.f32 %v2751, %v4756
        %v4758 = vand.u32 %v4757, 4294901760
        %v4759 = vsub.f32 %v4757, %v4758
        %v4760 = vand.u32 %v4759, 4294901760
        %4761 = vmatmul.mubr.f32.gmra.mrb[0].mxu0 %v4760
        %v4762 = vpop.f32.mrb[0].mxu0
        %v4763 = vadd.f32 0.0, %v4762
        %v4764 = vpop.f32.mrb[0].mxu0
        %4765 = vmatprep.mubr.f32.mxu0 0.0
        %v4766 = vand.u32 %v2754, 4294901760
        %v4767 = vsub.f32 %v2754, %v4766
        %v4768 = vand.u32 %v4767, 4294901760
        %v4769 = vsub.f32 %v4767, %v4768
        %v4770 = vand.u32 %v4769, 4294901760
        %4771 = vmatmul.mubr.f32.gmra.mrb[0].mxu0 %v4770
        %v4772 = vpop.f32.mrb[0].mxu0
        %v4773 = vadd.f32 0.0, %v4772
        %v4774 = vpop.f32.mrb[0].mxu0
        %4775 = vmatprep.mubr.f32.mxu0 0.0
        %v4776 = vand.u32 %v2757, 4294901760
        %v4777 = vsub.f32 %v2757, %v4776
        %v4778 = vand.u32 %v4777, 4294901760
        %v4779 = vsub.f32 %v4777, %v4778
        %v4780 = vand.u32 %v4779, 4294901760
        %4781 = vmatmul.mubr.f32.gmra.mrb[0].mxu0 %v4780
        %v4782 = vpop.f32.mrb[0].mxu0
        %v4783 = vadd.f32 0.0, %v4782
        %v4784 = vpop.f32.mrb[0].mxu0
        %4785 = vdwg.mxu0
        %4786 = vmatprep.subr.mxu0 0.0
        %v4787 = vand.u32 %v326, 4294901760
        %v4788 = vsub.f32 %v326, %v4787
        %v4789 = vand.u32 %v4788, 4294901760
        %v4790 = vsub.f32 %v4788, %v4789
        %v4791 = vand.u32 %v4790, 4294901760
        %4792 = vmatpush1.msra.mxu0 %v4791
        %4793 = vmatprep.subr.mxu0 0.0
        %4794 = vmatpush1.msra.mxu0 0.0
        %4795 = vmatprep.subr.mxu0 0.0
        %4796 = vmatpush1.msra.mxu0 0.0
        %4797 = vmatprep.subr.mxu0 0.0
        %4798 = vmatpush1.msra.mxu0 0.0
        %4799 = vmatprep.subr.mxu0 0.0
        %4800 = vmatpush1.msra.mxu0 0.0
        %4801 = vmatprep.subr.mxu0 0.0
        %4802 = vmatpush1.msra.mxu0 0.0
        %4803 = vmatprep.subr.mxu0 0.0
        %4804 = vmatpush1.msra.mxu0 0.0
        %4805 = vmatprep.subr.mxu0 0.0
        %4806 = vmatpush1.msra.mxu0 0.0
        %4807 = vmatprep.subr.mxu0 0.0
        %4808 = vmatpush1.msra.mxu0 0.0
        %4809 = vmatprep.subr.mxu0 0.0
        %4810 = vmatpush1.msra.mxu0 0.0
        %4811 = vmatprep.subr.mxu0 0.0
        %4812 = vmatpush1.msra.mxu0 0.0
        %4813 = vmatprep.subr.mxu0 0.0
        %4814 = vmatpush1.msra.mxu0 0.0
        %4815 = vmatprep.subr.mxu0 0.0
        %4816 = vmatpush1.msra.mxu0 0.0
        %4817 = vmatprep.subr.mxu0 0.0
        %4818 = vmatpush1.msra.mxu0 0.0
        %4819 = vmatprep.subr.mxu0 0.0
        %4820 = vmatpush1.msra.mxu0 0.0
        %4821 = vmatprep.subr.mxu0 0.0
        %4822 = vmatpush1.msra.mxu0 0.0
        %4823 = vmatprep.subr.mxu0 0.0
        %4824 = vmatpush1.msra.mxu0 0.0
        %4825 = vmatprep.subr.mxu0 0.0
        %4826 = vmatpush1.msra.mxu0 0.0
        %4827 = vmatprep.subr.mxu0 0.0
        %4828 = vmatpush1.msra.mxu0 0.0
        %4829 = vmatprep.subr.mxu0 0.0
        %4830 = vmatpush1.msra.mxu0 0.0
        %4831 = vmatprep.subr.mxu0 0.0
        %4832 = vmatpush1.msra.mxu0 0.0
        %4833 = vmatprep.subr.mxu0 0.0
        %4834 = vmatpush1.msra.mxu0 0.0
        %4835 = vmatprep.subr.mxu0 0.0
        %4836 = vmatpush1.msra.mxu0 0.0
        %4837 = vmatprep.subr.mxu0 0.0
        %4838 = vmatpush1.msra.mxu0 0.0
        %4839 = vmatprep.subr.mxu0 0.0
        %4840 = vmatpush1.msra.mxu0 0.0
        %4841 = vmatprep.subr.mxu0 0.0
        %4842 = vmatpush1.msra.mxu0 0.0
        %4843 = vmatprep.subr.mxu0 0.0
        %4844 = vmatpush1.msra.mxu0 0.0
        %4845 = vmatprep.subr.mxu0 0.0
        %4846 = vmatpush1.msra.mxu0 0.0
        %4847 = vmatprep.subr.mxu0 0.0
        %4848 = vmatpush1.msra.mxu0 0.0
        %4849 = vmatprep.subr.mxu0 0.0
        %4850 = vmatpush1.msra.mxu0 0.0
        %4851 = vmatprep.subr.mxu0 0.0
        %4852 = vmatpush1.msra.mxu0 0.0
        %4853 = vmatprep.subr.mxu0 0.0
        %4854 = vmatpush1.msra.mxu0 0.0
        %4855 = vmatprep.mubr.f32.mxu0 0.0
        %v4856 = vand.u32 %v2727, 4294901760
        %4857 = vmatmul.mubr.f32.gmra.mrb[0].mxu0 %v4856
        %v4858 = vpop.f32.mrb[0].mxu0
        %v4859 = vadd.f32 %v4683, %v4858
        %v4860 = vpop.f32.mrb[0].mxu0
        %4861 = vmatprep.mubr.f32.mxu0 0.0
        %v4862 = vand.u32 %v2730, 4294901760
        %4863 = vmatmul.mubr.f32.gmra.mrb[0].mxu0 %v4862
        %v4864 = vpop.f32.mrb[0].mxu0
        %v4865 = vadd.f32 %v4693, %v4864
        %v4866 = vpop.f32.mrb[0].mxu0
        %4867 = vmatprep.mubr.f32.mxu0 0.0
        %v4868 = vand.u32 %v2733, 4294901760
        %4869 = vmatmul.mubr.f32.gmra.mrb[0].mxu0 %v4868
        %v4870 = vpop.f32.mrb[0].mxu0
        %v4871 = vadd.f32 %v4703, %v4870
        %v4872 = vpop.f32.mrb[0].mxu0
        %4873 = vmatprep.mubr.f32.mxu0 0.0
        %v4874 = vand.u32 %v2736, 4294901760
        %4875 = vmatmul.mubr.f32.gmra.mrb[0].mxu0 %v4874
        %v4876 = vpop.f32.mrb[0].mxu0
        %v4877 = vadd.f32 %v4713, %v4876
        %v4878 = vpop.f32.mrb[0].mxu0
        %4879 = vmatprep.mubr.f32.mxu0 0.0
        %v4880 = vand.u32 %v2739, 4294901760
        %4881 = vmatmul.mubr.f32.gmra.mrb[0].mxu0 %v4880
        %v4882 = vpop.f32.mrb[0].mxu0
        %v4883 = vadd.f32 %v4723, %v4882
        %v4884 = vpop.f32.mrb[0].mxu0
        %4885 = vmatprep.mubr.f32.mxu0 0.0
        %v4886 = vand.u32 %v2742, 4294901760
        %4887 = vmatmul.mubr.f32.gmra.mrb[0].mxu0 %v4886
        %v4888 = vpop.f32.mrb[0].mxu0
        %v4889 = vadd.f32 %v4733, %v4888
        %v4890 = vpop.f32.mrb[0].mxu0
        %4891 = vmatprep.mubr.f32.mxu0 0.0
        %v4892 = vand.u32 %v2745, 4294901760
        %4893 = vmatmul.mubr.f32.gmra.mrb[0].mxu0 %v4892
        %v4894 = vpop.f32.mrb[0].mxu0
        %v4895 = vadd.f32 %v4743, %v4894
        %v4896 = vpop.f32.mrb[0].mxu0
        %4897 = vmatprep.mubr.f32.mxu0 0.0
        %v4898 = vand.u32 %v2748, 4294901760
        %4899 = vmatmul.mubr.f32.gmra.mrb[0].mxu0 %v4898
        %v4900 = vpop.f32.mrb[0].mxu0
        %v4901 = vadd.f32 %v4753, %v4900
        %v4902 = vpop.f32.mrb[0].mxu0
        %4903 = vmatprep.mubr.f32.mxu0 0.0
        %v4904 = vand.u32 %v2751, 4294901760
        %4905 = vmatmul.mubr.f32.gmra.mrb[0].mxu0 %v4904
        %v4906 = vpop.f32.mrb[0].mxu0
        %v4907 = vadd.f32 %v4763, %v4906
        %v4908 = vpop.f32.mrb[0].mxu0
        %4909 = vmatprep.mubr.f32.mxu0 0.0
        %v4910 = vand.u32 %v2754, 4294901760
        %4911 = vmatmul.mubr.f32.gmra.mrb[0].mxu0 %v4910
        %v4912 = vpop.f32.mrb[0].mxu0
        %v4913 = vadd.f32 %v4773, %v4912
        %v4914 = vpop.f32.mrb[0].mxu0
        %4915 = vmatprep.mubr.f32.mxu0 0.0
        %v4916 = vand.u32 %v2757, 4294901760
        %4917 = vmatmul.mubr.f32.gmra.mrb[0].mxu0 %v4916
        %v4918 = vpop.f32.mrb[0].mxu0
        %v4919 = vadd.f32 %v4783, %v4918
        %v4920 = vpop.f32.mrb[0].mxu0
        %4921 = vdwg.mxu0
        %4922 = vmatprep.subr.mxu0 0.0
        %v4923 = vand.u32 %v326, 4294901760
        %v4924 = vsub.f32 %v326, %v4923
        %4925 = vmatpush1.msra.mxu0 %v4924
        %4926 = vmatprep.subr.mxu0 0.0
        %4927 = vmatpush1.msra.mxu0 0.0
        %4928 = vmatprep.subr.mxu0 0.0
        %4929 = vmatpush1.msra.mxu0 0.0
        %4930 = vmatprep.subr.mxu0 0.0
        %4931 = vmatpush1.msra.mxu0 0.0
        %4932 = vmatprep.subr.mxu0 0.0
        %4933 = vmatpush1.msra.mxu0 0.0
        %4934 = vmatprep.subr.mxu0 0.0
        %4935 = vmatpush1.msra.mxu0 0.0
        %4936 = vmatprep.subr.mxu0 0.0
        %4937 = vmatpush1.msra.mxu0 0.0
        %4938 = vmatprep.subr.mxu0 0.0
        %4939 = vmatpush1.msra.mxu0 0.0
        %4940 = vmatprep.subr.mxu0 0.0
        %4941 = vmatpush1.msra.mxu0 0.0
        %4942 = vmatprep.subr.mxu0 0.0
        %4943 = vmatpush1.msra.mxu0 0.0
        %4944 = vmatprep.subr.mxu0 0.0
        %4945 = vmatpush1.msra.mxu0 0.0
        %4946 = vmatprep.subr.mxu0 0.0
        %4947 = vmatpush1.msra.mxu0 0.0
        %4948 = vmatprep.subr.mxu0 0.0
        %4949 = vmatpush1.msra.mxu0 0.0
        %4950 = vmatprep.subr.mxu0 0.0
        %4951 = vmatpush1.msra.mxu0 0.0
        %4952 = vmatprep.subr.mxu0 0.0
        %4953 = vmatpush1.msra.mxu0 0.0
        %4954 = vmatprep.subr.mxu0 0.0
        %4955 = vmatpush1.msra.mxu0 0.0
        %4956 = vmatprep.subr.mxu0 0.0
        %4957 = vmatpush1.msra.mxu0 0.0
        %4958 = vmatprep.subr.mxu0 0.0
        %4959 = vmatpush1.msra.mxu0 0.0
        %4960 = vmatprep.subr.mxu0 0.0
        %4961 = vmatpush1.msra.mxu0 0.0
        %4962 = vmatprep.subr.mxu0 0.0
        %4963 = vmatpush1.msra.mxu0 0.0
        %4964 = vmatprep.subr.mxu0 0.0
        %4965 = vmatpush1.msra.mxu0 0.0
        %4966 = vmatprep.subr.mxu0 0.0
        %4967 = vmatpush1.msra.mxu0 0.0
        %4968 = vmatprep.subr.mxu0 0.0
        %4969 = vmatpush1.msra.mxu0 0.0
        %4970 = vmatprep.subr.mxu0 0.0
        %4971 = vmatpush1.msra.mxu0 0.0
        %4972 = vmatprep.subr.mxu0 0.0
        %4973 = vmatpush1.msra.mxu0 0.0
        %4974 = vmatprep.subr.mxu0 0.0
        %4975 = vmatpush1.msra.mxu0 0.0
        %4976 = vmatprep.subr.mxu0 0.0
        %4977 = vmatpush1.msra.mxu0 0.0
        %4978 = vmatprep.subr.mxu0 0.0
        %4979 = vmatpush1.msra.mxu0 0.0
        %4980 = vmatprep.subr.mxu0 0.0
        %4981 = vmatpush1.msra.mxu0 0.0
        %4982 = vmatprep.subr.mxu0 0.0
        %4983 = vmatpush1.msra.mxu0 0.0
        %4984 = vmatprep.subr.mxu0 0.0
        %4985 = vmatpush1.msra.mxu0 0.0
        %4986 = vmatprep.subr.mxu0 0.0
        %4987 = vmatpush1.msra.mxu0 0.0
        %4988 = vmatprep.mubr.f32.mxu0 0.0
        %v4989 = vand.u32 %v2727, 4294901760
        %v4990 = vsub.f32 %v2727, %v4989
        %4991 = vmatmul.mubr.f32.gmra.mrb[0].mxu0 %v4990
        %v4992 = vpop.f32.mrb[0].mxu0
        %v4993 = vadd.f32 %v4859, %v4992
        %v4994 = vpop.f32.mrb[0].mxu0
        %4995 = vmatprep.mubr.f32.mxu0 0.0
        %v4996 = vand.u32 %v2730, 4294901760
        %v4997 = vsub.f32 %v2730, %v4996
        %4998 = vmatmul.mubr.f32.gmra.mrb[0].mxu0 %v4997
        %v4999 = vpop.f32.mrb[0].mxu0
        %v5000 = vadd.f32 %v4865, %v4999
        %v5001 = vpop.f32.mrb[0].mxu0
        %5002 = vmatprep.mubr.f32.mxu0 0.0
        %v5003 = vand.u32 %v2733, 4294901760
        %v5004 = vsub.f32 %v2733, %v5003
        %5005 = vmatmul.mubr.f32.gmra.mrb[0].mxu0 %v5004
        %v5006 = vpop.f32.mrb[0].mxu0
        %v5007 = vadd.f32 %v4871, %v5006
        %v5008 = vpop.f32.mrb[0].mxu0
        %5009 = vmatprep.mubr.f32.mxu0 0.0
        %v5010 = vand.u32 %v2736, 4294901760
        %v5011 = vsub.f32 %v2736, %v5010
        %5012 = vmatmul.mubr.f32.gmra.mrb[0].mxu0 %v5011
        %v5013 = vpop.f32.mrb[0].mxu0
        %v5014 = vadd.f32 %v4877, %v5013
        %v5015 = vpop.f32.mrb[0].mxu0
        %5016 = vmatprep.mubr.f32.mxu0 0.0
        %v5017 = vand.u32 %v2739, 4294901760
        %v5018 = vsub.f32 %v2739, %v5017
        %5019 = vmatmul.mubr.f32.gmra.mrb[0].mxu0 %v5018
        %v5020 = vpop.f32.mrb[0].mxu0
        %v5021 = vadd.f32 %v4883, %v5020
        %v5022 = vpop.f32.mrb[0].mxu0
        %5023 = vmatprep.mubr.f32.mxu0 0.0
        %v5024 = vand.u32 %v2742, 4294901760
        %v5025 = vsub.f32 %v2742, %v5024
        %5026 = vmatmul.mubr.f32.gmra.mrb[0].mxu0 %v5025
        %v5027 = vpop.f32.mrb[0].mxu0
        %v5028 = vadd.f32 %v4889, %v5027
        %v5029 = vpop.f32.mrb[0].mxu0
        %5030 = vmatprep.mubr.f32.mxu0 0.0
        %v5031 = vand.u32 %v2745, 4294901760
        %v5032 = vsub.f32 %v2745, %v5031
        %5033 = vmatmul.mubr.f32.gmra.mrb[0].mxu0 %v5032
        %v5034 = vpop.f32.mrb[0].mxu0
        %v5035 = vadd.f32 %v4895, %v5034
        %v5036 = vpop.f32.mrb[0].mxu0
        %5037 = vmatprep.mubr.f32.mxu0 0.0
        %v5038 = vand.u32 %v2748, 4294901760
        %v5039 = vsub.f32 %v2748, %v5038
        %5040 = vmatmul.mubr.f32.gmra.mrb[0].mxu0 %v5039
        %v5041 = vpop.f32.mrb[0].mxu0
        %v5042 = vadd.f32 %v4901, %v5041
        %v5043 = vpop.f32.mrb[0].mxu0
        %5044 = vmatprep.mubr.f32.mxu0 0.0
        %v5045 = vand.u32 %v2751, 4294901760
        %v5046 = vsub.f32 %v2751, %v5045
        %5047 = vmatmul.mubr.f32.gmra.mrb[0].mxu0 %v5046
        %v5048 = vpop.f32.mrb[0].mxu0
        %v5049 = vadd.f32 %v4907, %v5048
        %v5050 = vpop.f32.mrb[0].mxu0
        %5051 = vmatprep.mubr.f32.mxu0 0.0
        %v5052 = vand.u32 %v2754, 4294901760
        %v5053 = vsub.f32 %v2754, %v5052
        %5054 = vmatmul.mubr.f32.gmra.mrb[0].mxu0 %v5053
        %v5055 = vpop.f32.mrb[0].mxu0
        %v5056 = vadd.f32 %v4913, %v5055
        %v5057 = vpop.f32.mrb[0].mxu0
        %5058 = vmatprep.mubr.f32.mxu0 0.0
        %v5059 = vand.u32 %v2757, 4294901760
        %v5060 = vsub.f32 %v2757, %v5059
        %5061 = vmatmul.mubr.f32.gmra.mrb[0].mxu0 %v5060
        %v5062 = vpop.f32.mrb[0].mxu0
        %v5063 = vadd.f32 %v4919, %v5062
        %v5064 = vpop.f32.mrb[0].mxu0
        %5065 = vdwg.mxu0
        %5066 = vmatprep.subr.mxu0 0.0
        %v5067 = vand.u32 %v326, 4294901760
        %5068 = vmatpush1.msra.mxu0 %v5067
        %5069 = vmatprep.subr.mxu0 0.0
        %5070 = vmatpush1.msra.mxu0 0.0
        %5071 = vmatprep.subr.mxu0 0.0
        %5072 = vmatpush1.msra.mxu0 0.0
        %5073 = vmatprep.subr.mxu0 0.0
        %5074 = vmatpush1.msra.mxu0 0.0
        %5075 = vmatprep.subr.mxu0 0.0
        %5076 = vmatpush1.msra.mxu0 0.0
        %5077 = vmatprep.subr.mxu0 0.0
        %5078 = vmatpush1.msra.mxu0 0.0
        %5079 = vmatprep.subr.mxu0 0.0
        %5080 = vmatpush1.msra.mxu0 0.0
        %5081 = vmatprep.subr.mxu0 0.0
        %5082 = vmatpush1.msra.mxu0 0.0
        %5083 = vmatprep.subr.mxu0 0.0
        %5084 = vmatpush1.msra.mxu0 0.0
        %5085 = vmatprep.subr.mxu0 0.0
        %5086 = vmatpush1.msra.mxu0 0.0
        %5087 = vmatprep.subr.mxu0 0.0
        %5088 = vmatpush1.msra.mxu0 0.0
        %5089 = vmatprep.subr.mxu0 0.0
        %5090 = vmatpush1.msra.mxu0 0.0
        %5091 = vmatprep.subr.mxu0 0.0
        %5092 = vmatpush1.msra.mxu0 0.0
        %5093 = vmatprep.subr.mxu0 0.0
        %5094 = vmatpush1.msra.mxu0 0.0
        %5095 = vmatprep.subr.mxu0 0.0
        %5096 = vmatpush1.msra.mxu0 0.0
        %5097 = vmatprep.subr.mxu0 0.0
        %5098 = vmatpush1.msra.mxu0 0.0
        %5099 = vmatprep.subr.mxu0 0.0
        %5100 = vmatpush1.msra.mxu0 0.0
        %5101 = vmatprep.subr.mxu0 0.0
        %5102 = vmatpush1.msra.mxu0 0.0
        %5103 = vmatprep.subr.mxu0 0.0
        %5104 = vmatpush1.msra.mxu0 0.0
        %5105 = vmatprep.subr.mxu0 0.0
        %5106 = vmatpush1.msra.mxu0 0.0
        %5107 = vmatprep.subr.mxu0 0.0
        %5108 = vmatpush1.msra.mxu0 0.0
        %5109 = vmatprep.subr.mxu0 0.0
        %5110 = vmatpush1.msra.mxu0 0.0
        %5111 = vmatprep.subr.mxu0 0.0
        %5112 = vmatpush1.msra.mxu0 0.0
        %5113 = vmatprep.subr.mxu0 0.0
        %5114 = vmatpush1.msra.mxu0 0.0
        %5115 = vmatprep.subr.mxu0 0.0
        %5116 = vmatpush1.msra.mxu0 0.0
        %5117 = vmatprep.subr.mxu0 0.0
        %5118 = vmatpush1.msra.mxu0 0.0
        %5119 = vmatprep.subr.mxu0 0.0
        %5120 = vmatpush1.msra.mxu0 0.0
        %5121 = vmatprep.subr.mxu0 0.0
        %5122 = vmatpush1.msra.mxu0 0.0
        %5123 = vmatprep.subr.mxu0 0.0
        %5124 = vmatpush1.msra.mxu0 0.0
        %5125 = vmatprep.subr.mxu0 0.0
        %5126 = vmatpush1.msra.mxu0 0.0
        %5127 = vmatprep.subr.mxu0 0.0
        %5128 = vmatpush1.msra.mxu0 0.0
        %5129 = vmatprep.subr.mxu0 0.0
        %5130 = vmatpush1.msra.mxu0 0.0
        %5131 = vmatprep.mubr.f32.mxu0 0.0
        %v5132 = vand.u32 %v2727, 4294901760
        %v5133 = vsub.f32 %v2727, %v5132
        %v5134 = vand.u32 %v5133, 4294901760
        %5135 = vmatmul.mubr.f32.gmra.mrb[0].mxu0 %v5134
        %v5136 = vpop.f32.mrb[0].mxu0
        %v5137 = vadd.f32 %v4993, %v5136
        %v5138 = vpop.f32.mrb[0].mxu0
        %5139 = vmatprep.mubr.f32.mxu0 0.0
        %v5140 = vand.u32 %v2730, 4294901760
        %v5141 = vsub.f32 %v2730, %v5140
        %v5142 = vand.u32 %v5141, 4294901760
        %5143 = vmatmul.mubr.f32.gmra.mrb[0].mxu0 %v5142
        %v5144 = vpop.f32.mrb[0].mxu0
        %v5145 = vadd.f32 %v5000, %v5144
        %v5146 = vpop.f32.mrb[0].mxu0
        %5147 = vmatprep.mubr.f32.mxu0 0.0
        %v5148 = vand.u32 %v2733, 4294901760
        %v5149 = vsub.f32 %v2733, %v5148
        %v5150 = vand.u32 %v5149, 4294901760
        %5151 = vmatmul.mubr.f32.gmra.mrb[0].mxu0 %v5150
        %v5152 = vpop.f32.mrb[0].mxu0
        %v5153 = vadd.f32 %v5007, %v5152
        %v5154 = vpop.f32.mrb[0].mxu0
        %5155 = vmatprep.mubr.f32.mxu0 0.0
        %v5156 = vand.u32 %v2736, 4294901760
        %v5157 = vsub.f32 %v2736, %v5156
        %v5158 = vand.u32 %v5157, 4294901760
        %5159 = vmatmul.mubr.f32.gmra.mrb[0].mxu0 %v5158
        %v5160 = vpop.f32.mrb[0].mxu0
        %v5161 = vadd.f32 %v5014, %v5160
        %v5162 = vpop.f32.mrb[0].mxu0
        %5163 = vmatprep.mubr.f32.mxu0 0.0
        %v5164 = vand.u32 %v2739, 4294901760
        %v5165 = vsub.f32 %v2739, %v5164
        %v5166 = vand.u32 %v5165, 4294901760
        %5167 = vmatmul.mubr.f32.gmra.mrb[0].mxu0 %v5166
        %v5168 = vpop.f32.mrb[0].mxu0
        %v5169 = vadd.f32 %v5021, %v5168
        %v5170 = vpop.f32.mrb[0].mxu0
        %5171 = vmatprep.mubr.f32.mxu0 0.0
        %v5172 = vand.u32 %v2742, 4294901760
        %v5173 = vsub.f32 %v2742, %v5172
        %v5174 = vand.u32 %v5173, 4294901760
        %5175 = vmatmul.mubr.f32.gmra.mrb[0].mxu0 %v5174
        %v5176 = vpop.f32.mrb[0].mxu0
        %v5177 = vadd.f32 %v5028, %v5176
        %v5178 = vpop.f32.mrb[0].mxu0
        %5179 = vmatprep.mubr.f32.mxu0 0.0
        %v5180 = vand.u32 %v2745, 4294901760
        %v5181 = vsub.f32 %v2745, %v5180
        %v5182 = vand.u32 %v5181, 4294901760
        %5183 = vmatmul.mubr.f32.gmra.mrb[0].mxu0 %v5182
        %v5184 = vpop.f32.mrb[0].mxu0
        %v5185 = vadd.f32 %v5035, %v5184
        %v5186 = vpop.f32.mrb[0].mxu0
        %5187 = vmatprep.mubr.f32.mxu0 0.0
        %v5188 = vand.u32 %v2748, 4294901760
        %v5189 = vsub.f32 %v2748, %v5188
        %v5190 = vand.u32 %v5189, 4294901760
        %5191 = vmatmul.mubr.f32.gmra.mrb[0].mxu0 %v5190
        %v5192 = vpop.f32.mrb[0].mxu0
        %v5193 = vadd.f32 %v5042, %v5192
        %v5194 = vpop.f32.mrb[0].mxu0
        %5195 = vmatprep.mubr.f32.mxu0 0.0
        %v5196 = vand.u32 %v2751, 4294901760
        %v5197 = vsub.f32 %v2751, %v5196
        %v5198 = vand.u32 %v5197, 4294901760
        %5199 = vmatmul.mubr.f32.gmra.mrb[0].mxu0 %v5198
        %v5200 = vpop.f32.mrb[0].mxu0
        %v5201 = vadd.f32 %v5049, %v5200
        %v5202 = vpop.f32.mrb[0].mxu0
        %5203 = vmatprep.mubr.f32.mxu0 0.0
        %v5204 = vand.u32 %v2754, 4294901760
        %v5205 = vsub.f32 %v2754, %v5204
        %v5206 = vand.u32 %v5205, 4294901760
        %5207 = vmatmul.mubr.f32.gmra.mrb[0].mxu0 %v5206
        %v5208 = vpop.f32.mrb[0].mxu0
        %v5209 = vadd.f32 %v5056, %v5208
        %v5210 = vpop.f32.mrb[0].mxu0
        %5211 = vmatprep.mubr.f32.mxu0 0.0
        %v5212 = vand.u32 %v2757, 4294901760
        %v5213 = vsub.f32 %v2757, %v5212
        %v5214 = vand.u32 %v5213, 4294901760
        %5215 = vmatmul.mubr.f32.gmra.mrb[0].mxu0 %v5214
        %v5216 = vpop.f32.mrb[0].mxu0
        %v5217 = vadd.f32 %v5063, %v5216
        %v5218 = vpop.f32.mrb[0].mxu0
        %5219 = vdwg.mxu0
        %5220 = vmatprep.subr.mxu0 0.0
        %v5221 = vand.u32 %v326, 4294901760
        %v5222 = vsub.f32 %v326, %v5221
        %v5223 = vand.u32 %v5222, 4294901760
        %5224 = vmatpush1.msra.mxu0 %v5223
        %5225 = vmatprep.subr.mxu0 0.0
        %5226 = vmatpush1.msra.mxu0 0.0
        %5227 = vmatprep.subr.mxu0 0.0
        %5228 = vmatpush1.msra.mxu0 0.0
        %5229 = vmatprep.subr.mxu0 0.0
        %5230 = vmatpush1.msra.mxu0 0.0
        %5231 = vmatprep.subr.mxu0 0.0
        %5232 = vmatpush1.msra.mxu0 0.0
        %5233 = vmatprep.subr.mxu0 0.0
        %5234 = vmatpush1.msra.mxu0 0.0
        %5235 = vmatprep.subr.mxu0 0.0
        %5236 = vmatpush1.msra.mxu0 0.0
        %5237 = vmatprep.subr.mxu0 0.0
        %5238 = vmatpush1.msra.mxu0 0.0
        %5239 = vmatprep.subr.mxu0 0.0
        %5240 = vmatpush1.msra.mxu0 0.0
        %5241 = vmatprep.subr.mxu0 0.0
        %5242 = vmatpush1.msra.mxu0 0.0
        %5243 = vmatprep.subr.mxu0 0.0
        %5244 = vmatpush1.msra.mxu0 0.0
        %5245 = vmatprep.subr.mxu0 0.0
        %5246 = vmatpush1.msra.mxu0 0.0
        %5247 = vmatprep.subr.mxu0 0.0
        %5248 = vmatpush1.msra.mxu0 0.0
        %5249 = vmatprep.subr.mxu0 0.0
        %5250 = vmatpush1.msra.mxu0 0.0
        %5251 = vmatprep.subr.mxu0 0.0
        %5252 = vmatpush1.msra.mxu0 0.0
        %5253 = vmatprep.subr.mxu0 0.0
        %5254 = vmatpush1.msra.mxu0 0.0
        %5255 = vmatprep.subr.mxu0 0.0
        %5256 = vmatpush1.msra.mxu0 0.0
        %5257 = vmatprep.subr.mxu0 0.0
        %5258 = vmatpush1.msra.mxu0 0.0
        %5259 = vmatprep.subr.mxu0 0.0
        %5260 = vmatpush1.msra.mxu0 0.0
        %5261 = vmatprep.subr.mxu0 0.0
        %5262 = vmatpush1.msra.mxu0 0.0
        %5263 = vmatprep.subr.mxu0 0.0
        %5264 = vmatpush1.msra.mxu0 0.0
        %5265 = vmatprep.subr.mxu0 0.0
        %5266 = vmatpush1.msra.mxu0 0.0
        %5267 = vmatprep.subr.mxu0 0.0
        %5268 = vmatpush1.msra.mxu0 0.0
        %5269 = vmatprep.subr.mxu0 0.0
        %5270 = vmatpush1.msra.mxu0 0.0
        %5271 = vmatprep.subr.mxu0 0.0
        %5272 = vmatpush1.msra.mxu0 0.0
        %5273 = vmatprep.subr.mxu0 0.0
        %5274 = vmatpush1.msra.mxu0 0.0
        %5275 = vmatprep.subr.mxu0 0.0
        %5276 = vmatpush1.msra.mxu0 0.0
        %5277 = vmatprep.subr.mxu0 0.0
        %5278 = vmatpush1.msra.mxu0 0.0
        %5279 = vmatprep.subr.mxu0 0.0
        %5280 = vmatpush1.msra.mxu0 0.0
        %5281 = vmatprep.subr.mxu0 0.0
        %5282 = vmatpush1.msra.mxu0 0.0
        %5283 = vmatprep.subr.mxu0 0.0
        %5284 = vmatpush1.msra.mxu0 0.0
        %5285 = vmatprep.subr.mxu0 0.0
        %5286 = vmatpush1.msra.mxu0 0.0
        %5287 = vmatprep.mubr.f32.mxu0 0.0
        %v5288 = vand.u32 %v2727, 4294901760
        %5289 = vmatmul.mubr.f32.gmra.mrb[0].mxu0 %v5288
        %v5290 = vpop.f32.mrb[0].mxu0
        %v5291 = vadd.f32 %v5137, %v5290
        %v5292 = vpop.f32.mrb[0].mxu0
        %5293 = vmatprep.mubr.f32.mxu0 0.0
        %v5294 = vand.u32 %v2730, 4294901760
        %5295 = vmatmul.mubr.f32.gmra.mrb[0].mxu0 %v5294
        %v5296 = vpop.f32.mrb[0].mxu0
        %v5297 = vadd.f32 %v5145, %v5296
        %v5298 = vpop.f32.mrb[0].mxu0
        %5299 = vmatprep.mubr.f32.mxu0 0.0
        %v5300 = vand.u32 %v2733, 4294901760
        %5301 = vmatmul.mubr.f32.gmra.mrb[0].mxu0 %v5300
        %v5302 = vpop.f32.mrb[0].mxu0
        %v5303 = vadd.f32 %v5153, %v5302
        %v5304 = vpop.f32.mrb[0].mxu0
        %5305 = vmatprep.mubr.f32.mxu0 0.0
        %v5306 = vand.u32 %v2736, 4294901760
        %5307 = vmatmul.mubr.f32.gmra.mrb[0].mxu0 %v5306
        %v5308 = vpop.f32.mrb[0].mxu0
        %v5309 = vadd.f32 %v5161, %v5308
        %v5310 = vpop.f32.mrb[0].mxu0
        %5311 = vmatprep.mubr.f32.mxu0 0.0
        %v5312 = vand.u32 %v2739, 4294901760
        %5313 = vmatmul.mubr.f32.gmra.mrb[0].mxu0 %v5312
        %v5314 = vpop.f32.mrb[0].mxu0
        %v5315 = vadd.f32 %v5169, %v5314
        %v5316 = vpop.f32.mrb[0].mxu0
        %5317 = vmatprep.mubr.f32.mxu0 0.0
        %v5318 = vand.u32 %v2742, 4294901760
        %5319 = vmatmul.mubr.f32.gmra.mrb[0].mxu0 %v5318
        %v5320 = vpop.f32.mrb[0].mxu0
        %v5321 = vadd.f32 %v5177, %v5320
        %v5322 = vpop.f32.mrb[0].mxu0
        %5323 = vmatprep.mubr.f32.mxu0 0.0
        %v5324 = vand.u32 %v2745, 4294901760
        %5325 = vmatmul.mubr.f32.gmra.mrb[0].mxu0 %v5324
        %v5326 = vpop.f32.mrb[0].mxu0
        %v5327 = vadd.f32 %v5185, %v5326
        %v5328 = vpop.f32.mrb[0].mxu0
        %5329 = vmatprep.mubr.f32.mxu0 0.0
        %v5330 = vand.u32 %v2748, 4294901760
        %5331 = vmatmul.mubr.f32.gmra.mrb[0].mxu0 %v5330
        %v5332 = vpop.f32.mrb[0].mxu0
        %v5333 = vadd.f32 %v5193, %v5332
        %v5334 = vpop.f32.mrb[0].mxu0
        %5335 = vmatprep.mubr.f32.mxu0 0.0
        %v5336 = vand.u32 %v2751, 4294901760
        %5337 = vmatmul.mubr.f32.gmra.mrb[0].mxu0 %v5336
        %v5338 = vpop.f32.mrb[0].mxu0
        %v5339 = vadd.f32 %v5201, %v5338
        %v5340 = vpop.f32.mrb[0].mxu0
        %5341 = vmatprep.mubr.f32.mxu0 0.0
        %v5342 = vand.u32 %v2754, 4294901760
        %5343 = vmatmul.mubr.f32.gmra.mrb[0].mxu0 %v5342
        %v5344 = vpop.f32.mrb[0].mxu0
        %v5345 = vadd.f32 %v5209, %v5344
        %v5346 = vpop.f32.mrb[0].mxu0
        %5347 = vmatprep.mubr.f32.mxu0 0.0
        %v5348 = vand.u32 %v2757, 4294901760
        %5349 = vmatmul.mubr.f32.gmra.mrb[0].mxu0 %v5348
        %v5350 = vpop.f32.mrb[0].mxu0
        %v5351 = vadd.f32 %v5217, %v5350
        %v5352 = vpop.f32.mrb[0].mxu0
        %5353 = vdwg.mxu0
        %5354 = vmatprep.subr.mxu0 0.0
        %v5355 = vand.u32 %v326, 4294901760
        %5356 = vmatpush1.msra.mxu0 %v5355
        %5357 = vmatprep.subr.mxu0 0.0
        %5358 = vmatpush1.msra.mxu0 0.0
        %5359 = vmatprep.subr.mxu0 0.0
        %5360 = vmatpush1.msra.mxu0 0.0
        %5361 = vmatprep.subr.mxu0 0.0
        %5362 = vmatpush1.msra.mxu0 0.0
        %5363 = vmatprep.subr.mxu0 0.0
        %5364 = vmatpush1.msra.mxu0 0.0
        %5365 = vmatprep.subr.mxu0 0.0
        %5366 = vmatpush1.msra.mxu0 0.0
        %5367 = vmatprep.subr.mxu0 0.0
        %5368 = vmatpush1.msra.mxu0 0.0
        %5369 = vmatprep.subr.mxu0 0.0
        %5370 = vmatpush1.msra.mxu0 0.0
        %5371 = vmatprep.subr.mxu0 0.0
        %5372 = vmatpush1.msra.mxu0 0.0
        %5373 = vmatprep.subr.mxu0 0.0
        %5374 = vmatpush1.msra.mxu0 0.0
        %5375 = vmatprep.subr.mxu0 0.0
        %5376 = vmatpush1.msra.mxu0 0.0
        %5377 = vmatprep.subr.mxu0 0.0
        %5378 = vmatpush1.msra.mxu0 0.0
        %5379 = vmatprep.subr.mxu0 0.0
        %5380 = vmatpush1.msra.mxu0 0.0
        %5381 = vmatprep.subr.mxu0 0.0
        %5382 = vmatpush1.msra.mxu0 0.0
        %5383 = vmatprep.subr.mxu0 0.0
        %5384 = vmatpush1.msra.mxu0 0.0
        %5385 = vmatprep.subr.mxu0 0.0
        %5386 = vmatpush1.msra.mxu0 0.0
        %5387 = vmatprep.subr.mxu0 0.0
        %5388 = vmatpush1.msra.mxu0 0.0
        %5389 = vmatprep.subr.mxu0 0.0
        %5390 = vmatpush1.msra.mxu0 0.0
        %5391 = vmatprep.subr.mxu0 0.0
        %5392 = vmatpush1.msra.mxu0 0.0
        %5393 = vmatprep.subr.mxu0 0.0
        %5394 = vmatpush1.msra.mxu0 0.0
        %5395 = vmatprep.subr.mxu0 0.0
        %5396 = vmatpush1.msra.mxu0 0.0
        %5397 = vmatprep.subr.mxu0 0.0
        %5398 = vmatpush1.msra.mxu0 0.0
        %5399 = vmatprep.subr.mxu0 0.0
        %5400 = vmatpush1.msra.mxu0 0.0
        %5401 = vmatprep.subr.mxu0 0.0
        %5402 = vmatpush1.msra.mxu0 0.0
        %5403 = vmatprep.subr.mxu0 0.0
        %5404 = vmatpush1.msra.mxu0 0.0
        %5405 = vmatprep.subr.mxu0 0.0
        %5406 = vmatpush1.msra.mxu0 0.0
        %5407 = vmatprep.subr.mxu0 0.0
        %5408 = vmatpush1.msra.mxu0 0.0
        %5409 = vmatprep.subr.mxu0 0.0
        %5410 = vmatpush1.msra.mxu0 0.0
        %5411 = vmatprep.subr.mxu0 0.0
        %5412 = vmatpush1.msra.mxu0 0.0
        %5413 = vmatprep.subr.mxu0 0.0
        %5414 = vmatpush1.msra.mxu0 0.0
        %5415 = vmatprep.subr.mxu0 0.0
        %5416 = vmatpush1.msra.mxu0 0.0
        %5417 = vmatprep.subr.mxu0 0.0
        %5418 = vmatpush1.msra.mxu0 0.0
        %5419 = vmatprep.mubr.f32.mxu0 0.0
        %v5420 = vand.u32 %v2727, 4294901760
        %5421 = vmatmul.mubr.f32.gmra.mrb[0].mxu0 %v5420
        %v5422 = vpop.f32.mrb[0].mxu0
        %v5423 = vadd.f32 %v5291, %v5422
        %v5424 = vpop.f32.mrb[0].mxu0
        %5425 = vmatprep.mubr.f32.mxu0 0.0
        %v5426 = vand.u32 %v2730, 4294901760
        %5427 = vmatmul.mubr.f32.gmra.mrb[0].mxu0 %v5426
        %v5428 = vpop.f32.mrb[0].mxu0
        %v5429 = vadd.f32 %v5297, %v5428
        %v5430 = vpop.f32.mrb[0].mxu0
        %5431 = vmatprep.mubr.f32.mxu0 0.0
        %v5432 = vand.u32 %v2733, 4294901760
        %5433 = vmatmul.mubr.f32.gmra.mrb[0].mxu0 %v5432
        %v5434 = vpop.f32.mrb[0].mxu0
        %v5435 = vadd.f32 %v5303, %v5434
        %v5436 = vpop.f32.mrb[0].mxu0
        %5437 = vmatprep.mubr.f32.mxu0 0.0
        %v5438 = vand.u32 %v2736, 4294901760
        %5439 = vmatmul.mubr.f32.gmra.mrb[0].mxu0 %v5438
        %v5440 = vpop.f32.mrb[0].mxu0
        %v5441 = vadd.f32 %v5309, %v5440
        %v5442 = vpop.f32.mrb[0].mxu0
        %5443 = vmatprep.mubr.f32.mxu0 0.0
        %v5444 = vand.u32 %v2739, 4294901760
        %5445 = vmatmul.mubr.f32.gmra.mrb[0].mxu0 %v5444
        %v5446 = vpop.f32.mrb[0].mxu0
        %v5447 = vadd.f32 %v5315, %v5446
        %v5448 = vpop.f32.mrb[0].mxu0
        %5449 = vmatprep.mubr.f32.mxu0 0.0
        %v5450 = vand.u32 %v2742, 4294901760
        %5451 = vmatmul.mubr.f32.gmra.mrb[0].mxu0 %v5450
        %v5452 = vpop.f32.mrb[0].mxu0
        %v5453 = vadd.f32 %v5321, %v5452
        %v5454 = vpop.f32.mrb[0].mxu0
        %5455 = vmatprep.mubr.f32.mxu0 0.0
        %v5456 = vand.u32 %v2745, 4294901760
        %5457 = vmatmul.mubr.f32.gmra.mrb[0].mxu0 %v5456
        %v5458 = vpop.f32.mrb[0].mxu0
        %v5459 = vadd.f32 %v5327, %v5458
        %v5460 = vpop.f32.mrb[0].mxu0
        %5461 = vmatprep.mubr.f32.mxu0 0.0
        %v5462 = vand.u32 %v2748, 4294901760
        %5463 = vmatmul.mubr.f32.gmra.mrb[0].mxu0 %v5462
        %v5464 = vpop.f32.mrb[0].mxu0
        %v5465 = vadd.f32 %v5333, %v5464
        %v5466 = vpop.f32.mrb[0].mxu0
        %5467 = vmatprep.mubr.f32.mxu0 0.0
        %v5468 = vand.u32 %v2751, 4294901760
        %5469 = vmatmul.mubr.f32.gmra.mrb[0].mxu0 %v5468
        %v5470 = vpop.f32.mrb[0].mxu0
        %v5471 = vadd.f32 %v5339, %v5470
        %v5472 = vpop.f32.mrb[0].mxu0
        %5473 = vmatprep.mubr.f32.mxu0 0.0
        %v5474 = vand.u32 %v2754, 4294901760
        %5475 = vmatmul.mubr.f32.gmra.mrb[0].mxu0 %v5474
        %v5476 = vpop.f32.mrb[0].mxu0
        %v5477 = vadd.f32 %v5345, %v5476
        %v5478 = vpop.f32.mrb[0].mxu0
        %5479 = vmatprep.mubr.f32.mxu0 0.0
        %v5480 = vand.u32 %v2757, 4294901760
        %5481 = vmatmul.mubr.f32.gmra.mrb[0].mxu0 %v5480
        %v5482 = vpop.f32.mrb[0].mxu0
        %v5483 = vadd.f32 %v5351, %v5482
        %v5484 = vpop.f32.mrb[0].mxu0
        %5485 = vdwg.mxu0
        %vm5486 = vcmp.gt.f32.partialorder %v288, %v5423
        %vm5487 = vcmp.gt.f32.partialorder %v289, %v5429
        %vm5488 = vcmp.gt.f32.partialorder %v290, %v5435
        %vm5489 = vcmp.gt.f32.partialorder %v291, %v5441
        %vm5490 = vcmp.gt.f32.partialorder %v292, %v5447
        %vm5491 = vcmp.gt.f32.partialorder %v293, %v5453
        %vm5492 = vcmp.gt.f32.partialorder %v294, %v5459
        %vm5493 = vcmp.gt.f32.partialorder %v295, %v5465
        %vm5494 = vcmp.gt.f32.partialorder %v296, %v5471
        %vm5495 = vcmp.gt.f32.partialorder %v297, %v5477
        %vm5496 = vcmp.gt.f32.partialorder %v298, %v5483
        %vm5497 = vcmp.eq.f32.partialorder %v288, %v5423
        %vm5498 = vcmp.eq.f32.partialorder %v289, %v5429
        %vm5499 = vcmp.eq.f32.partialorder %v290, %v5435
        %vm5500 = vcmp.eq.f32.partialorder %v291, %v5441
        %vm5501 = vcmp.eq.f32.partialorder %v292, %v5447
        %vm5502 = vcmp.eq.f32.partialorder %v293, %v5453
        %vm5503 = vcmp.eq.f32.partialorder %v294, %v5459
        %vm5504 = vcmp.eq.f32.partialorder %v295, %v5465
        %vm5505 = vcmp.eq.f32.partialorder %v296, %v5471
        %vm5506 = vcmp.eq.f32.partialorder %v297, %v5477
        %vm5507 = vcmp.eq.f32.partialorder %v298, %v5483
        %v5508 = vsub.f32 %v432, 0.5
        %v5509 = vsub.f32 %v437, 0.5
        %v5510 = vsub.f32 %v442, 0.5
        %v5511 = vsub.f32 %v447, 0.5
        %v5512 = vsub.f32 %v452, 0.5
        %v5513 = vsub.f32 %v457, 0.5
        %v5514 = vsub.f32 %v462, 0.5
        %v5515 = vsub.f32 %v467, 0.5
        %v5516 = vsub.f32 %v472, 0.5
        %v5517 = vsub.f32 %v477, 0.5
        %v5518 = vsub.f32 %v482, 0.5
        %vm5519 = vcmp.lt.f32.partialorder %v330, %v5508
        %vm5520 = vcmp.lt.f32.partialorder %v330, %v5509
        %vm5521 = vcmp.lt.f32.partialorder %v330, %v5510
        %vm5522 = vcmp.lt.f32.partialorder %v330, %v5511
        %vm5523 = vcmp.lt.f32.partialorder %v330, %v5512
        %vm5524 = vcmp.lt.f32.partialorder %v330, %v5513
        %vm5525 = vcmp.lt.f32.partialorder %v330, %v5514
        %vm5526 = vcmp.lt.f32.partialorder %v330, %v5515
        %vm5527 = vcmp.lt.f32.partialorder %v330, %v5516
        %vm5528 = vcmp.lt.f32.partialorder %v330, %v5517
        %vm5529 = vcmp.lt.f32.partialorder %v330, %v5518
        %vm5530 = vmand %vm5497, %vm5519
        %vm5531 = vmand %vm5498, %vm5520
        %vm5532 = vmand %vm5499, %vm5521
        %vm5533 = vmand %vm5500, %vm5522
        %vm5534 = vmand %vm5501, %vm5523
        %vm5535 = vmand %vm5502, %vm5524
        %vm5536 = vmand %vm5503, %vm5525
        %vm5537 = vmand %vm5504, %vm5526
        %vm5538 = vmand %vm5505, %vm5527
        %vm5539 = vmand %vm5506, %vm5528
        %vm5540 = vmand %vm5507, %vm5529
        %vm5541 = vmor %vm5486, %vm5530
        %vm5542 = vmor %vm5487, %vm5531
        %vm5543 = vmor %vm5488, %vm5532
        %vm5544 = vmor %vm5489, %vm5533
        %vm5545 = vmor %vm5490, %vm5534
        %vm5546 = vmor %vm5491, %vm5535
        %vm5547 = vmor %vm5492, %vm5536
        %vm5548 = vmor %vm5493, %vm5537
        %vm5549 = vmor %vm5494, %vm5538
        %vm5550 = vmor %vm5495, %vm5539
        %vm5551 = vmor %vm5496, %vm5540
        %v5552 = vsel %vm5541, 1, 0
        %v5553 = vsel %vm5542, 1, 0
        %v5554 = vsel %vm5543, 1, 0
        %v5555 = vsel %vm5544, 1, 0
        %v5556 = vsel %vm5545, 1, 0
        %v5557 = vsel %vm5546, 1, 0
        %v5558 = vsel %vm5547, 1, 0
        %v5559 = vsel %vm5548, 1, 0
        %v5560 = vsel %vm5549, 1, 0
        %v5561 = vsel %vm5550, 1, 0
        %v5562 = vsel %vm5551, 1, 0
        %v5563 = vcvt.s32.f32 %v5552
        %v5564 = vcvt.s32.f32 %v5553
        %v5565 = vcvt.s32.f32 %v5554
        %v5566 = vcvt.s32.f32 %v5555
        %v5567 = vcvt.s32.f32 %v5556
        %v5568 = vcvt.s32.f32 %v5557
        %v5569 = vcvt.s32.f32 %v5558
        %v5570 = vcvt.s32.f32 %v5559
        %v5571 = vcvt.s32.f32 %v5560
        %v5572 = vcvt.s32.f32 %v5561
        %v5573 = vcvt.s32.f32 %v5562
        %5574 = vmatprep.subr.mxu0 0.0
        %5575 = vmatpush1.msra.mxu0 %v310
        %5576 = vmatprep.subr.mxu0 0.0
        %5577 = vmatpush1.msra.mxu0 %v311
        %5578 = vmatprep.subr.mxu0 0.0
        %5579 = vmatpush1.msra.mxu0 %v312
        %5580 = vmatprep.subr.mxu0 0.0
        %5581 = vmatpush1.msra.mxu0 %v313
        %5582 = vmatprep.subr.mxu0 0.0
        %5583 = vmatpush1.msra.mxu0 %v314
        %5584 = vmatprep.subr.mxu0 0.0
        %5585 = vmatpush1.msra.mxu0 %v315
        %5586 = vmatprep.subr.mxu0 0.0
        %5587 = vmatpush1.msra.mxu0 %v316
        %5588 = vmatprep.subr.mxu0 0.0
        %5589 = vmatpush1.msra.mxu0 %v317
        %5590 = vmatprep.subr.mxu0 0.0
        %5591 = vmatpush1.msra.mxu0 %v318
        %5592 = vmatprep.subr.mxu0 0.0
        %5593 = vmatpush1.msra.mxu0 %v319
        %5594 = vmatprep.subr.mxu0 0.0
        %5595 = vmatpush1.msra.mxu0 %v320
        %5596 = vmatprep.subr.mxu0 0.0
        %5597 = vmatpush1.msra.mxu0 %v321
        %5598 = vmatprep.subr.mxu0 0.0
        %5599 = vmatpush1.msra.mxu0 %v322
        %5600 = vmatprep.subr.mxu0 0.0
        %5601 = vmatpush1.msra.mxu0 %v323
        %5602 = vmatprep.subr.mxu0 0.0
        %5603 = vmatpush1.msra.mxu0 %v324
        %5604 = vmatprep.subr.mxu0 0.0
        %5605 = vmatpush1.msra.mxu0 %v325
        %5606 = vmatprep.subr.mxu0 0.0
        %5607 = vmatpush1.msra.mxu0 0.0
        %5608 = vmatprep.subr.mxu0 0.0
        %5609 = vmatpush1.msra.mxu0 0.0
        %5610 = vmatprep.subr.mxu0 0.0
        %5611 = vmatpush1.msra.mxu0 0.0
        %5612 = vmatprep.subr.mxu0 0.0
        %5613 = vmatpush1.msra.mxu0 0.0
        %5614 = vmatprep.subr.mxu0 0.0
        %5615 = vmatpush1.msra.mxu0 0.0
        %5616 = vmatprep.subr.mxu0 0.0
        %5617 = vmatpush1.msra.mxu0 0.0
        %5618 = vmatprep.subr.mxu0 0.0
        %5619 = vmatpush1.msra.mxu0 0.0
        %5620 = vmatprep.subr.mxu0 0.0
        %5621 = vmatpush1.msra.mxu0 0.0
        %5622 = vmatprep.subr.mxu0 0.0
        %5623 = vmatpush1.msra.mxu0 0.0
        %5624 = vmatprep.subr.mxu0 0.0
        %5625 = vmatpush1.msra.mxu0 0.0
        %5626 = vmatprep.subr.mxu0 0.0
        %5627 = vmatpush1.msra.mxu0 0.0
        %5628 = vmatprep.subr.mxu0 0.0
        %5629 = vmatpush1.msra.mxu0 0.0
        %5630 = vmatprep.subr.mxu0 0.0
        %5631 = vmatpush1.msra.mxu0 0.0
        %5632 = vmatprep.subr.mxu0 0.0
        %5633 = vmatpush1.msra.mxu0 0.0
        %5634 = vmatprep.subr.mxu0 0.0
        %5635 = vmatpush1.msra.mxu0 0.0
        %5636 = vmatprep.subr.mxu0 0.0
        %5637 = vmatpush1.msra.mxu0 0.0
        %5638 = vmatprep.mubr.f32.mxu0 0.0
        %5639 = vmatmul.mubr.f32.gmra.mrb[0].mxu0 %v5563
        %v5640 = vpop.f32.mrb[0].mxu0
        %v5641 = vadd.f32 0.0, %v5640
        %v5642 = vpop.f32.mrb[0].mxu0
        %5643 = vmatprep.mubr.f32.mxu0 0.0
        %5644 = vmatmul.mubr.f32.gmra.mrb[0].mxu0 %v5564
        %v5645 = vpop.f32.mrb[0].mxu0
        %v5646 = vadd.f32 0.0, %v5645
        %v5647 = vpop.f32.mrb[0].mxu0
        %5648 = vmatprep.mubr.f32.mxu0 0.0
        %5649 = vmatmul.mubr.f32.gmra.mrb[0].mxu0 %v5565
        %v5650 = vpop.f32.mrb[0].mxu0
        %v5651 = vadd.f32 0.0, %v5650
        %v5652 = vpop.f32.mrb[0].mxu0
        %5653 = vmatprep.mubr.f32.mxu0 0.0
        %5654 = vmatmul.mubr.f32.gmra.mrb[0].mxu0 %v5566
        %v5655 = vpop.f32.mrb[0].mxu0
        %v5656 = vadd.f32 0.0, %v5655
        %v5657 = vpop.f32.mrb[0].mxu0
        %5658 = vmatprep.mubr.f32.mxu0 0.0
        %5659 = vmatmul.mubr.f32.gmra.mrb[0].mxu0 %v5567
        %v5660 = vpop.f32.mrb[0].mxu0
        %v5661 = vadd.f32 0.0, %v5660
        %v5662 = vpop.f32.mrb[0].mxu0
        %5663 = vmatprep.mubr.f32.mxu0 0.0
        %5664 = vmatmul.mubr.f32.gmra.mrb[0].mxu0 %v5568
        %v5665 = vpop.f32.mrb[0].mxu0
        %v5666 = vadd.f32 0.0, %v5665
        %v5667 = vpop.f32.mrb[0].mxu0
        %5668 = vmatprep.mubr.f32.mxu0 0.0
        %5669 = vmatmul.mubr.f32.gmra.mrb[0].mxu0 %v5569
        %v5670 = vpop.f32.mrb[0].mxu0
        %v5671 = vadd.f32 0.0, %v5670
        %v5672 = vpop.f32.mrb[0].mxu0
        %5673 = vmatprep.mubr.f32.mxu0 0.0
        %5674 = vmatmul.mubr.f32.gmra.mrb[0].mxu0 %v5570
        %v5675 = vpop.f32.mrb[0].mxu0
        %v5676 = vadd.f32 0.0, %v5675
        %v5677 = vpop.f32.mrb[0].mxu0
        %5678 = vmatprep.mubr.f32.mxu0 0.0
        %5679 = vmatmul.mubr.f32.gmra.mrb[0].mxu0 %v5571
        %v5680 = vpop.f32.mrb[0].mxu0
        %v5681 = vadd.f32 0.0, %v5680
        %v5682 = vpop.f32.mrb[0].mxu0
        %5683 = vmatprep.mubr.f32.mxu0 0.0
        %5684 = vmatmul.mubr.f32.gmra.mrb[0].mxu0 %v5572
        %v5685 = vpop.f32.mrb[0].mxu0
        %v5686 = vadd.f32 0.0, %v5685
        %v5687 = vpop.f32.mrb[0].mxu0
        %5688 = vmatprep.mubr.f32.mxu0 0.0
        %5689 = vmatmul.mubr.f32.gmra.mrb[0].mxu0 %v5573
        %v5690 = vpop.f32.mrb[0].mxu0
        %v5691 = vadd.f32 0.0, %v5690
        %v5692 = vpop.f32.mrb[0].mxu0
        %5693 = vdwg.mxu0
        %vm5694 = vcmp.lt.f32.partialorder %v5641, 0.5
        %vm5695 = vcmp.lt.f32.partialorder %v5646, 0.5
        %vm5696 = vcmp.lt.f32.partialorder %v5651, 0.5
        %vm5697 = vcmp.lt.f32.partialorder %v5656, 0.5
        %vm5698 = vcmp.lt.f32.partialorder %v5661, 0.5
        %vm5699 = vcmp.lt.f32.partialorder %v5666, 0.5
        %vm5700 = vcmp.lt.f32.partialorder %v5671, 0.5
        %vm5701 = vcmp.lt.f32.partialorder %v5676, 0.5
        %vm5702 = vcmp.lt.f32.partialorder %v5681, 0.5
        %vm5703 = vcmp.lt.f32.partialorder %v5686, 0.5
        %vm5704 = vcmp.lt.f32.partialorder %v5691, 0.5
        %v5705 = vsel %vm5694, 1, 0
        %v5706 = vsel %vm5695, 1, 0
        %v5707 = vsel %vm5696, 1, 0
        %v5708 = vsel %vm5697, 1, 0
        %v5709 = vsel %vm5698, 1, 0
        %v5710 = vsel %vm5699, 1, 0
        %v5711 = vsel %vm5700, 1, 0
        %v5712 = vsel %vm5701, 1, 0
        %v5713 = vsel %vm5702, 1, 0
        %v5714 = vsel %vm5703, 1, 0
        %v5715 = vsel %vm5704, 1, 0
        %v5716 = vcvt.s32.f32 %v5705
        %v5717 = vcvt.s32.f32 %v5706
        %v5718 = vcvt.s32.f32 %v5707
        %v5719 = vcvt.s32.f32 %v5708
        %v5720 = vcvt.s32.f32 %v5709
        %v5721 = vcvt.s32.f32 %v5710
        %v5722 = vcvt.s32.f32 %v5711
        %v5723 = vcvt.s32.f32 %v5712
        %v5724 = vcvt.s32.f32 %v5713
        %v5725 = vcvt.s32.f32 %v5714
        %v5726 = vcvt.s32.f32 %v5715
        %v5728 = vsel %vm331, %v5716, 0
        %v5731 = vsel %vm331, %v5717, 0
        %v5734 = vsel %vm331, %v5718, 0
        %v5737 = vsel %vm331, %v5719, 0
        %v5740 = vsel %vm331, %v5720, 0
        %v5743 = vsel %vm331, %v5721, 0
        %v5746 = vsel %vm331, %v5722, 0
        %v5749 = vsel %vm331, %v5723, 0
        %v5752 = vsel %vm331, %v5724, 0
        %v5755 = vsel %vm331, %v5725, 0
        %v5758 = vsel %vm331, %v5726, 0
        %5760 = vmatprep.subr.mxu0 0.0
        %5761 = vmatpush1.msra.mxu0 %v327
        %5762 = vmatprep.subr.mxu0 0.0
        %5763 = vmatpush1.msra.mxu0 0.0
        %5764 = vmatprep.subr.mxu0 0.0
        %5765 = vmatpush1.msra.mxu0 0.0
        %5766 = vmatprep.subr.mxu0 0.0
        %5767 = vmatpush1.msra.mxu0 0.0
        %5768 = vmatprep.subr.mxu0 0.0
        %5769 = vmatpush1.msra.mxu0 0.0
        %5770 = vmatprep.subr.mxu0 0.0
        %5771 = vmatpush1.msra.mxu0 0.0
        %5772 = vmatprep.subr.mxu0 0.0
        %5773 = vmatpush1.msra.mxu0 0.0
        %5774 = vmatprep.subr.mxu0 0.0
        %5775 = vmatpush1.msra.mxu0 0.0
        %5776 = vmatprep.subr.mxu0 0.0
        %5777 = vmatpush1.msra.mxu0 0.0
        %5778 = vmatprep.subr.mxu0 0.0
        %5779 = vmatpush1.msra.mxu0 0.0
        %5780 = vmatprep.subr.mxu0 0.0
        %5781 = vmatpush1.msra.mxu0 0.0
        %5782 = vmatprep.subr.mxu0 0.0
        %5783 = vmatpush1.msra.mxu0 0.0
        %5784 = vmatprep.subr.mxu0 0.0
        %5785 = vmatpush1.msra.mxu0 0.0
        %5786 = vmatprep.subr.mxu0 0.0
        %5787 = vmatpush1.msra.mxu0 0.0
        %5788 = vmatprep.subr.mxu0 0.0
        %5789 = vmatpush1.msra.mxu0 0.0
        %5790 = vmatprep.subr.mxu0 0.0
        %5791 = vmatpush1.msra.mxu0 0.0
        %5792 = vmatprep.subr.mxu0 0.0
        %5793 = vmatpush1.msra.mxu0 0.0
        %5794 = vmatprep.subr.mxu0 0.0
        %5795 = vmatpush1.msra.mxu0 0.0
        %5796 = vmatprep.subr.mxu0 0.0
        %5797 = vmatpush1.msra.mxu0 0.0
        %5798 = vmatprep.subr.mxu0 0.0
        %5799 = vmatpush1.msra.mxu0 0.0
        %5800 = vmatprep.subr.mxu0 0.0
        %5801 = vmatpush1.msra.mxu0 0.0
        %5802 = vmatprep.subr.mxu0 0.0
        %5803 = vmatpush1.msra.mxu0 0.0
        %5804 = vmatprep.subr.mxu0 0.0
        %5805 = vmatpush1.msra.mxu0 0.0
        %5806 = vmatprep.subr.mxu0 0.0
        %5807 = vmatpush1.msra.mxu0 0.0
        %5808 = vmatprep.subr.mxu0 0.0
        %5809 = vmatpush1.msra.mxu0 0.0
        %5810 = vmatprep.subr.mxu0 0.0
        %5811 = vmatpush1.msra.mxu0 0.0
        %5812 = vmatprep.subr.mxu0 0.0
        %5813 = vmatpush1.msra.mxu0 0.0
        %5814 = vmatprep.subr.mxu0 0.0
        %5815 = vmatpush1.msra.mxu0 0.0
        %5816 = vmatprep.subr.mxu0 0.0
        %5817 = vmatpush1.msra.mxu0 0.0
        %5818 = vmatprep.subr.mxu0 0.0
        %5819 = vmatpush1.msra.mxu0 0.0
        %5820 = vmatprep.subr.mxu0 0.0
        %5821 = vmatpush1.msra.mxu0 0.0
        %5822 = vmatprep.subr.mxu0 0.0
        %5823 = vmatpush1.msra.mxu0 0.0
        %5824 = vmatprep.mubr.f32.mxu0 0.0
        %5825 = vmatmul.mubr.f32.gmra.mrb[0].mxu0 %v5728
        %v5826 = vpop.f32.mrb[0].mxu0
        %v5827 = vadd.f32 0.0, %v5826
        %v5828 = vpop.f32.mrb[0].mxu0
        %5829 = vmatprep.mubr.f32.mxu0 0.0
        %5830 = vmatmul.mubr.f32.gmra.mrb[0].mxu0 %v5731
        %v5831 = vpop.f32.mrb[0].mxu0
        %v5832 = vadd.f32 0.0, %v5831
        %v5833 = vpop.f32.mrb[0].mxu0
        %5834 = vmatprep.mubr.f32.mxu0 0.0
        %5835 = vmatmul.mubr.f32.gmra.mrb[0].mxu0 %v5734
        %v5836 = vpop.f32.mrb[0].mxu0
        %v5837 = vadd.f32 0.0, %v5836
        %v5838 = vpop.f32.mrb[0].mxu0
        %5839 = vmatprep.mubr.f32.mxu0 0.0
        %5840 = vmatmul.mubr.f32.gmra.mrb[0].mxu0 %v5737
        %v5841 = vpop.f32.mrb[0].mxu0
        %v5842 = vadd.f32 0.0, %v5841
        %v5843 = vpop.f32.mrb[0].mxu0
        %5844 = vmatprep.mubr.f32.mxu0 0.0
        %5845 = vmatmul.mubr.f32.gmra.mrb[0].mxu0 %v5740
        %v5846 = vpop.f32.mrb[0].mxu0
        %v5847 = vadd.f32 0.0, %v5846
        %v5848 = vpop.f32.mrb[0].mxu0
        %5849 = vmatprep.mubr.f32.mxu0 0.0
        %5850 = vmatmul.mubr.f32.gmra.mrb[0].mxu0 %v5743
        %v5851 = vpop.f32.mrb[0].mxu0
        %v5852 = vadd.f32 0.0, %v5851
        %v5853 = vpop.f32.mrb[0].mxu0
        %5854 = vmatprep.mubr.f32.mxu0 0.0
        %5855 = vmatmul.mubr.f32.gmra.mrb[0].mxu0 %v5746
        %v5856 = vpop.f32.mrb[0].mxu0
        %v5857 = vadd.f32 0.0, %v5856
        %v5858 = vpop.f32.mrb[0].mxu0
        %5859 = vmatprep.mubr.f32.mxu0 0.0
        %5860 = vmatmul.mubr.f32.gmra.mrb[0].mxu0 %v5749
        %v5861 = vpop.f32.mrb[0].mxu0
        %v5862 = vadd.f32 0.0, %v5861
        %v5863 = vpop.f32.mrb[0].mxu0
        %5864 = vmatprep.mubr.f32.mxu0 0.0
        %5865 = vmatmul.mubr.f32.gmra.mrb[0].mxu0 %v5752
        %v5866 = vpop.f32.mrb[0].mxu0
        %v5867 = vadd.f32 0.0, %v5866
        %v5868 = vpop.f32.mrb[0].mxu0
        %5869 = vmatprep.mubr.f32.mxu0 0.0
        %5870 = vmatmul.mubr.f32.gmra.mrb[0].mxu0 %v5755
        %v5871 = vpop.f32.mrb[0].mxu0
        %v5872 = vadd.f32 0.0, %v5871
        %v5873 = vpop.f32.mrb[0].mxu0
        %5874 = vmatprep.mubr.f32.mxu0 0.0
        %5875 = vmatmul.mubr.f32.gmra.mrb[0].mxu0 %v5758
        %v5876 = vpop.f32.mrb[0].mxu0
        %v5877 = vadd.f32 0.0, %v5876
        %v5878 = vpop.f32.mrb[0].mxu0
        %5879 = vdwg.mxu0
        %vm5880 = vcmp.gt.f32.partialorder %v5827, 3.5
        %vm5881 = vcmp.gt.f32.partialorder %v5832, 3.5
        %vm5882 = vcmp.gt.f32.partialorder %v5837, 3.5
        %vm5883 = vcmp.gt.f32.partialorder %v5842, 3.5
        %vm5884 = vcmp.gt.f32.partialorder %v5847, 3.5
        %vm5885 = vcmp.gt.f32.partialorder %v5852, 3.5
        %vm5886 = vcmp.gt.f32.partialorder %v5857, 3.5
        %vm5887 = vcmp.gt.f32.partialorder %v5862, 3.5
        %vm5888 = vcmp.gt.f32.partialorder %v5867, 3.5
        %vm5889 = vcmp.gt.f32.partialorder %v5872, 3.5
        %vm5890 = vcmp.gt.f32.partialorder %v5877, 3.5
        %v5891 = vsel %vm5880, 1, 0
        %v5892 = vsel %vm5881, 1, 0
        %v5893 = vsel %vm5882, 1, 0
        %v5894 = vsel %vm5883, 1, 0
        %v5895 = vsel %vm5884, 1, 0
        %v5896 = vsel %vm5885, 1, 0
        %v5897 = vsel %vm5886, 1, 0
        %v5898 = vsel %vm5887, 1, 0
        %v5899 = vsel %vm5888, 1, 0
        %v5900 = vsel %vm5889, 1, 0
        %v5901 = vsel %vm5890, 1, 0
        %v5902 = vcvt.s32.f32 %v5891
        %v5903 = vcvt.s32.f32 %v5892
        %v5904 = vcvt.s32.f32 %v5893
        %v5905 = vcvt.s32.f32 %v5894
        %v5906 = vcvt.s32.f32 %v5895
        %v5907 = vcvt.s32.f32 %v5896
        %v5908 = vcvt.s32.f32 %v5897
        %v5909 = vcvt.s32.f32 %v5898
        %v5910 = vcvt.s32.f32 %v5899
        %v5911 = vcvt.s32.f32 %v5900
        %v5912 = vcvt.s32.f32 %v5901
        %vm5913 = vcmask 15360
        %5914 = vst.msk [vmem:[%s254] sm:$0xff] %vm5913, %v4599
        %5915 = vst.msk [vmem:[%s254 + $0x8] sm:$0xff] %vm5913, %v4600
        %5916 = vst.msk [vmem:[%s254 + $0x10] sm:$0xff] %vm5913, %v4601
        %5917 = vst.msk [vmem:[%s254 + $0x18] sm:$0xff] %vm5913, %v4602
        %5918 = vst.msk [vmem:[%s254 + $0x20] sm:$0xff] %vm5913, %v4603
        %5919 = vst.msk [vmem:[%s254 + $0x28] sm:$0xff] %vm5913, %v4604
        %5920 = vst.msk [vmem:[%s254 + $0x30] sm:$0xff] %vm5913, %v4605
        %5921 = vst.msk [vmem:[%s254 + $0x38] sm:$0xff] %vm5913, %v4606
        %5922 = vst.msk [vmem:[%s254 + $0x40] sm:$0xff] %vm5913, %v4607
        %5923 = vst.msk [vmem:[%s254 + $0x48] sm:$0xff] %vm5913, %v4608
        %5924 = vst.msk [vmem:[%s254 + $0x50] sm:$0xff] %vm5913, %v4609
        %5936 = vrot.lane.b32.xlu0 %v5902, 2
        %v5937 = vpop.permute.xlu0 %5936
        %5938 = vrot.lane.b32.xlu0 %v5903, 2
        %v5939 = vpop.permute.xlu0 %5938
        %5940 = vrot.lane.b32.xlu0 %v5904, 2
        %v5941 = vpop.permute.xlu0 %5940
        %5942 = vrot.lane.b32.xlu0 %v5905, 2
        %v5943 = vpop.permute.xlu0 %5942
        %5944 = vrot.lane.b32.xlu0 %v5906, 2
        %v5945 = vpop.permute.xlu0 %5944
        %5946 = vrot.lane.b32.xlu0 %v5907, 2
        %v5947 = vpop.permute.xlu0 %5946
        %5948 = vrot.lane.b32.xlu0 %v5908, 2
        %v5949 = vpop.permute.xlu0 %5948
        %5950 = vrot.lane.b32.xlu0 %v5909, 2
        %v5951 = vpop.permute.xlu0 %5950
        %5952 = vrot.lane.b32.xlu0 %v5910, 2
        %v5953 = vpop.permute.xlu0 %5952
        %5954 = vrot.lane.b32.xlu0 %v5911, 2
        %v5955 = vpop.permute.xlu0 %5954
        %5956 = vrot.lane.b32.xlu0 %v5912, 2
        %v5957 = vpop.permute.xlu0 %5956
        %vm5969 = vcmask 31760
        %5970 = vst.msk [vmem:[%s254] sm:$0xff] %vm5969, %v5937
        %5971 = vst.msk [vmem:[%s254 + $0x8] sm:$0xff] %vm5969, %v5939
        %5972 = vst.msk [vmem:[%s254 + $0x10] sm:$0xff] %vm5969, %v5941
        %5973 = vst.msk [vmem:[%s254 + $0x18] sm:$0xff] %vm5969, %v5943
        %5974 = vst.msk [vmem:[%s254 + $0x20] sm:$0xff] %vm5969, %v5945
        %5975 = vst.msk [vmem:[%s254 + $0x28] sm:$0xff] %vm5969, %v5947
        %5976 = vst.msk [vmem:[%s254 + $0x30] sm:$0xff] %vm5969, %v5949
        %5977 = vst.msk [vmem:[%s254 + $0x38] sm:$0xff] %vm5969, %v5951
        %5978 = vst.msk [vmem:[%s254 + $0x40] sm:$0xff] %vm5969, %v5953
        %5979 = vst.msk [vmem:[%s254 + $0x48] sm:$0xff] %vm5969, %v5955
        %5980 = vst.msk [vmem:[%s254 + $0x50] sm:$0xff] %vm5969, %v5957
        %5992 = vrot.lane.b32.xlu0 %v5827, 4
        %v5993 = vpop.permute.xlu0 %5992
        %5994 = vrot.lane.b32.xlu0 %v5832, 4
        %v5995 = vpop.permute.xlu0 %5994
        %5996 = vrot.lane.b32.xlu0 %v5837, 4
        %v5997 = vpop.permute.xlu0 %5996
        %5998 = vrot.lane.b32.xlu0 %v5842, 4
        %v5999 = vpop.permute.xlu0 %5998
        %6000 = vrot.lane.b32.xlu0 %v5847, 4
        %v6001 = vpop.permute.xlu0 %6000
        %6002 = vrot.lane.b32.xlu0 %v5852, 4
        %v6003 = vpop.permute.xlu0 %6002
        %6004 = vrot.lane.b32.xlu0 %v5857, 4
        %v6005 = vpop.permute.xlu0 %6004
        %6006 = vrot.lane.b32.xlu0 %v5862, 4
        %v6007 = vpop.permute.xlu0 %6006
        %6008 = vrot.lane.b32.xlu0 %v5867, 4
        %v6009 = vpop.permute.xlu0 %6008
        %6010 = vrot.lane.b32.xlu0 %v5872, 4
        %v6011 = vpop.permute.xlu0 %6010
        %6012 = vrot.lane.b32.xlu0 %v5877, 4
        %v6013 = vpop.permute.xlu0 %6012
        %vm6025 = vcmask 48160
        %6026 = vst.msk [vmem:[%s254] sm:$0xff] %vm6025, %v5993
        %6027 = vst.msk [vmem:[%s254 + $0x8] sm:$0xff] %vm6025, %v5995
        %6028 = vst.msk [vmem:[%s254 + $0x10] sm:$0xff] %vm6025, %v5997
        %6029 = vst.msk [vmem:[%s254 + $0x18] sm:$0xff] %vm6025, %v5999
        %6030 = vst.msk [vmem:[%s254 + $0x20] sm:$0xff] %vm6025, %v6001
        %6031 = vst.msk [vmem:[%s254 + $0x28] sm:$0xff] %vm6025, %v6003
        %6032 = vst.msk [vmem:[%s254 + $0x30] sm:$0xff] %vm6025, %v6005
        %6033 = vst.msk [vmem:[%s254 + $0x38] sm:$0xff] %vm6025, %v6007
        %6034 = vst.msk [vmem:[%s254 + $0x40] sm:$0xff] %vm6025, %v6009
        %6035 = vst.msk [vmem:[%s254 + $0x48] sm:$0xff] %vm6025, %v6011
        %6036 = vst.msk [vmem:[%s254 + $0x50] sm:$0xff] %vm6025, %v6013
        %s6037 = sand.u32 %s139, 1
        %s6038 = sand.u32 %s139, 1
        %s6039 = smul.addr %s6038, 88
        %s6040 = scalar_lea.vmem [#allocation2], %s6039
        // Predicated region
        $region41: #{tpu_custom_call.1} parent=39 // pred_check
          %p6041 = pneg %p149
        $region42: #{tpu_custom_call.1} parent=39 // pred_check_branch
          %6043 = sbr.rel (%p6041) target = $region44
        $region43: #{tpu_custom_call.1} parent=39 // pred_region
          %s6044 = smul.u32 11, %s16
          %s6045 = ssub.s32 21, %s6044
          %p6046 = scmp.lt.s32.totalorder %s6045, 11
          %s6047 = scalar_select %p6046, %s6045, 11
          %s6048 = smul.u32 128, %s6047
          %p6049 = scmp.ne.s32.totalorder 0, %s6048
          %s6050 = smul.addr %s6044, 8
          %s6051 = scalar_lea.vmem %s5, %s6050
          // Predicated region
          $region45: #{tpu_custom_call.1} parent=43 // pred_check
            %p6052 = pneg %p6049
          $region46: #{tpu_custom_call.1} parent=43 // pred_check_branch
            %6054 = sbr.rel (%p6052) target = $region48
          $region47: #{tpu_custom_call.1} parent=43 // pred_region
            // Predicated region
            $region49: #{tpu_custom_call.1} parent=47 // pred_check
              _
            $region50: #{tpu_custom_call.1} parent=47 // pred_check_branch
              %6056 = sbr.rel (0) target = $region52
            $region51: #{tpu_custom_call.1} parent=47 // pred_region
              // Predicated region
              $region71: #{tpu_custom_call.1} parent=51 // pred_check
                _
              $region72: #{tpu_custom_call.1} parent=51 // pred_check_branch
                %6126 = sbr.rel (0) target = $region74
              $region73: #{tpu_custom_call.1} parent=51 // pred_region
                %s6127 = sdiv.u32.pop %s6047, 11
                %s6128 = srem.u32.pop %s6047, 11
                // While loop
                $region75: #{tpu_custom_call.1} parent=73 // loop_pre_header
                  _
                $region76: #{tpu_custom_call.1} parent=73 // loop_header
                  %s6130 = sphi 0, %s6132
                  %p6131 = scmp.ge.s32.totalorder %s6130, %s6127
                  %s6135 = sphi 0, %s6162
                  %s6136 = sphi %s6040, %s6165
                  %s6137 = sphi %s6051, %s6166
                $region77: #{tpu_custom_call.1} parent=73 // loop_header_branch
                  %6134 = sbr.rel (%p6131) target = $region81
                $region78: #{tpu_custom_call.1} parent=73 // loop_body
                  %v6138 = vld [vmem:[%s6136] sm:$0xff]
                  %6139 = vst [vmem:[%s6137] sm:$0xff] %v6138
                  %v6140 = vld [vmem:[%s6136 + $0x8] sm:$0xff]
                  %6141 = vst [vmem:[%s6137 + $0x8] sm:$0xff] %v6140
                  %v6142 = vld [vmem:[%s6136 + $0x10] sm:$0xff]
                  %6143 = vst [vmem:[%s6137 + $0x10] sm:$0xff] %v6142
                  %v6144 = vld [vmem:[%s6136 + $0x18] sm:$0xff]
                  %6145 = vst [vmem:[%s6137 + $0x18] sm:$0xff] %v6144
                  %v6146 = vld [vmem:[%s6136 + $0x20] sm:$0xff]
                  %6147 = vst [vmem:[%s6137 + $0x20] sm:$0xff] %v6146
                  %v6148 = vld [vmem:[%s6136 + $0x28] sm:$0xff]
                  %6149 = vst [vmem:[%s6137 + $0x28] sm:$0xff] %v6148
                  %v6150 = vld [vmem:[%s6136 + $0x30] sm:$0xff]
                  %6151 = vst [vmem:[%s6137 + $0x30] sm:$0xff] %v6150
                  %v6152 = vld [vmem:[%s6136 + $0x38] sm:$0xff]
                  %6153 = vst [vmem:[%s6137 + $0x38] sm:$0xff] %v6152
                  %v6154 = vld [vmem:[%s6136 + $0x40] sm:$0xff]
                  %6155 = vst [vmem:[%s6137 + $0x40] sm:$0xff] %v6154
                  %v6156 = vld [vmem:[%s6136 + $0x48] sm:$0xff]
                  %6157 = vst [vmem:[%s6137 + $0x48] sm:$0xff] %v6156
                  %v6158 = vld [vmem:[%s6136 + $0x50] sm:$0xff]
                  %6159 = vst [vmem:[%s6137 + $0x50] sm:$0xff] %v6158
                  %s6160 = sadd.s32 1, %s6135
                  %p6161 = scmp.ge.s32.totalorder %s6160, %s6127
                  %s6162 = scalar_select %p6161, 0, %s6160
                  %s6163 = smul.u32 %s6162, 88
                  %s6164 = smul.u32 %s6162, 88
                  %s6165 = scalar_lea.vmem %s6040, %s6163 [#allocation2]
                  %s6166 = scalar_lea.vmem %s6051, %s6164
                $region79: #{tpu_custom_call.1} parent=73 // loop_footer
                  %s6132 = sadd.s32 %s6130, 1
                $region80: #{tpu_custom_call.1} parent=73 // loop_footer_branch
                  %6129 = sbr.rel target = $region76
                $region81: #{tpu_custom_call.1} parent=73 // loop_exit
                  _
                %s6167 = sdiv.u32.pop %s6047, 11
                %s6168 = srem.u32.pop %s6047, 11
                %s6169 = smul.u32 %s6167, 11
                %s6170 = smul.u32 8, %s6169
                %s6171 = scalar_lea.vmem %s6040, %s6170 [#allocation2]
                %s6172 = smul.u32 8, %s6169
                %s6173 = scalar_lea.vmem %s6051, %s6172
                // While loop
                $region82: #{tpu_custom_call.1} parent=73 // loop_pre_header
                  _
                $region83: #{tpu_custom_call.1} parent=73 // loop_header
                  %s6175 = sphi 0, %s6177
                  %p6176 = scmp.ge.s32.totalorder %s6175, %s6168
                  %s6180 = sphi 0, %s6187
                  %s6181 = sphi %s6171, %s6190
                  %s6182 = sphi %s6173, %s6191
                $region84: #{tpu_custom_call.1} parent=73 // loop_header_branch
                  %6179 = sbr.rel (%p6176) target = $region88
                $region85: #{tpu_custom_call.1} parent=73 // loop_body
                  %v6183 = vld [vmem:[%s6181] sm:$0xff]
                  %6184 = vst [vmem:[%s6182] sm:$0xff] %v6183
                  %s6185 = sadd.s32 1, %s6180
                  %p6186 = scmp.ge.s32.totalorder %s6185, %s6168
                  %s6187 = scalar_select %p6186, 0, %s6185
                  %s6188 = smul.u32 %s6187, 8
                  %s6189 = smul.u32 %s6187, 8
                  %s6190 = scalar_lea.vmem %s6171, %s6188 [#allocation2]
                  %s6191 = scalar_lea.vmem %s6173, %s6189
                $region86: #{tpu_custom_call.1} parent=73 // loop_footer
                  %s6177 = sadd.s32 %s6175, 1
                $region87: #{tpu_custom_call.1} parent=73 // loop_footer_branch
                  %6174 = sbr.rel target = $region83
                $region88: #{tpu_custom_call.1} parent=73 // loop_exit
                  _
              $region74: #{tpu_custom_call.1} parent=51 // pred_fallthru
                _
              // Predicated region
              $region89: #{tpu_custom_call.1} parent=51 // pred_check
                _
              $region90: #{tpu_custom_call.1} parent=51 // pred_check_branch
                %6193 = sbr.rel target = $region92
              $region91: #{tpu_custom_call.1} parent=51 // pred_region
                _
              $region92: #{tpu_custom_call.1} parent=51 // pred_fallthru
                _
            $region52: #{tpu_custom_call.1} parent=47 // pred_fallthru
              _
            // Predicated region
            $region53: #{tpu_custom_call.1} parent=47 // pred_check
              _
            $region54: #{tpu_custom_call.1} parent=47 // pred_check_branch
              %6058 = sbr.rel target = $region56
            $region55: #{tpu_custom_call.1} parent=47 // pred_region
              %s6060 = sdiv.u32.pop %s6047, 11
              %s6061 = srem.u32.pop %s6047, 11
              // While loop
              $region57: #{tpu_custom_call.1} parent=55 // loop_pre_header
                _
              $region58: #{tpu_custom_call.1} parent=55 // loop_header
                %s6063 = sphi 0, %s6065
                %p6064 = scmp.ge.s32.totalorder %s6063, %s6060
                %s6068 = sphi 0, %s6095
                %s6069 = sphi %s6040, %s6098
                %s6070 = sphi %s6051, %s6099
              $region59: #{tpu_custom_call.1} parent=55 // loop_header_branch
                %6067 = sbr.rel (%p6064) target = $region63
              $region60: #{tpu_custom_call.1} parent=55 // loop_body
                %v6071 = vld [vmem:[%s6069] sm:$0xff]
                %6072 = vst [vmem:[%s6070] sm:$0xff] %v6071
                %v6073 = vld [vmem:[%s6069 + $0x8] sm:$0xff]
                %6074 = vst [vmem:[%s6070 + $0x8] sm:$0xff] %v6073
                %v6075 = vld [vmem:[%s6069 + $0x10] sm:$0xff]
                %6076 = vst [vmem:[%s6070 + $0x10] sm:$0xff] %v6075
                %v6077 = vld [vmem:[%s6069 + $0x18] sm:$0xff]
                %6078 = vst [vmem:[%s6070 + $0x18] sm:$0xff] %v6077
                %v6079 = vld [vmem:[%s6069 + $0x20] sm:$0xff]
                %6080 = vst [vmem:[%s6070 + $0x20] sm:$0xff] %v6079
                %v6081 = vld [vmem:[%s6069 + $0x28] sm:$0xff]
                %6082 = vst [vmem:[%s6070 + $0x28] sm:$0xff] %v6081
                %v6083 = vld [vmem:[%s6069 + $0x30] sm:$0xff]
                %6084 = vst [vmem:[%s6070 + $0x30] sm:$0xff] %v6083
                %v6085 = vld [vmem:[%s6069 + $0x38] sm:$0xff]
                %6086 = vst [vmem:[%s6070 + $0x38] sm:$0xff] %v6085
                %v6087 = vld [vmem:[%s6069 + $0x40] sm:$0xff]
                %6088 = vst [vmem:[%s6070 + $0x40] sm:$0xff] %v6087
                %v6089 = vld [vmem:[%s6069 + $0x48] sm:$0xff]
                %6090 = vst [vmem:[%s6070 + $0x48] sm:$0xff] %v6089
                %v6091 = vld [vmem:[%s6069 + $0x50] sm:$0xff]
                %6092 = vst [vmem:[%s6070 + $0x50] sm:$0xff] %v6091
                %s6093 = sadd.s32 1, %s6068
                %p6094 = scmp.ge.s32.totalorder %s6093, %s6060
                %s6095 = scalar_select %p6094, 0, %s6093
                %s6096 = smul.u32 %s6095, 88
                %s6097 = smul.u32 %s6095, 88
                %s6098 = scalar_lea.vmem %s6040, %s6096 [#allocation2]
                %s6099 = scalar_lea.vmem %s6051, %s6097
              $region61: #{tpu_custom_call.1} parent=55 // loop_footer
                %s6065 = sadd.s32 %s6063, 1
              $region62: #{tpu_custom_call.1} parent=55 // loop_footer_branch
                %6062 = sbr.rel target = $region58
              $region63: #{tpu_custom_call.1} parent=55 // loop_exit
                _
              %s6100 = sdiv.u32.pop %s6047, 11
              %s6101 = srem.u32.pop %s6047, 11
              %s6102 = smul.u32 %s6100, 11
              %s6103 = smul.u32 8, %s6102
              %s6104 = scalar_lea.vmem %s6040, %s6103 [#allocation2]
              %s6105 = smul.u32 8, %s6102
              %s6106 = scalar_lea.vmem %s6051, %s6105
              // While loop
              $region64: #{tpu_custom_call.1} parent=55 // loop_pre_header
                _
              $region65: #{tpu_custom_call.1} parent=55 // loop_header
                %s6108 = sphi 0, %s6110
                %p6109 = scmp.ge.s32.totalorder %s6108, %s6101
                %s6113 = sphi 0, %s6120
                %s6114 = sphi %s6104, %s6123
                %s6115 = sphi %s6106, %s6124
              $region66: #{tpu_custom_call.1} parent=55 // loop_header_branch
                %6112 = sbr.rel (%p6109) target = $region70
              $region67: #{tpu_custom_call.1} parent=55 // loop_body
                %v6116 = vld [vmem:[%s6114] sm:$0xff]
                %6117 = vst [vmem:[%s6115] sm:$0xff] %v6116
                %s6118 = sadd.s32 1, %s6113
                %p6119 = scmp.ge.s32.totalorder %s6118, %s6101
                %s6120 = scalar_select %p6119, 0, %s6118
                %s6121 = smul.u32 %s6120, 8
                %s6122 = smul.u32 %s6120, 8
                %s6123 = scalar_lea.vmem %s6104, %s6121 [#allocation2]
                %s6124 = scalar_lea.vmem %s6106, %s6122
              $region68: #{tpu_custom_call.1} parent=55 // loop_footer
                %s6110 = sadd.s32 %s6108, 1
              $region69: #{tpu_custom_call.1} parent=55 // loop_footer_branch
                %6107 = sbr.rel target = $region65
              $region70: #{tpu_custom_call.1} parent=55 // loop_exit
                _
            $region56: #{tpu_custom_call.1} parent=47 // pred_fallthru
              _
          $region48: #{tpu_custom_call.1} parent=43 // pred_fallthru
            _
          %6194 = vnop
        $region44: #{tpu_custom_call.1} parent=39 // pred_fallthru
          _
      $region40: #{tpu_custom_call.1} parent=5 // pred_fallthru
        _
      %p6195 = scmp.le.s32.totalorder 2, %s11
      // Predicated region
      $region93: #{tpu_custom_call.1} parent=5 // pred_check
        %p6196 = pneg %p6195
      $region94: #{tpu_custom_call.1} parent=5 // pred_check_branch
        %6198 = sbr.rel (%p6196) target = $region96
      $region95: #{tpu_custom_call.1} parent=5 // pred_region
        %s6199 = ssub.s32 %s11, 2
        // Predicated region
        $region97: #{tpu_custom_call.1} parent=95 // pred_check
          %p6200 = pneg %p155
        $region98: #{tpu_custom_call.1} parent=95 // pred_check_branch
          %6202 = sbr.rel (%p6200) target = $region100
        $region99: #{tpu_custom_call.1} parent=95 // pred_region
          %s6203 = sand.u32 %s140, 1
          %s6204 = sand.u32 %s140, 1
          %s6205 = smul.addr %s6204, 88
          %s6206 = scalar_lea.vmem [#allocation2], %s6205
        $region100: #{tpu_custom_call.1} parent=95 // pred_fallthru
          _
      $region96: #{tpu_custom_call.1} parent=5 // pred_fallthru
        _
    $region6: #{tpu_custom_call.1} parent=1 // loop_footer
      %s15 = sadd.s32 1, %s11
    $region7: #{tpu_custom_call.1} parent=1 // loop_footer_branch
      %10 = sbr.rel target = $region3
    $region8: #{tpu_custom_call.1} parent=1 // loop_exit
      _

</llo_original>
